<compile_context>
chip_gen: v5e
topology: v5e:2x2
jax: 0.10.0
libtpu: 0.0.40
codegen_flags: <defaults>
</compile_context>

<pallas_src>
import functools

import jax
import jax.numpy as jnp
from jax import lax
from jax.experimental import pallas as pl
from jax.experimental.pallas import tpu as pltpu


def _round_up(x, m):
    return ((x + m - 1) // m) * m


def bigru_kernel(emb_ref, wih_ref, bi_ref,
                 whh_f_ref, whh_b_ref, bhn_f_ref, bhn_b_ref,
                 w1f_ref, w1b_ref, b1_ref, w2_ref, b2_ref, w3_ref, b3_ref,
                 out_ref, gi_scr, *, mm_dtype, unroll_t_max=32):
    T, Btile, E = emb_ref.shape
    Hp = whh_f_ref.shape[0]              # 128-lane padded gate width
    TB = T * Btile

    # (1) Hoisted input projection: ONE MXU matmul for all timesteps and both
    #     directions; b_ih (+ b_hh for the r/z gates) pre-folded into bi.
    #     (Leading-dim merge [T,Btile,E]->[TB,E] is a free relayout: Btile is a
    #     sublane multiple and the lane dim E is unchanged.)
    emb2 = emb_ref[...].reshape(TB, E).astype(mm_dtype)
    gi = jnp.dot(emb2, wih_ref[...].astype(mm_dtype),
                 preferred_element_type=jnp.float32) + bi_ref[...]
    gi_scr[...] = gi.astype(gi_scr.dtype)

    # Loop-invariant hidden weights / n-gate biases: load once, keep resident.
    whh_f = whh_f_ref[...].astype(mm_dtype)
    whh_b = whh_b_ref[...].astype(mm_dtype)
    bhn_f = bhn_f_ref[...]
    bhn_b = bhn_b_ref[...]

    def step(t, h_f, h_b, s_f, s_b):
        if isinstance(t, int):                       # static (unrolled) index
            rf = t * Btile
            rb = (T - 1 - t) * Btile
        else:                                        # traced (fori_loop) index
            rf = pl.multiple_of(t * Btile, Btile)
            rb = pl.multiple_of((T - 1 - t) * Btile, Btile)
        gi_f = gi_scr[pl.ds(rf, Btile), :3 * Hp].astype(jnp.float32)
        gi_b = gi_scr[pl.ds(rb, Btile), 3 * Hp:].astype(jnp.float32)

        # Two INDEPENDENT hidden matmuls (fwd / bwd): the MXU work of one chain
        # overlaps the EUP/VPU gate math of the other.
        gh_f = jnp.dot(h_f.astype(mm_dtype), whh_f,
                       preferred_element_type=jnp.float32) + bhn_f
        gh_b = jnp.dot(h_b.astype(mm_dtype), whh_b,
                       preferred_element_type=jnp.float32) + bhn_b

        # All slices below are 128-lane aligned (gate slabs padded to Hp=128).
        r_f = jax.nn.sigmoid(gi_f[:, 0:Hp] + gh_f[:, 0:Hp])
        r_b = jax.nn.sigmoid(gi_b[:, 0:Hp] + gh_b[:, 0:Hp])
        z_f = jax.nn.sigmoid(gi_f[:, Hp:2 * Hp] + gh_f[:, Hp:2 * Hp])
        z_b = jax.nn.sigmoid(gi_b[:, Hp:2 * Hp] + gh_b[:, Hp:2 * Hp])
        n_f = jnp.tanh(gi_f[:, 2 * Hp:3 * Hp] + r_f * gh_f[:, 2 * Hp:3 * Hp])
        n_b = jnp.tanh(gi_b[:, 2 * Hp:3 * Hp] + r_b * gh_b[:, 2 * Hp:3 * Hp])

        h_f = n_f + z_f * (h_f - n_f)        # == (1-z)*n + z*h, one fewer VPU op
        h_b = n_b + z_b * (h_b - n_b)
        # Sum over time (order-free; matches transpose(0,1).sum(dim=1)).
        return h_f, h_b, s_f + h_f, s_b + h_b

    zeros = jnp.zeros((Btile, Hp), jnp.float32)
    carry = (zeros, zeros, zeros, zeros)     # h_f, h_b, s_f, s_b
    if T <= unroll_t_max:
        # Small static T: full unroll -> LLO scheduler interleaves the two
        # chains and adjacent steps' independent work.
        for t in range(T):
            carry = step(t, *carry)
    else:
        # Production T: lightly-unrolled fori_loop bounds code size / vreg
        # live ranges while keeping scheduling visibility.
        carry = lax.fori_loop(0, T, lambda t, c: step(t, *c), carry, unroll=2)
    _, _, s_f, s_b = carry

    # (3) MLP head.  w1 pre-split per direction -> no lane concat of [s_f|s_b].
    h1 = jnp.maximum(
        jnp.dot(s_f.astype(mm_dtype), w1f_ref[...].astype(mm_dtype),
                preferred_element_type=jnp.float32)
        + jnp.dot(s_b.astype(mm_dtype), w1b_ref[...].astype(mm_dtype),
                  preferred_element_type=jnp.float32)
        + b1_ref[...], 0.0)
    h2 = jnp.maximum(
        jnp.dot(h1.astype(mm_dtype), w2_ref[...].astype(mm_dtype),
                preferred_element_type=jnp.float32) + b2_ref[...], 0.0)
    # Lane-dense [Btile, 128] store (sliced to [B, class_num] in the wrapper).
    out_ref[...] = (
        jnp.dot(h2.astype(mm_dtype), w3_ref[...].astype(mm_dtype),
                preferred_element_type=jnp.float32)
        + b3_ref[...]).astype(out_ref.dtype)


@functools.partial(jax.jit,
                   static_argnames=("class_num", "hidden_size", "mm_dtype"))
def bigru_forward(embed, kparams, *, class_num, hidden_size,
                  mm_dtype=jnp.float32):
    """embed: [T, B, E] f32.  Returns logits [B, class_num]."""
    T, B, E = embed.shape
    Hp = kparams["w1f"].shape[0]
    Cp = kparams["w3"].shape[1]
    assert hidden_size <= Hp and class_num <= Cp

    # Batch tiling: pad to a sublane multiple (16 for bf16 operands: a bf16
    # vreg is [16,128]), tile at up to 256 rows per kernel instance (full MXU
    # height on v6e/v7x), extra tiles go to the parallel grid axis.
    bmin = 16 if mm_dtype == jnp.bfloat16 else 8
    Bp = _round_up(B, bmin)
    if Bp > 256:
        Bp = _round_up(Bp, 256)
        btile = 256
    else:
        btile = Bp
    nb = Bp // btile

    emb_p = jnp.zeros((T, Bp, E), jnp.float32).at[:, :B, :].set(embed)

    kernel = functools.partial(bigru_kernel, mm_dtype=mm_dtype)

    weight_names = ("wih", "bi", "whh_f", "whh_b", "bhn_f", "bhn_b",
                    "w1f", "w1b", "b1", "w2", "b2", "w3", "b3")

    def wspec(name):
        # Weights stay resident across all batch tiles (block index always 0).
        return pl.BlockSpec(kparams[name].shape, lambda b: (0, 0))

    # NOTE: at toy sizes everything fits the default scoped VMEM; for large T
    # raise vmem_limit_bytes and/or chunk the hoisted gi projection over time.
    out_p = pl.pallas_call(
        kernel,
        out_shape=jax.ShapeDtypeStruct((Bp, Cp), jnp.float32),
        grid=(nb,),
        in_specs=[pl.BlockSpec((T, btile, E), lambda b: (0, b, 0))]
                 + [wspec(n) for n in weight_names],
        out_specs=pl.BlockSpec((btile, Cp), lambda b: (b, 0)),
        scratch_shapes=[
            # Hoisted gi for ONE batch tile only (bounded for v7x's 64 MiB VMEM;
            # stored in bf16 whenever mm_dtype is bf16).
            pltpu.VMEM((T * btile, 6 * Hp), mm_dtype),
        ],
        compiler_params=pltpu.CompilerParams(
            dimension_semantics=("parallel",)),
    )(emb_p, *(kparams[n] for n in weight_names))
    return out_p[:B, :class_num]


def make_params(key, vocab_size, embed_size, hidden_size, class_num):
    """PyTorch-equivalent parameters (W_ih:[E,3H], W_hh:[H,3H], gates r|z|n)."""
    H = hidden_size
    ks = jax.random.split(key, 16)

    def unif(k, shape, fan_in):
        bound = 1.0 / jnp.sqrt(float(fan_in))
        return jax.random.uniform(k, shape, jnp.float32, -bound, bound)

    return {
        "embedding": jax.random.normal(ks[0], (vocab_size, embed_size), jnp.float32),
        "wih_f": unif(ks[1], (embed_size, 3 * H), H),
        "whh_f": unif(ks[2], (H, 3 * H), H),
        "bih_f": unif(ks[3], (1, 3 * H), H),
        "bhh_f": unif(ks[4], (1, 3 * H), H),
        "wih_b": unif(ks[5], (embed_size, 3 * H), H),
        "whh_b": unif(ks[6], (H, 3 * H), H),
        "bih_b": unif(ks[7], (1, 3 * H), H),
        "bhh_b": unif(ks[8], (1, 3 * H), H),
        "w1": unif(ks[9], (2 * H, 192), 2 * H),
        "b1": unif(ks[10], (1, 192), 2 * H),
        "w2": unif(ks[11], (192, 84), 192),
        "b2": unif(ks[12], (1, 84), 192),
        "w3": unif(ks[13], (84, class_num), 84),
        "b3": unif(ks[14], (1, class_num), 84),
    }


def prepare_kernel_params(params, *, hidden_size, class_num, Hp=128):
    """One-time re-layout into the padded, per-direction-split kernel format."""
    H = hidden_size
    E = params["wih_f"].shape[0]
    D1 = params["w1"].shape[1]                    # 192
    D2 = params["w2"].shape[1]                    # 84
    D2p = _round_up(D2, 128)                      # 128
    Cp = _round_up(class_num, 128)                # 128

    wih = jnp.zeros((E, 6 * Hp), jnp.float32)     # slabs [r_f|z_f|n_f|r_b|z_b|n_b]
    bi = jnp.zeros((1, 6 * Hp), jnp.float32)
    out = {}
    for d, tag in enumerate(("f", "b")):
        wih_d, whh_d = params[f"wih_{tag}"], params[f"whh_{tag}"]
        bih_d, bhh_d = params[f"bih_{tag}"], params[f"bhh_{tag}"]
        whh_p = jnp.zeros((Hp, 3 * Hp), jnp.float32)
        bhn_p = jnp.zeros((1, 3 * Hp), jnp.float32)
        for g in range(3):                        # r, z, n (PyTorch gate order)
            src = slice(g * H, (g + 1) * H)
            ci = (3 * d + g) * Hp                 # slab column in fused wih/bi
            ch = g * Hp                           # slab column in per-dir whh/bhn
            wih = wih.at[:, ci:ci + H].set(wih_d[:, src])
            whh_p = whh_p.at[:H, ch:ch + H].set(whh_d[:, src])
            if g < 2:
                # r, z: both biases fold into the hoisted input side.
                bi = bi.at[:, ci:ci + H].set(bih_d[:, src] + bhh_d[:, src])
            else:
                # n: b_in folds into gi; b_hn stays inside r * (W_hn h + b_hn).
                bi = bi.at[:, ci:ci + H].set(bih_d[:, src])
                bhn_p = bhn_p.at[:, ch:ch + H].set(bhh_d[:, src])
        out[f"whh_{tag}"] = whh_p
        out[f"bhn_{tag}"] = bhn_p

    w1f = jnp.zeros((Hp, D1), jnp.float32).at[:H, :].set(params["w1"][:H, :])
    w1b = jnp.zeros((Hp, D1), jnp.float32).at[:H, :].set(params["w1"][H:2 * H, :])
    w2 = jnp.zeros((D1, D2p), jnp.float32).at[:, :D2].set(params["w2"])
    b2 = jnp.zeros((1, D2p), jnp.float32).at[:, :D2].set(params["b2"])
    w3 = jnp.zeros((D2p, Cp), jnp.float32).at[:D2, :class_num].set(params["w3"])
    b3 = jnp.zeros((1, Cp), jnp.float32).at[:, :class_num].set(params["b3"])

    out.update(wih=wih, bi=bi, w1f=w1f, w1b=w1b, b1=params["b1"],
               w2=w2, b2=b2, w3=w3, b3=b3)
    return out


def ref_forward(x_tokens, params, *, hidden_size):
    """Pure-JAX fp32 reference of the PyTorch forward pass."""
    H = hidden_size
    embed = params["embedding"][x_tokens]  # [T, B, E]
    B = embed.shape[1]

    def run_dir(seq, wih, whh, bih, bhh):
        def step(h, x_t):
            gi = x_t @ wih + bih
            gh = h @ whh + bhh
            r = jax.nn.sigmoid(gi[:, :H] + gh[:, :H])
            z = jax.nn.sigmoid(gi[:, H:2 * H] + gh[:, H:2 * H])
            n = jnp.tanh(gi[:, 2 * H:] + r * gh[:, 2 * H:])
            h_new = (1.0 - z) * n + z * h
            return h_new, h_new
        h0 = jnp.zeros((B, H), jnp.float32)
        _, hs = jax.lax.scan(step, h0, seq)
        return hs

    hs_f = run_dir(embed, params["wih_f"], params["whh_f"],
                   params["bih_f"], params["bhh_f"])
    hs_b = run_dir(embed[::-1], params["wih_b"], params["whh_b"],
                   params["bih_b"], params["bhh_b"])[::-1]
    feat = jnp.sum(jnp.concatenate([hs_f, hs_b], axis=-1), axis=0)  # [B, 2H]
    h1 = jax.nn.relu(feat @ params["w1"] + params["b1"])
    h2 = jax.nn.relu(h1 @ params["w2"] + params["b2"])
    return h2 @ params["w3"] + params["b3"]


if __name__ == "__main__":
    vocab_size, embed_size, hidden_size = 50, 16, 32
    seq_len, batch, class_num = 8, 2, 10

    key = jax.random.PRNGKey(0)
    k_tok, k_par = jax.random.split(key)
    params = make_params(k_par, vocab_size, embed_size, hidden_size, class_num)
    kparams = prepare_kernel_params(params, hidden_size=hidden_size,
                                    class_num=class_num)

    # x: [T, B] int tokens; the embedding gather stays as plain-JAX glue.
    x = jax.random.randint(k_tok, (seq_len, batch), 0, vocab_size, dtype=jnp.int32)
    embed = params["embedding"][x]                      # [T, B, E]

    out = bigru_forward(embed, kparams, class_num=class_num,
                        hidden_size=hidden_size)        # mm_dtype=f32 for parity
    out = jax.block_until_ready(out)

    ref = jax.block_until_ready(ref_forward(x, params, hidden_size=hidden_size))
    assert out.shape == (batch, class_num)
    assert jnp.allclose(out, ref, rtol=1e-2, atol=1e-2), (out, ref)

    print("KERNEL_OK")
</pallas_src>

<mosaic_0001>
module attributes {stable_mosaic.version = 11 : i64} {
  func.func @bigru_kernel(%arg0: i32, %arg1: memref<8x8x16xf32, #tpu.memory_space<vmem>>, %arg2: memref<16x768xf32, #tpu.memory_space<vmem>>, %arg3: memref<1x768xf32, #tpu.memory_space<vmem>>, %arg4: memref<128x384xf32, #tpu.memory_space<vmem>>, %arg5: memref<128x384xf32, #tpu.memory_space<vmem>>, %arg6: memref<1x384xf32, #tpu.memory_space<vmem>>, %arg7: memref<1x384xf32, #tpu.memory_space<vmem>>, %arg8: memref<128x192xf32, #tpu.memory_space<vmem>>, %arg9: memref<128x192xf32, #tpu.memory_space<vmem>>, %arg10: memref<1x192xf32, #tpu.memory_space<vmem>>, %arg11: memref<192x128xf32, #tpu.memory_space<vmem>>, %arg12: memref<1x128xf32, #tpu.memory_space<vmem>>, %arg13: memref<128x128xf32, #tpu.memory_space<vmem>>, %arg14: memref<1x128xf32, #tpu.memory_space<vmem>>, %arg15: memref<8x128xf32, #tpu.memory_space<vmem>>, %arg16: memref<64x768xf32, #tpu.memory_space<vmem>>) attributes {dimension_semantics = [#tpu.dimension_semantics<parallel>], iteration_bounds = array<i64: 1>, scalar_prefetch = 0 : i64, scratch_operands = 1 : i64, tpu.core_type = #tpu.core_type<tc>, window_params = [{transform_indices = @transform_0, window_bounds = array<i64: 8, 8, 16>}, {pipeline_mode = #tpu.pipeline_mode<synchronous>, transform_indices = @transform_1, window_bounds = array<i64: 16, 768>}, {pipeline_mode = #tpu.pipeline_mode<synchronous>, transform_indices = @transform_2, window_bounds = array<i64: 1, 768>}, {pipeline_mode = #tpu.pipeline_mode<synchronous>, transform_indices = @transform_3, window_bounds = array<i64: 128, 384>}, {pipeline_mode = #tpu.pipeline_mode<synchronous>, transform_indices = @transform_4, window_bounds = array<i64: 128, 384>}, {pipeline_mode = #tpu.pipeline_mode<synchronous>, transform_indices = @transform_5, window_bounds = array<i64: 1, 384>}, {pipeline_mode = #tpu.pipeline_mode<synchronous>, transform_indices = @transform_6, window_bounds = array<i64: 1, 384>}, {pipeline_mode = #tpu.pipeline_mode<synchronous>, transform_indices = @transform_7, window_bounds = array<i64: 128, 192>}, {pipeline_mode = #tpu.pipeline_mode<synchronous>, transform_indices = @transform_8, window_bounds = array<i64: 128, 192>}, {pipeline_mode = #tpu.pipeline_mode<synchronous>, transform_indices = @transform_9, window_bounds = array<i64: 1, 192>}, {pipeline_mode = #tpu.pipeline_mode<synchronous>, transform_indices = @transform_10, window_bounds = array<i64: 192, 128>}, {pipeline_mode = #tpu.pipeline_mode<synchronous>, transform_indices = @transform_11, window_bounds = array<i64: 1, 128>}, {pipeline_mode = #tpu.pipeline_mode<synchronous>, transform_indices = @transform_12, window_bounds = array<i64: 128, 128>}, {pipeline_mode = #tpu.pipeline_mode<synchronous>, transform_indices = @transform_13, window_bounds = array<i64: 1, 128>}, {transform_indices = @transform_14, window_bounds = array<i64: 8, 128>}]} {
    %c0 = arith.constant 0 : index
    %c0_0 = arith.constant 0 : index
    %c0_1 = arith.constant 0 : index
    %0 = vector.load %arg1[%c0, %c0_0, %c0_1] : memref<8x8x16xf32, #tpu.memory_space<vmem>>, vector<8x8x16xf32>
    %1 = vector.shape_cast %0 : vector<8x8x16xf32> to vector<64x16xf32>
    %c0_2 = arith.constant 0 : index
    %c0_3 = arith.constant 0 : index
    %2 = vector.load %arg2[%c0_2, %c0_3] : memref<16x768xf32, #tpu.memory_space<vmem>>, vector<16x768xf32>
    %cst = arith.constant dense<0.000000e+00> : vector<64x768xf32>
    %3 = tpu.matmul %1, %2, %cst {dimension_numbers = #tpu.dot_dimension_numbers<[1], [0], [0], [1], [0, 0, 1, 1], [], []>} : vector<64x16xf32>, vector<16x768xf32>, vector<64x768xf32> -> vector<64x768xf32>
    %c0_4 = arith.constant 0 : index
    %c0_5 = arith.constant 0 : index
    %4 = vector.load %arg3[%c0_4, %c0_5] : memref<1x768xf32, #tpu.memory_space<vmem>>, vector<1x768xf32>
    %5 = vector.broadcast %4 : vector<1x768xf32> to vector<64x768xf32>
    %6 = arith.addf %3, %5 : vector<64x768xf32>
    %c0_6 = arith.constant 0 : index
    %c0_7 = arith.constant 0 : index
    %7 = vector.load %arg16[%c0_6, %c0_7] : memref<64x768xf32, #tpu.memory_space<vmem>>, vector<64x768xf32>
    tpu.vector_store %arg16[%c0_6, %c0_7], %6 {strides = array<i32>} : memref<64x768xf32, #tpu.memory_space<vmem>>, vector<64x768xf32>,
    %c0_8 = arith.constant 0 : index
    %c0_9 = arith.constant 0 : index
    %8 = vector.load %arg4[%c0_8, %c0_9] : memref<128x384xf32, #tpu.memory_space<vmem>>, vector<128x384xf32>
    %c0_10 = arith.constant 0 : index
    %c0_11 = arith.constant 0 : index
    %9 = vector.load %arg5[%c0_10, %c0_11] : memref<128x384xf32, #tpu.memory_space<vmem>>, vector<128x384xf32>
    %c0_12 = arith.constant 0 : index
    %c0_13 = arith.constant 0 : index
    %10 = vector.load %arg6[%c0_12, %c0_13] : memref<1x384xf32, #tpu.memory_space<vmem>>, vector<1x384xf32>
    %c0_14 = arith.constant 0 : index
    %c0_15 = arith.constant 0 : index
    %11 = vector.load %arg7[%c0_14, %c0_15] : memref<1x384xf32, #tpu.memory_space<vmem>>, vector<1x384xf32>
    %cst_16 = arith.constant 0.000000e+00 : f32
    %12 = vector.broadcast %cst_16 : f32 to vector<8x128xf32>
    %c0_17 = arith.constant 0 : index
    %c0_18 = arith.constant 0 : index
    %13 = vector.load %arg16[%c0_17, %c0_18] : memref<64x768xf32, #tpu.memory_space<vmem>>, vector<8x384xf32>
    %c56 = arith.constant 56 : index
    %c384 = arith.constant 384 : index
    %14 = vector.load %arg16[%c56, %c384] : memref<64x768xf32, #tpu.memory_space<vmem>>, vector<8x384xf32>
    %cst_19 = arith.constant dense<0.000000e+00> : vector<8x384xf32>
    %15 = tpu.matmul %12, %8, %cst_19 {dimension_numbers = #tpu.dot_dimension_numbers<[1], [0], [0], [1], [0, 0, 1, 1], [], []>} : vector<8x128xf32>, vector<128x384xf32>, vector<8x384xf32> -> vector<8x384xf32>
    %16 = vector.broadcast %10 : vector<1x384xf32> to vector<8x384xf32>
    %17 = arith.addf %15, %16 : vector<8x384xf32>
    %cst_20 = arith.constant dense<0.000000e+00> : vector<8x384xf32>
    %18 = tpu.matmul %12, %9, %cst_20 {dimension_numbers = #tpu.dot_dimension_numbers<[1], [0], [0], [1], [0, 0, 1, 1], [], []>} : vector<8x128xf32>, vector<128x384xf32>, vector<8x384xf32> -> vector<8x384xf32>
    %19 = vector.broadcast %11 : vector<1x384xf32> to vector<8x384xf32>
    %20 = arith.addf %18, %19 : vector<8x384xf32>
    %21 = vector.extract_strided_slice %13 {offsets = [0, 0], sizes = [8, 128], strides = [1, 1]} : vector<8x384xf32> to vector<8x128xf32>
    %22 = vector.extract_strided_slice %17 {offsets = [0, 0], sizes = [8, 128], strides = [1, 1]} : vector<8x384xf32> to vector<8x128xf32>
    %23 = arith.addf %21, %22 : vector<8x128xf32>
    %24 = arith.negf %23 : vector<8x128xf32>
    %25 = math.exp %24 : vector<8x128xf32>
    %cst_21 = arith.constant 1.000000e+00 : f32
    %26 = vector.broadcast %cst_21 : f32 to vector<8x128xf32>
    %27 = arith.addf %26, %25 : vector<8x128xf32>
    %28 = arith.divf %26, %27 : vector<8x128xf32>
    %29 = vector.extract_strided_slice %14 {offsets = [0, 0], sizes = [8, 128], strides = [1, 1]} : vector<8x384xf32> to vector<8x128xf32>
    %30 = vector.extract_strided_slice %20 {offsets = [0, 0], sizes = [8, 128], strides = [1, 1]} : vector<8x384xf32> to vector<8x128xf32>
    %31 = arith.addf %29, %30 : vector<8x128xf32>
    %32 = arith.negf %31 : vector<8x128xf32>
    %33 = math.exp %32 : vector<8x128xf32>
    %cst_22 = arith.constant 1.000000e+00 : f32
    %34 = vector.broadcast %cst_22 : f32 to vector<8x128xf32>
    %35 = arith.addf %34, %33 : vector<8x128xf32>
    %36 = arith.divf %34, %35 : vector<8x128xf32>
    %37 = vector.extract_strided_slice %13 {offsets = [0, 128], sizes = [8, 128], strides = [1, 1]} : vector<8x384xf32> to vector<8x128xf32>
    %38 = vector.extract_strided_slice %17 {offsets = [0, 128], sizes = [8, 128], strides = [1, 1]} : vector<8x384xf32> to vector<8x128xf32>
    %39 = arith.addf %37, %38 : vector<8x128xf32>
    %40 = arith.negf %39 : vector<8x128xf32>
    %41 = math.exp %40 : vector<8x128xf32>
    %cst_23 = arith.constant 1.000000e+00 : f32
    %42 = vector.broadcast %cst_23 : f32 to vector<8x128xf32>
    %43 = arith.addf %42, %41 : vector<8x128xf32>
    %44 = arith.divf %42, %43 : vector<8x128xf32>
    %45 = vector.extract_strided_slice %14 {offsets = [0, 128], sizes = [8, 128], strides = [1, 1]} : vector<8x384xf32> to vector<8x128xf32>
    %46 = vector.extract_strided_slice %20 {offsets = [0, 128], sizes = [8, 128], strides = [1, 1]} : vector<8x384xf32> to vector<8x128xf32>
    %47 = arith.addf %45, %46 : vector<8x128xf32>
    %48 = arith.negf %47 : vector<8x128xf32>
    %49 = math.exp %48 : vector<8x128xf32>
    %cst_24 = arith.constant 1.000000e+00 : f32
    %50 = vector.broadcast %cst_24 : f32 to vector<8x128xf32>
    %51 = arith.addf %50, %49 : vector<8x128xf32>
    %52 = arith.divf %50, %51 : vector<8x128xf32>
    %53 = vector.extract_strided_slice %13 {offsets = [0, 256], sizes = [8, 128], strides = [1, 1]} : vector<8x384xf32> to vector<8x128xf32>
    %54 = vector.extract_strided_slice %17 {offsets = [0, 256], sizes = [8, 128], strides = [1, 1]} : vector<8x384xf32> to vector<8x128xf32>
    %55 = arith.mulf %28, %54 : vector<8x128xf32>
    %56 = arith.addf %53, %55 : vector<8x128xf32>
    %57 = math.tanh %56 : vector<8x128xf32>
    %58 = vector.extract_strided_slice %14 {offsets = [0, 256], sizes = [8, 128], strides = [1, 1]} : vector<8x384xf32> to vector<8x128xf32>
    %59 = vector.extract_strided_slice %20 {offsets = [0, 256], sizes = [8, 128], strides = [1, 1]} : vector<8x384xf32> to vector<8x128xf32>
    %60 = arith.mulf %36, %59 : vector<8x128xf32>
    %61 = arith.addf %58, %60 : vector<8x128xf32>
    %62 = math.tanh %61 : vector<8x128xf32>
    %63 = arith.subf %12, %57 : vector<8x128xf32>
    %64 = arith.mulf %44, %63 : vector<8x128xf32>
    %65 = arith.addf %57, %64 : vector<8x128xf32>
    %66 = arith.subf %12, %62 : vector<8x128xf32>
    %67 = arith.mulf %52, %66 : vector<8x128xf32>
    %68 = arith.addf %62, %67 : vector<8x128xf32>
    %69 = arith.addf %12, %65 : vector<8x128xf32>
    %70 = arith.addf %12, %68 : vector<8x128xf32>
    %c8 = arith.constant 8 : index
    %c0_25 = arith.constant 0 : index
    %71 = vector.load %arg16[%c8, %c0_25] : memref<64x768xf32, #tpu.memory_space<vmem>>, vector<8x384xf32>
    %c48 = arith.constant 48 : index
    %c384_26 = arith.constant 384 : index
    %72 = vector.load %arg16[%c48, %c384_26] : memref<64x768xf32, #tpu.memory_space<vmem>>, vector<8x384xf32>
    %cst_27 = arith.constant dense<0.000000e+00> : vector<8x384xf32>
    %73 = tpu.matmul %65, %8, %cst_27 {dimension_numbers = #tpu.dot_dimension_numbers<[1], [0], [0], [1], [0, 0, 1, 1], [], []>} : vector<8x128xf32>, vector<128x384xf32>, vector<8x384xf32> -> vector<8x384xf32>
    %74 = vector.broadcast %10 : vector<1x384xf32> to vector<8x384xf32>
    %75 = arith.addf %73, %74 : vector<8x384xf32>
    %cst_28 = arith.constant dense<0.000000e+00> : vector<8x384xf32>
    %76 = tpu.matmul %68, %9, %cst_28 {dimension_numbers = #tpu.dot_dimension_numbers<[1], [0], [0], [1], [0, 0, 1, 1], [], []>} : vector<8x128xf32>, vector<128x384xf32>, vector<8x384xf32> -> vector<8x384xf32>
    %77 = vector.broadcast %11 : vector<1x384xf32> to vector<8x384xf32>
    %78 = arith.addf %76, %77 : vector<8x384xf32>
    %79 = vector.extract_strided_slice %71 {offsets = [0, 0], sizes = [8, 128], strides = [1, 1]} : vector<8x384xf32> to vector<8x128xf32>
    %80 = vector.extract_strided_slice %75 {offsets = [0, 0], sizes = [8, 128], strides = [1, 1]} : vector<8x384xf32> to vector<8x128xf32>
    %81 = arith.addf %79, %80 : vector<8x128xf32>
    %82 = arith.negf %81 : vector<8x128xf32>
    %83 = math.exp %82 : vector<8x128xf32>
    %cst_29 = arith.constant 1.000000e+00 : f32
    %84 = vector.broadcast %cst_29 : f32 to vector<8x128xf32>
    %85 = arith.addf %84, %83 : vector<8x128xf32>
    %86 = arith.divf %84, %85 : vector<8x128xf32>
    %87 = vector.extract_strided_slice %72 {offsets = [0, 0], sizes = [8, 128], strides = [1, 1]} : vector<8x384xf32> to vector<8x128xf32>
    %88 = vector.extract_strided_slice %78 {offsets = [0, 0], sizes = [8, 128], strides = [1, 1]} : vector<8x384xf32> to vector<8x128xf32>
    %89 = arith.addf %87, %88 : vector<8x128xf32>
    %90 = arith.negf %89 : vector<8x128xf32>
    %91 = math.exp %90 : vector<8x128xf32>
    %cst_30 = arith.constant 1.000000e+00 : f32
    %92 = vector.broadcast %cst_30 : f32 to vector<8x128xf32>
    %93 = arith.addf %92, %91 : vector<8x128xf32>
    %94 = arith.divf %92, %93 : vector<8x128xf32>
    %95 = vector.extract_strided_slice %71 {offsets = [0, 128], sizes = [8, 128], strides = [1, 1]} : vector<8x384xf32> to vector<8x128xf32>
    %96 = vector.extract_strided_slice %75 {offsets = [0, 128], sizes = [8, 128], strides = [1, 1]} : vector<8x384xf32> to vector<8x128xf32>
    %97 = arith.addf %95, %96 : vector<8x128xf32>
    %98 = arith.negf %97 : vector<8x128xf32>
    %99 = math.exp %98 : vector<8x128xf32>
    %cst_31 = arith.constant 1.000000e+00 : f32
    %100 = vector.broadcast %cst_31 : f32 to vector<8x128xf32>
    %101 = arith.addf %100, %99 : vector<8x128xf32>
    %102 = arith.divf %100, %101 : vector<8x128xf32>
    %103 = vector.extract_strided_slice %72 {offsets = [0, 128], sizes = [8, 128], strides = [1, 1]} : vector<8x384xf32> to vector<8x128xf32>
    %104 = vector.extract_strided_slice %78 {offsets = [0, 128], sizes = [8, 128], strides = [1, 1]} : vector<8x384xf32> to vector<8x128xf32>
    %105 = arith.addf %103, %104 : vector<8x128xf32>
    %106 = arith.negf %105 : vector<8x128xf32>
    %107 = math.exp %106 : vector<8x128xf32>
    %cst_32 = arith.constant 1.000000e+00 : f32
    %108 = vector.broadcast %cst_32 : f32 to vector<8x128xf32>
    %109 = arith.addf %108, %107 : vector<8x128xf32>
    %110 = arith.divf %108, %109 : vector<8x128xf32>
    %111 = vector.extract_strided_slice %71 {offsets = [0, 256], sizes = [8, 128], strides = [1, 1]} : vector<8x384xf32> to vector<8x128xf32>
    %112 = vector.extract_strided_slice %75 {offsets = [0, 256], sizes = [8, 128], strides = [1, 1]} : vector<8x384xf32> to vector<8x128xf32>
    %113 = arith.mulf %86, %112 : vector<8x128xf32>
    %114 = arith.addf %111, %113 : vector<8x128xf32>
    %115 = math.tanh %114 : vector<8x128xf32>
    %116 = vector.extract_strided_slice %72 {offsets = [0, 256], sizes = [8, 128], strides = [1, 1]} : vector<8x384xf32> to vector<8x128xf32>
    %117 = vector.extract_strided_slice %78 {offsets = [0, 256], sizes = [8, 128], strides = [1, 1]} : vector<8x384xf32> to vector<8x128xf32>
    %118 = arith.mulf %94, %117 : vector<8x128xf32>
    %119 = arith.addf %116, %118 : vector<8x128xf32>
    %120 = math.tanh %119 : vector<8x128xf32>
    %121 = arith.subf %65, %115 : vector<8x128xf32>
    %122 = arith.mulf %102, %121 : vector<8x128xf32>
    %123 = arith.addf %115, %122 : vector<8x128xf32>
    %124 = arith.subf %68, %120 : vector<8x128xf32>
    %125 = arith.mulf %110, %124 : vector<8x128xf32>
    %126 = arith.addf %120, %125 : vector<8x128xf32>
    %127 = arith.addf %69, %123 : vector<8x128xf32>
    %128 = arith.addf %70, %126 : vector<8x128xf32>
    %c16 = arith.constant 16 : index
    %c0_33 = arith.constant 0 : index
    %129 = vector.load %arg16[%c16, %c0_33] : memref<64x768xf32, #tpu.memory_space<vmem>>, vector<8x384xf32>
    %c40 = arith.constant 40 : index
    %c384_34 = arith.constant 384 : index
    %130 = vector.load %arg16[%c40, %c384_34] : memref<64x768xf32, #tpu.memory_space<vmem>>, vector<8x384xf32>
    %cst_35 = arith.constant dense<0.000000e+00> : vector<8x384xf32>
    %131 = tpu.matmul %123, %8, %cst_35 {dimension_numbers = #tpu.dot_dimension_numbers<[1], [0], [0], [1], [0, 0, 1, 1], [], []>} : vector<8x128xf32>, vector<128x384xf32>, vector<8x384xf32> -> vector<8x384xf32>
    %132 = vector.broadcast %10 : vector<1x384xf32> to vector<8x384xf32>
    %133 = arith.addf %131, %132 : vector<8x384xf32>
    %cst_36 = arith.constant dense<0.000000e+00> : vector<8x384xf32>
    %134 = tpu.matmul %126, %9, %cst_36 {dimension_numbers = #tpu.dot_dimension_numbers<[1], [0], [0], [1], [0, 0, 1, 1], [], []>} : vector<8x128xf32>, vector<128x384xf32>, vector<8x384xf32> -> vector<8x384xf32>
    %135 = vector.broadcast %11 : vector<1x384xf32> to vector<8x384xf32>
    %136 = arith.addf %134, %135 : vector<8x384xf32>
    %137 = vector.extract_strided_slice %129 {offsets = [0, 0], sizes = [8, 128], strides = [1, 1]} : vector<8x384xf32> to vector<8x128xf32>
    %138 = vector.extract_strided_slice %133 {offsets = [0, 0], sizes = [8, 128], strides = [1, 1]} : vector<8x384xf32> to vector<8x128xf32>
    %139 = arith.addf %137, %138 : vector<8x128xf32>
    %140 = arith.negf %139 : vector<8x128xf32>
    %141 = math.exp %140 : vector<8x128xf32>
    %cst_37 = arith.constant 1.000000e+00 : f32
    %142 = vector.broadcast %cst_37 : f32 to vector<8x128xf32>
    %143 = arith.addf %142, %141 : vector<8x128xf32>
    %144 = arith.divf %142, %143 : vector<8x128xf32>
    %145 = vector.extract_strided_slice %130 {offsets = [0, 0], sizes = [8, 128], strides = [1, 1]} : vector<8x384xf32> to vector<8x128xf32>
    %146 = vector.extract_strided_slice %136 {offsets = [0, 0], sizes = [8, 128], strides = [1, 1]} : vector<8x384xf32> to vector<8x128xf32>
    %147 = arith.addf %145, %146 : vector<8x128xf32>
    %148 = arith.negf %147 : vector<8x128xf32>
    %149 = math.exp %148 : vector<8x128xf32>
    %cst_38 = arith.constant 1.000000e+00 : f32
    %150 = vector.broadcast %cst_38 : f32 to vector<8x128xf32>
    %151 = arith.addf %150, %149 : vector<8x128xf32>
    %152 = arith.divf %150, %151 : vector<8x128xf32>
    %153 = vector.extract_strided_slice %129 {offsets = [0, 128], sizes = [8, 128], strides = [1, 1]} : vector<8x384xf32> to vector<8x128xf32>
    %154 = vector.extract_strided_slice %133 {offsets = [0, 128], sizes = [8, 128], strides = [1, 1]} : vector<8x384xf32> to vector<8x128xf32>
    %155 = arith.addf %153, %154 : vector<8x128xf32>
    %156 = arith.negf %155 : vector<8x128xf32>
    %157 = math.exp %156 : vector<8x128xf32>
    %cst_39 = arith.constant 1.000000e+00 : f32
    %158 = vector.broadcast %cst_39 : f32 to vector<8x128xf32>
    %159 = arith.addf %158, %157 : vector<8x128xf32>
    %160 = arith.divf %158, %159 : vector<8x128xf32>
    %161 = vector.extract_strided_slice %130 {offsets = [0, 128], sizes = [8, 128], strides = [1, 1]} : vector<8x384xf32> to vector<8x128xf32>
    %162 = vector.extract_strided_slice %136 {offsets = [0, 128], sizes = [8, 128], strides = [1, 1]} : vector<8x384xf32> to vector<8x128xf32>
    %163 = arith.addf %161, %162 : vector<8x128xf32>
    %164 = arith.negf %163 : vector<8x128xf32>
    %165 = math.exp %164 : vector<8x128xf32>
    %cst_40 = arith.constant 1.000000e+00 : f32
    %166 = vector.broadcast %cst_40 : f32 to vector<8x128xf32>
    %167 = arith.addf %166, %165 : vector<8x128xf32>
    %168 = arith.divf %166, %167 : vector<8x128xf32>
    %169 = vector.extract_strided_slice %129 {offsets = [0, 256], sizes = [8, 128], strides = [1, 1]} : vector<8x384xf32> to vector<8x128xf32>
    %170 = vector.extract_strided_slice %133 {offsets = [0, 256], sizes = [8, 128], strides = [1, 1]} : vector<8x384xf32> to vector<8x128xf32>
    %171 = arith.mulf %144, %170 : vector<8x128xf32>
    %172 = arith.addf %169, %171 : vector<8x128xf32>
    %173 = math.tanh %172 : vector<8x128xf32>
    %174 = vector.extract_strided_slice %130 {offsets = [0, 256], sizes = [8, 128], strides = [1, 1]} : vector<8x384xf32> to vector<8x128xf32>
    %175 = vector.extract_strided_slice %136 {offsets = [0, 256], sizes = [8, 128], strides = [1, 1]} : vector<8x384xf32> to vector<8x128xf32>
    %176 = arith.mulf %152, %175 : vector<8x128xf32>
    %177 = arith.addf %174, %176 : vector<8x128xf32>
    %178 = math.tanh %177 : vector<8x128xf32>
    %179 = arith.subf %123, %173 : vector<8x128xf32>
    %180 = arith.mulf %160, %179 : vector<8x128xf32>
    %181 = arith.addf %173, %180 : vector<8x128xf32>
    %182 = arith.subf %126, %178 : vector<8x128xf32>
    %183 = arith.mulf %168, %182 : vector<8x128xf32>
    %184 = arith.addf %178, %183 : vector<8x128xf32>
    %185 = arith.addf %127, %181 : vector<8x128xf32>
    %186 = arith.addf %128, %184 : vector<8x128xf32>
    %c24 = arith.constant 24 : index
    %c0_41 = arith.constant 0 : index
    %187 = vector.load %arg16[%c24, %c0_41] : memref<64x768xf32, #tpu.memory_space<vmem>>, vector<8x384xf32>
    %c32 = arith.constant 32 : index
    %c384_42 = arith.constant 384 : index
    %188 = vector.load %arg16[%c32, %c384_42] : memref<64x768xf32, #tpu.memory_space<vmem>>, vector<8x384xf32>
    %cst_43 = arith.constant dense<0.000000e+00> : vector<8x384xf32>
    %189 = tpu.matmul %181, %8, %cst_43 {dimension_numbers = #tpu.dot_dimension_numbers<[1], [0], [0], [1], [0, 0, 1, 1], [], []>} : vector<8x128xf32>, vector<128x384xf32>, vector<8x384xf32> -> vector<8x384xf32>
    %190 = vector.broadcast %10 : vector<1x384xf32> to vector<8x384xf32>
    %191 = arith.addf %189, %190 : vector<8x384xf32>
    %cst_44 = arith.constant dense<0.000000e+00> : vector<8x384xf32>
    %192 = tpu.matmul %184, %9, %cst_44 {dimension_numbers = #tpu.dot_dimension_numbers<[1], [0], [0], [1], [0, 0, 1, 1], [], []>} : vector<8x128xf32>, vector<128x384xf32>, vector<8x384xf32> -> vector<8x384xf32>
    %193 = vector.broadcast %11 : vector<1x384xf32> to vector<8x384xf32>
    %194 = arith.addf %192, %193 : vector<8x384xf32>
    %195 = vector.extract_strided_slice %187 {offsets = [0, 0], sizes = [8, 128], strides = [1, 1]} : vector<8x384xf32> to vector<8x128xf32>
    %196 = vector.extract_strided_slice %191 {offsets = [0, 0], sizes = [8, 128], strides = [1, 1]} : vector<8x384xf32> to vector<8x128xf32>
    %197 = arith.addf %195, %196 : vector<8x128xf32>
    %198 = arith.negf %197 : vector<8x128xf32>
    %199 = math.exp %198 : vector<8x128xf32>
    %cst_45 = arith.constant 1.000000e+00 : f32
    %200 = vector.broadcast %cst_45 : f32 to vector<8x128xf32>
    %201 = arith.addf %200, %199 : vector<8x128xf32>
    %202 = arith.divf %200, %201 : vector<8x128xf32>
    %203 = vector.extract_strided_slice %188 {offsets = [0, 0], sizes = [8, 128], strides = [1, 1]} : vector<8x384xf32> to vector<8x128xf32>
    %204 = vector.extract_strided_slice %194 {offsets = [0, 0], sizes = [8, 128], strides = [1, 1]} : vector<8x384xf32> to vector<8x128xf32>
    %205 = arith.addf %203, %204 : vector<8x128xf32>
    %206 = arith.negf %205 : vector<8x128xf32>
    %207 = math.exp %206 : vector<8x128xf32>
    %cst_46 = arith.constant 1.000000e+00 : f32
    %208 = vector.broadcast %cst_46 : f32 to vector<8x128xf32>
    %209 = arith.addf %208, %207 : vector<8x128xf32>
    %210 = arith.divf %208, %209 : vector<8x128xf32>
    %211 = vector.extract_strided_slice %187 {offsets = [0, 128], sizes = [8, 128], strides = [1, 1]} : vector<8x384xf32> to vector<8x128xf32>
    %212 = vector.extract_strided_slice %191 {offsets = [0, 128], sizes = [8, 128], strides = [1, 1]} : vector<8x384xf32> to vector<8x128xf32>
    %213 = arith.addf %211, %212 : vector<8x128xf32>
    %214 = arith.negf %213 : vector<8x128xf32>
    %215 = math.exp %214 : vector<8x128xf32>
    %cst_47 = arith.constant 1.000000e+00 : f32
    %216 = vector.broadcast %cst_47 : f32 to vector<8x128xf32>
    %217 = arith.addf %216, %215 : vector<8x128xf32>
    %218 = arith.divf %216, %217 : vector<8x128xf32>
    %219 = vector.extract_strided_slice %188 {offsets = [0, 128], sizes = [8, 128], strides = [1, 1]} : vector<8x384xf32> to vector<8x128xf32>
    %220 = vector.extract_strided_slice %194 {offsets = [0, 128], sizes = [8, 128], strides = [1, 1]} : vector<8x384xf32> to vector<8x128xf32>
    %221 = arith.addf %219, %220 : vector<8x128xf32>
    %222 = arith.negf %221 : vector<8x128xf32>
    %223 = math.exp %222 : vector<8x128xf32>
    %cst_48 = arith.constant 1.000000e+00 : f32
    %224 = vector.broadcast %cst_48 : f32 to vector<8x128xf32>
    %225 = arith.addf %224, %223 : vector<8x128xf32>
    %226 = arith.divf %224, %225 : vector<8x128xf32>
    %227 = vector.extract_strided_slice %187 {offsets = [0, 256], sizes = [8, 128], strides = [1, 1]} : vector<8x384xf32> to vector<8x128xf32>
    %228 = vector.extract_strided_slice %191 {offsets = [0, 256], sizes = [8, 128], strides = [1, 1]} : vector<8x384xf32> to vector<8x128xf32>
    %229 = arith.mulf %202, %228 : vector<8x128xf32>
    %230 = arith.addf %227, %229 : vector<8x128xf32>
    %231 = math.tanh %230 : vector<8x128xf32>
    %232 = vector.extract_strided_slice %188 {offsets = [0, 256], sizes = [8, 128], strides = [1, 1]} : vector<8x384xf32> to vector<8x128xf32>
    %233 = vector.extract_strided_slice %194 {offsets = [0, 256], sizes = [8, 128], strides = [1, 1]} : vector<8x384xf32> to vector<8x128xf32>
    %234 = arith.mulf %210, %233 : vector<8x128xf32>
    %235 = arith.addf %232, %234 : vector<8x128xf32>
    %236 = math.tanh %235 : vector<8x128xf32>
    %237 = arith.subf %181, %231 : vector<8x128xf32>
    %238 = arith.mulf %218, %237 : vector<8x128xf32>
    %239 = arith.addf %231, %238 : vector<8x128xf32>
    %240 = arith.subf %184, %236 : vector<8x128xf32>
    %241 = arith.mulf %226, %240 : vector<8x128xf32>
    %242 = arith.addf %236, %241 : vector<8x128xf32>
    %243 = arith.addf %185, %239 : vector<8x128xf32>
    %244 = arith.addf %186, %242 : vector<8x128xf32>
    %c32_49 = arith.constant 32 : index
    %c0_50 = arith.constant 0 : index
    %245 = vector.load %arg16[%c32_49, %c0_50] : memref<64x768xf32, #tpu.memory_space<vmem>>, vector<8x384xf32>
    %c24_51 = arith.constant 24 : index
    %c384_52 = arith.constant 384 : index
    %246 = vector.load %arg16[%c24_51, %c384_52] : memref<64x768xf32, #tpu.memory_space<vmem>>, vector<8x384xf32>
    %cst_53 = arith.constant dense<0.000000e+00> : vector<8x384xf32>
    %247 = tpu.matmul %239, %8, %cst_53 {dimension_numbers = #tpu.dot_dimension_numbers<[1], [0], [0], [1], [0, 0, 1, 1], [], []>} : vector<8x128xf32>, vector<128x384xf32>, vector<8x384xf32> -> vector<8x384xf32>
    %248 = vector.broadcast %10 : vector<1x384xf32> to vector<8x384xf32>
    %249 = arith.addf %247, %248 : vector<8x384xf32>
    %cst_54 = arith.constant dense<0.000000e+00> : vector<8x384xf32>
    %250 = tpu.matmul %242, %9, %cst_54 {dimension_numbers = #tpu.dot_dimension_numbers<[1], [0], [0], [1], [0, 0, 1, 1], [], []>} : vector<8x128xf32>, vector<128x384xf32>, vector<8x384xf32> -> vector<8x384xf32>
    %251 = vector.broadcast %11 : vector<1x384xf32> to vector<8x384xf32>
    %252 = arith.addf %250, %251 : vector<8x384xf32>
    %253 = vector.extract_strided_slice %245 {offsets = [0, 0], sizes = [8, 128], strides = [1, 1]} : vector<8x384xf32> to vector<8x128xf32>
    %254 = vector.extract_strided_slice %249 {offsets = [0, 0], sizes = [8, 128], strides = [1, 1]} : vector<8x384xf32> to vector<8x128xf32>
    %255 = arith.addf %253, %254 : vector<8x128xf32>
    %256 = arith.negf %255 : vector<8x128xf32>
    %257 = math.exp %256 : vector<8x128xf32>
    %cst_55 = arith.constant 1.000000e+00 : f32
    %258 = vector.broadcast %cst_55 : f32 to vector<8x128xf32>
    %259 = arith.addf %258, %257 : vector<8x128xf32>
    %260 = arith.divf %258, %259 : vector<8x128xf32>
    %261 = vector.extract_strided_slice %246 {offsets = [0, 0], sizes = [8, 128], strides = [1, 1]} : vector<8x384xf32> to vector<8x128xf32>
    %262 = vector.extract_strided_slice %252 {offsets = [0, 0], sizes = [8, 128], strides = [1, 1]} : vector<8x384xf32> to vector<8x128xf32>
    %263 = arith.addf %261, %262 : vector<8x128xf32>
    %264 = arith.negf %263 : vector<8x128xf32>
    %265 = math.exp %264 : vector<8x128xf32>
    %cst_56 = arith.constant 1.000000e+00 : f32
    %266 = vector.broadcast %cst_56 : f32 to vector<8x128xf32>
    %267 = arith.addf %266, %265 : vector<8x128xf32>
    %268 = arith.divf %266, %267 : vector<8x128xf32>
    %269 = vector.extract_strided_slice %245 {offsets = [0, 128], sizes = [8, 128], strides = [1, 1]} : vector<8x384xf32> to vector<8x128xf32>
    %270 = vector.extract_strided_slice %249 {offsets = [0, 128], sizes = [8, 128], strides = [1, 1]} : vector<8x384xf32> to vector<8x128xf32>
    %271 = arith.addf %269, %270 : vector<8x128xf32>
    %272 = arith.negf %271 : vector<8x128xf32>
    %273 = math.exp %272 : vector<8x128xf32>
    %cst_57 = arith.constant 1.000000e+00 : f32
    %274 = vector.broadcast %cst_57 : f32 to vector<8x128xf32>
    %275 = arith.addf %274, %273 : vector<8x128xf32>
    %276 = arith.divf %274, %275 : vector<8x128xf32>
    %277 = vector.extract_strided_slice %246 {offsets = [0, 128], sizes = [8, 128], strides = [1, 1]} : vector<8x384xf32> to vector<8x128xf32>
    %278 = vector.extract_strided_slice %252 {offsets = [0, 128], sizes = [8, 128], strides = [1, 1]} : vector<8x384xf32> to vector<8x128xf32>
    %279 = arith.addf %277, %278 : vector<8x128xf32>
    %280 = arith.negf %279 : vector<8x128xf32>
    %281 = math.exp %280 : vector<8x128xf32>
    %cst_58 = arith.constant 1.000000e+00 : f32
    %282 = vector.broadcast %cst_58 : f32 to vector<8x128xf32>
    %283 = arith.addf %282, %281 : vector<8x128xf32>
    %284 = arith.divf %282, %283 : vector<8x128xf32>
    %285 = vector.extract_strided_slice %245 {offsets = [0, 256], sizes = [8, 128], strides = [1, 1]} : vector<8x384xf32> to vector<8x128xf32>
    %286 = vector.extract_strided_slice %249 {offsets = [0, 256], sizes = [8, 128], strides = [1, 1]} : vector<8x384xf32> to vector<8x128xf32>
    %287 = arith.mulf %260, %286 : vector<8x128xf32>
    %288 = arith.addf %285, %287 : vector<8x128xf32>
    %289 = math.tanh %288 : vector<8x128xf32>
    %290 = vector.extract_strided_slice %246 {offsets = [0, 256], sizes = [8, 128], strides = [1, 1]} : vector<8x384xf32> to vector<8x128xf32>
    %291 = vector.extract_strided_slice %252 {offsets = [0, 256], sizes = [8, 128], strides = [1, 1]} : vector<8x384xf32> to vector<8x128xf32>
    %292 = arith.mulf %268, %291 : vector<8x128xf32>
    %293 = arith.addf %290, %292 : vector<8x128xf32>
    %294 = math.tanh %293 : vector<8x128xf32>
    %295 = arith.subf %239, %289 : vector<8x128xf32>
    %296 = arith.mulf %276, %295 : vector<8x128xf32>
    %297 = arith.addf %289, %296 : vector<8x128xf32>
    %298 = arith.subf %242, %294 : vector<8x128xf32>
    %299 = arith.mulf %284, %298 : vector<8x128xf32>
    %300 = arith.addf %294, %299 : vector<8x128xf32>
    %301 = arith.addf %243, %297 : vector<8x128xf32>
    %302 = arith.addf %244, %300 : vector<8x128xf32>
    %c40_59 = arith.constant 40 : index
    %c0_60 = arith.constant 0 : index
    %303 = vector.load %arg16[%c40_59, %c0_60] : memref<64x768xf32, #tpu.memory_space<vmem>>, vector<8x384xf32>
    %c16_61 = arith.constant 16 : index
    %c384_62 = arith.constant 384 : index
    %304 = vector.load %arg16[%c16_61, %c384_62] : memref<64x768xf32, #tpu.memory_space<vmem>>, vector<8x384xf32>
    %cst_63 = arith.constant dense<0.000000e+00> : vector<8x384xf32>
    %305 = tpu.matmul %297, %8, %cst_63 {dimension_numbers = #tpu.dot_dimension_numbers<[1], [0], [0], [1], [0, 0, 1, 1], [], []>} : vector<8x128xf32>, vector<128x384xf32>, vector<8x384xf32> -> vector<8x384xf32>
    %306 = vector.broadcast %10 : vector<1x384xf32> to vector<8x384xf32>
    %307 = arith.addf %305, %306 : vector<8x384xf32>
    %cst_64 = arith.constant dense<0.000000e+00> : vector<8x384xf32>
    %308 = tpu.matmul %300, %9, %cst_64 {dimension_numbers = #tpu.dot_dimension_numbers<[1], [0], [0], [1], [0, 0, 1, 1], [], []>} : vector<8x128xf32>, vector<128x384xf32>, vector<8x384xf32> -> vector<8x384xf32>
    %309 = vector.broadcast %11 : vector<1x384xf32> to vector<8x384xf32>
    %310 = arith.addf %308, %309 : vector<8x384xf32>
    %311 = vector.extract_strided_slice %303 {offsets = [0, 0], sizes = [8, 128], strides = [1, 1]} : vector<8x384xf32> to vector<8x128xf32>
    %312 = vector.extract_strided_slice %307 {offsets = [0, 0], sizes = [8, 128], strides = [1, 1]} : vector<8x384xf32> to vector<8x128xf32>
    %313 = arith.addf %311, %312 : vector<8x128xf32>
    %314 = arith.negf %313 : vector<8x128xf32>
    %315 = math.exp %314 : vector<8x128xf32>
    %cst_65 = arith.constant 1.000000e+00 : f32
    %316 = vector.broadcast %cst_65 : f32 to vector<8x128xf32>
    %317 = arith.addf %316, %315 : vector<8x128xf32>
    %318 = arith.divf %316, %317 : vector<8x128xf32>
    %319 = vector.extract_strided_slice %304 {offsets = [0, 0], sizes = [8, 128], strides = [1, 1]} : vector<8x384xf32> to vector<8x128xf32>
    %320 = vector.extract_strided_slice %310 {offsets = [0, 0], sizes = [8, 128], strides = [1, 1]} : vector<8x384xf32> to vector<8x128xf32>
    %321 = arith.addf %319, %320 : vector<8x128xf32>
    %322 = arith.negf %321 : vector<8x128xf32>
    %323 = math.exp %322 : vector<8x128xf32>
    %cst_66 = arith.constant 1.000000e+00 : f32
    %324 = vector.broadcast %cst_66 : f32 to vector<8x128xf32>
    %325 = arith.addf %324, %323 : vector<8x128xf32>
    %326 = arith.divf %324, %325 : vector<8x128xf32>
    %327 = vector.extract_strided_slice %303 {offsets = [0, 128], sizes = [8, 128], strides = [1, 1]} : vector<8x384xf32> to vector<8x128xf32>
    %328 = vector.extract_strided_slice %307 {offsets = [0, 128], sizes = [8, 128], strides = [1, 1]} : vector<8x384xf32> to vector<8x128xf32>
    %329 = arith.addf %327, %328 : vector<8x128xf32>
    %330 = arith.negf %329 : vector<8x128xf32>
    %331 = math.exp %330 : vector<8x128xf32>
    %cst_67 = arith.constant 1.000000e+00 : f32
    %332 = vector.broadcast %cst_67 : f32 to vector<8x128xf32>
    %333 = arith.addf %332, %331 : vector<8x128xf32>
    %334 = arith.divf %332, %333 : vector<8x128xf32>
    %335 = vector.extract_strided_slice %304 {offsets = [0, 128], sizes = [8, 128], strides = [1, 1]} : vector<8x384xf32> to vector<8x128xf32>
    %336 = vector.extract_strided_slice %310 {offsets = [0, 128], sizes = [8, 128], strides = [1, 1]} : vector<8x384xf32> to vector<8x128xf32>
    %337 = arith.addf %335, %336 : vector<8x128xf32>
    %338 = arith.negf %337 : vector<8x128xf32>
    %339 = math.exp %338 : vector<8x128xf32>
    %cst_68 = arith.constant 1.000000e+00 : f32
    %340 = vector.broadcast %cst_68 : f32 to vector<8x128xf32>
    %341 = arith.addf %340, %339 : vector<8x128xf32>
    %342 = arith.divf %340, %341 : vector<8x128xf32>
    %343 = vector.extract_strided_slice %303 {offsets = [0, 256], sizes = [8, 128], strides = [1, 1]} : vector<8x384xf32> to vector<8x128xf32>
    %344 = vector.extract_strided_slice %307 {offsets = [0, 256], sizes = [8, 128], strides = [1, 1]} : vector<8x384xf32> to vector<8x128xf32>
    %345 = arith.mulf %318, %344 : vector<8x128xf32>
    %346 = arith.addf %343, %345 : vector<8x128xf32>
    %347 = math.tanh %346 : vector<8x128xf32>
    %348 = vector.extract_strided_slice %304 {offsets = [0, 256], sizes = [8, 128], strides = [1, 1]} : vector<8x384xf32> to vector<8x128xf32>
    %349 = vector.extract_strided_slice %310 {offsets = [0, 256], sizes = [8, 128], strides = [1, 1]} : vector<8x384xf32> to vector<8x128xf32>
    %350 = arith.mulf %326, %349 : vector<8x128xf32>
    %351 = arith.addf %348, %350 : vector<8x128xf32>
    %352 = math.tanh %351 : vector<8x128xf32>
    %353 = arith.subf %297, %347 : vector<8x128xf32>
    %354 = arith.mulf %334, %353 : vector<8x128xf32>
    %355 = arith.addf %347, %354 : vector<8x128xf32>
    %356 = arith.subf %300, %352 : vector<8x128xf32>
    %357 = arith.mulf %342, %356 : vector<8x128xf32>
    %358 = arith.addf %352, %357 : vector<8x128xf32>
    %359 = arith.addf %301, %355 : vector<8x128xf32>
    %360 = arith.addf %302, %358 : vector<8x128xf32>
    %c48_69 = arith.constant 48 : index
    %c0_70 = arith.constant 0 : index
    %361 = vector.load %arg16[%c48_69, %c0_70] : memref<64x768xf32, #tpu.memory_space<vmem>>, vector<8x384xf32>
    %c8_71 = arith.constant 8 : index
    %c384_72 = arith.constant 384 : index
    %362 = vector.load %arg16[%c8_71, %c384_72] : memref<64x768xf32, #tpu.memory_space<vmem>>, vector<8x384xf32>
    %cst_73 = arith.constant dense<0.000000e+00> : vector<8x384xf32>
    %363 = tpu.matmul %355, %8, %cst_73 {dimension_numbers = #tpu.dot_dimension_numbers<[1], [0], [0], [1], [0, 0, 1, 1], [], []>} : vector<8x128xf32>, vector<128x384xf32>, vector<8x384xf32> -> vector<8x384xf32>
    %364 = vector.broadcast %10 : vector<1x384xf32> to vector<8x384xf32>
    %365 = arith.addf %363, %364 : vector<8x384xf32>
    %cst_74 = arith.constant dense<0.000000e+00> : vector<8x384xf32>
    %366 = tpu.matmul %358, %9, %cst_74 {dimension_numbers = #tpu.dot_dimension_numbers<[1], [0], [0], [1], [0, 0, 1, 1], [], []>} : vector<8x128xf32>, vector<128x384xf32>, vector<8x384xf32> -> vector<8x384xf32>
    %367 = vector.broadcast %11 : vector<1x384xf32> to vector<8x384xf32>
    %368 = arith.addf %366, %367 : vector<8x384xf32>
    %369 = vector.extract_strided_slice %361 {offsets = [0, 0], sizes = [8, 128], strides = [1, 1]} : vector<8x384xf32> to vector<8x128xf32>
    %370 = vector.extract_strided_slice %365 {offsets = [0, 0], sizes = [8, 128], strides = [1, 1]} : vector<8x384xf32> to vector<8x128xf32>
    %371 = arith.addf %369, %370 : vector<8x128xf32>
    %372 = arith.negf %371 : vector<8x128xf32>
    %373 = math.exp %372 : vector<8x128xf32>
    %cst_75 = arith.constant 1.000000e+00 : f32
    %374 = vector.broadcast %cst_75 : f32 to vector<8x128xf32>
    %375 = arith.addf %374, %373 : vector<8x128xf32>
    %376 = arith.divf %374, %375 : vector<8x128xf32>
    %377 = vector.extract_strided_slice %362 {offsets = [0, 0], sizes = [8, 128], strides = [1, 1]} : vector<8x384xf32> to vector<8x128xf32>
    %378 = vector.extract_strided_slice %368 {offsets = [0, 0], sizes = [8, 128], strides = [1, 1]} : vector<8x384xf32> to vector<8x128xf32>
    %379 = arith.addf %377, %378 : vector<8x128xf32>
    %380 = arith.negf %379 : vector<8x128xf32>
    %381 = math.exp %380 : vector<8x128xf32>
    %cst_76 = arith.constant 1.000000e+00 : f32
    %382 = vector.broadcast %cst_76 : f32 to vector<8x128xf32>
    %383 = arith.addf %382, %381 : vector<8x128xf32>
    %384 = arith.divf %382, %383 : vector<8x128xf32>
    %385 = vector.extract_strided_slice %361 {offsets = [0, 128], sizes = [8, 128], strides = [1, 1]} : vector<8x384xf32> to vector<8x128xf32>
    %386 = vector.extract_strided_slice %365 {offsets = [0, 128], sizes = [8, 128], strides = [1, 1]} : vector<8x384xf32> to vector<8x128xf32>
    %387 = arith.addf %385, %386 : vector<8x128xf32>
    %388 = arith.negf %387 : vector<8x128xf32>
    %389 = math.exp %388 : vector<8x128xf32>
    %cst_77 = arith.constant 1.000000e+00 : f32
    %390 = vector.broadcast %cst_77 : f32 to vector<8x128xf32>
    %391 = arith.addf %390, %389 : vector<8x128xf32>
    %392 = arith.divf %390, %391 : vector<8x128xf32>
    %393 = vector.extract_strided_slice %362 {offsets = [0, 128], sizes = [8, 128], strides = [1, 1]} : vector<8x384xf32> to vector<8x128xf32>
    %394 = vector.extract_strided_slice %368 {offsets = [0, 128], sizes = [8, 128], strides = [1, 1]} : vector<8x384xf32> to vector<8x128xf32>
    %395 = arith.addf %393, %394 : vector<8x128xf32>
    %396 = arith.negf %395 : vector<8x128xf32>
    %397 = math.exp %396 : vector<8x128xf32>
    %cst_78 = arith.constant 1.000000e+00 : f32
    %398 = vector.broadcast %cst_78 : f32 to vector<8x128xf32>
    %399 = arith.addf %398, %397 : vector<8x128xf32>
    %400 = arith.divf %398, %399 : vector<8x128xf32>
    %401 = vector.extract_strided_slice %361 {offsets = [0, 256], sizes = [8, 128], strides = [1, 1]} : vector<8x384xf32> to vector<8x128xf32>
    %402 = vector.extract_strided_slice %365 {offsets = [0, 256], sizes = [8, 128], strides = [1, 1]} : vector<8x384xf32> to vector<8x128xf32>
    %403 = arith.mulf %376, %402 : vector<8x128xf32>
    %404 = arith.addf %401, %403 : vector<8x128xf32>
    %405 = math.tanh %404 : vector<8x128xf32>
    %406 = vector.extract_strided_slice %362 {offsets = [0, 256], sizes = [8, 128], strides = [1, 1]} : vector<8x384xf32> to vector<8x128xf32>
    %407 = vector.extract_strided_slice %368 {offsets = [0, 256], sizes = [8, 128], strides = [1, 1]} : vector<8x384xf32> to vector<8x128xf32>
    %408 = arith.mulf %384, %407 : vector<8x128xf32>
    %409 = arith.addf %406, %408 : vector<8x128xf32>
    %410 = math.tanh %409 : vector<8x128xf32>
    %411 = arith.subf %355, %405 : vector<8x128xf32>
    %412 = arith.mulf %392, %411 : vector<8x128xf32>
    %413 = arith.addf %405, %412 : vector<8x128xf32>
    %414 = arith.subf %358, %410 : vector<8x128xf32>
    %415 = arith.mulf %400, %414 : vector<8x128xf32>
    %416 = arith.addf %410, %415 : vector<8x128xf32>
    %417 = arith.addf %359, %413 : vector<8x128xf32>
    %418 = arith.addf %360, %416 : vector<8x128xf32>
    %c56_79 = arith.constant 56 : index
    %c0_80 = arith.constant 0 : index
    %419 = vector.load %arg16[%c56_79, %c0_80] : memref<64x768xf32, #tpu.memory_space<vmem>>, vector<8x384xf32>
    %c0_81 = arith.constant 0 : index
    %c384_82 = arith.constant 384 : index
    %420 = vector.load %arg16[%c0_81, %c384_82] : memref<64x768xf32, #tpu.memory_space<vmem>>, vector<8x384xf32>
    %cst_83 = arith.constant dense<0.000000e+00> : vector<8x384xf32>
    %421 = tpu.matmul %413, %8, %cst_83 {dimension_numbers = #tpu.dot_dimension_numbers<[1], [0], [0], [1], [0, 0, 1, 1], [], []>} : vector<8x128xf32>, vector<128x384xf32>, vector<8x384xf32> -> vector<8x384xf32>
    %422 = vector.broadcast %10 : vector<1x384xf32> to vector<8x384xf32>
    %423 = arith.addf %421, %422 : vector<8x384xf32>
    %cst_84 = arith.constant dense<0.000000e+00> : vector<8x384xf32>
    %424 = tpu.matmul %416, %9, %cst_84 {dimension_numbers = #tpu.dot_dimension_numbers<[1], [0], [0], [1], [0, 0, 1, 1], [], []>} : vector<8x128xf32>, vector<128x384xf32>, vector<8x384xf32> -> vector<8x384xf32>
    %425 = vector.broadcast %11 : vector<1x384xf32> to vector<8x384xf32>
    %426 = arith.addf %424, %425 : vector<8x384xf32>
    %427 = vector.extract_strided_slice %419 {offsets = [0, 0], sizes = [8, 128], strides = [1, 1]} : vector<8x384xf32> to vector<8x128xf32>
    %428 = vector.extract_strided_slice %423 {offsets = [0, 0], sizes = [8, 128], strides = [1, 1]} : vector<8x384xf32> to vector<8x128xf32>
    %429 = arith.addf %427, %428 : vector<8x128xf32>
    %430 = arith.negf %429 : vector<8x128xf32>
    %431 = math.exp %430 : vector<8x128xf32>
    %cst_85 = arith.constant 1.000000e+00 : f32
    %432 = vector.broadcast %cst_85 : f32 to vector<8x128xf32>
    %433 = arith.addf %432, %431 : vector<8x128xf32>
    %434 = arith.divf %432, %433 : vector<8x128xf32>
    %435 = vector.extract_strided_slice %420 {offsets = [0, 0], sizes = [8, 128], strides = [1, 1]} : vector<8x384xf32> to vector<8x128xf32>
    %436 = vector.extract_strided_slice %426 {offsets = [0, 0], sizes = [8, 128], strides = [1, 1]} : vector<8x384xf32> to vector<8x128xf32>
    %437 = arith.addf %435, %436 : vector<8x128xf32>
    %438 = arith.negf %437 : vector<8x128xf32>
    %439 = math.exp %438 : vector<8x128xf32>
    %cst_86 = arith.constant 1.000000e+00 : f32
    %440 = vector.broadcast %cst_86 : f32 to vector<8x128xf32>
    %441 = arith.addf %440, %439 : vector<8x128xf32>
    %442 = arith.divf %440, %441 : vector<8x128xf32>
    %443 = vector.extract_strided_slice %419 {offsets = [0, 128], sizes = [8, 128], strides = [1, 1]} : vector<8x384xf32> to vector<8x128xf32>
    %444 = vector.extract_strided_slice %423 {offsets = [0, 128], sizes = [8, 128], strides = [1, 1]} : vector<8x384xf32> to vector<8x128xf32>
    %445 = arith.addf %443, %444 : vector<8x128xf32>
    %446 = arith.negf %445 : vector<8x128xf32>
    %447 = math.exp %446 : vector<8x128xf32>
    %cst_87 = arith.constant 1.000000e+00 : f32
    %448 = vector.broadcast %cst_87 : f32 to vector<8x128xf32>
    %449 = arith.addf %448, %447 : vector<8x128xf32>
    %450 = arith.divf %448, %449 : vector<8x128xf32>
    %451 = vector.extract_strided_slice %420 {offsets = [0, 128], sizes = [8, 128], strides = [1, 1]} : vector<8x384xf32> to vector<8x128xf32>
    %452 = vector.extract_strided_slice %426 {offsets = [0, 128], sizes = [8, 128], strides = [1, 1]} : vector<8x384xf32> to vector<8x128xf32>
    %453 = arith.addf %451, %452 : vector<8x128xf32>
    %454 = arith.negf %453 : vector<8x128xf32>
    %455 = math.exp %454 : vector<8x128xf32>
    %cst_88 = arith.constant 1.000000e+00 : f32
    %456 = vector.broadcast %cst_88 : f32 to vector<8x128xf32>
    %457 = arith.addf %456, %455 : vector<8x128xf32>
    %458 = arith.divf %456, %457 : vector<8x128xf32>
    %459 = vector.extract_strided_slice %419 {offsets = [0, 256], sizes = [8, 128], strides = [1, 1]} : vector<8x384xf32> to vector<8x128xf32>
    %460 = vector.extract_strided_slice %423 {offsets = [0, 256], sizes = [8, 128], strides = [1, 1]} : vector<8x384xf32> to vector<8x128xf32>
    %461 = arith.mulf %434, %460 : vector<8x128xf32>
    %462 = arith.addf %459, %461 : vector<8x128xf32>
    %463 = math.tanh %462 : vector<8x128xf32>
    %464 = vector.extract_strided_slice %420 {offsets = [0, 256], sizes = [8, 128], strides = [1, 1]} : vector<8x384xf32> to vector<8x128xf32>
    %465 = vector.extract_strided_slice %426 {offsets = [0, 256], sizes = [8, 128], strides = [1, 1]} : vector<8x384xf32> to vector<8x128xf32>
    %466 = arith.mulf %442, %465 : vector<8x128xf32>
    %467 = arith.addf %464, %466 : vector<8x128xf32>
    %468 = math.tanh %467 : vector<8x128xf32>
    %469 = arith.subf %413, %463 : vector<8x128xf32>
    %470 = arith.mulf %450, %469 : vector<8x128xf32>
    %471 = arith.addf %463, %470 : vector<8x128xf32>
    %472 = arith.subf %416, %468 : vector<8x128xf32>
    %473 = arith.mulf %458, %472 : vector<8x128xf32>
    %474 = arith.addf %468, %473 : vector<8x128xf32>
    %475 = arith.addf %417, %471 : vector<8x128xf32>
    %476 = arith.addf %418, %474 : vector<8x128xf32>
    %c0_89 = arith.constant 0 : index
    %c0_90 = arith.constant 0 : index
    %477 = vector.load %arg8[%c0_89, %c0_90] : memref<128x192xf32, #tpu.memory_space<vmem>>, vector<128x192xf32>
    %cst_91 = arith.constant dense<0.000000e+00> : vector<8x192xf32>
    %478 = tpu.matmul %475, %477, %cst_91 {dimension_numbers = #tpu.dot_dimension_numbers<[1], [0], [0], [1], [0, 0, 1, 1], [], []>} : vector<8x128xf32>, vector<128x192xf32>, vector<8x192xf32> -> vector<8x192xf32>
    %c0_92 = arith.constant 0 : index
    %c0_93 = arith.constant 0 : index
    %479 = vector.load %arg9[%c0_92, %c0_93] : memref<128x192xf32, #tpu.memory_space<vmem>>, vector<128x192xf32>
    %cst_94 = arith.constant dense<0.000000e+00> : vector<8x192xf32>
    %480 = tpu.matmul %476, %479, %cst_94 {dimension_numbers = #tpu.dot_dimension_numbers<[1], [0], [0], [1], [0, 0, 1, 1], [], []>} : vector<8x128xf32>, vector<128x192xf32>, vector<8x192xf32> -> vector<8x192xf32>
    %481 = arith.addf %478, %480 : vector<8x192xf32>
    %c0_95 = arith.constant 0 : index
    %c0_96 = arith.constant 0 : index
    %482 = vector.load %arg10[%c0_95, %c0_96] : memref<1x192xf32, #tpu.memory_space<vmem>>, vector<1x192xf32>
    %483 = vector.broadcast %482 : vector<1x192xf32> to vector<8x192xf32>
    %484 = arith.addf %481, %483 : vector<8x192xf32>
    %cst_97 = arith.constant 0.000000e+00 : f32
    %485 = vector.broadcast %cst_97 : f32 to vector<8x192xf32>
    %486 = arith.maximumf %484, %485 : vector<8x192xf32>
    %c0_98 = arith.constant 0 : index
    %c0_99 = arith.constant 0 : index
    %487 = vector.load %arg11[%c0_98, %c0_99] : memref<192x128xf32, #tpu.memory_space<vmem>>, vector<192x128xf32>
    %cst_100 = arith.constant dense<0.000000e+00> : vector<8x128xf32>
    %488 = tpu.matmul %486, %487, %cst_100 {dimension_numbers = #tpu.dot_dimension_numbers<[1], [0], [0], [1], [0, 0, 1, 1], [], []>} : vector<8x192xf32>, vector<192x128xf32>, vector<8x128xf32> -> vector<8x128xf32>
    %c0_101 = arith.constant 0 : index
    %c0_102 = arith.constant 0 : index
    %489 = vector.load %arg12[%c0_101, %c0_102] : memref<1x128xf32, #tpu.memory_space<vmem>>, vector<1x128xf32>
    %490 = vector.broadcast %489 : vector<1x128xf32> to vector<8x128xf32>
    %491 = arith.addf %488, %490 : vector<8x128xf32>
    %cst_103 = arith.constant 0.000000e+00 : f32
    %492 = vector.broadcast %cst_103 : f32 to vector<8x128xf32>
    %493 = arith.maximumf %491, %492 : vector<8x128xf32>
    %c0_104 = arith.constant 0 : index
    %c0_105 = arith.constant 0 : index
    %494 = vector.load %arg13[%c0_104, %c0_105] : memref<128x128xf32, #tpu.memory_space<vmem>>, vector<128x128xf32>
    %cst_106 = arith.constant dense<0.000000e+00> : vector<8x128xf32>
    %495 = tpu.matmul %493, %494, %cst_106 {dimension_numbers = #tpu.dot_dimension_numbers<[1], [0], [0], [1], [0, 0, 1, 1], [], []>} : vector<8x128xf32>, vector<128x128xf32>, vector<8x128xf32> -> vector<8x128xf32>
    %c0_107 = arith.constant 0 : index
    %c0_108 = arith.constant 0 : index
    %496 = vector.load %arg14[%c0_107, %c0_108] : memref<1x128xf32, #tpu.memory_space<vmem>>, vector<1x128xf32>
    %497 = vector.broadcast %496 : vector<1x128xf32> to vector<8x128xf32>
    %498 = arith.addf %495, %497 : vector<8x128xf32>
    %c0_109 = arith.constant 0 : index
    %c0_110 = arith.constant 0 : index
    %499 = vector.load %arg15[%c0_109, %c0_110] : memref<8x128xf32, #tpu.memory_space<vmem>>, vector<8x128xf32>
    tpu.vector_store %arg15[%c0_109, %c0_110], %498 {strides = array<i32>} : memref<8x128xf32, #tpu.memory_space<vmem>>, vector<8x128xf32>,
    return
  }
  func.func @transform_0(%arg0: i32) -> (i32, i32, i32) {
    %c0_i32 = arith.constant 0 : i32
    %c0_i32_0 = arith.constant 0 : i32
    %c0_i32_1 = arith.constant 0 : i32
    return %c0_i32, %arg0, %c0_i32_0 : i32, i32, i32
  }
  func.func @transform_1(%arg0: i32) -> (i32, i32) {
    %c0_i32 = arith.constant 0 : i32
    %c0_i32_0 = arith.constant 0 : i32
    %c0_i32_1 = arith.constant 0 : i32
    return %c0_i32, %c0_i32_0 : i32, i32
  }
  func.func @transform_2(%arg0: i32) -> (i32, i32) {
    %c0_i32 = arith.constant 0 : i32
    %c0_i32_0 = arith.constant 0 : i32
    %c0_i32_1 = arith.constant 0 : i32
    return %c0_i32, %c0_i32_0 : i32, i32
  }
  func.func @transform_3(%arg0: i32) -> (i32, i32) {
    %c0_i32 = arith.constant 0 : i32
    %c0_i32_0 = arith.constant 0 : i32
    %c0_i32_1 = arith.constant 0 : i32
    return %c0_i32, %c0_i32_0 : i32, i32
  }
  func.func @transform_4(%arg0: i32) -> (i32, i32) {
    %c0_i32 = arith.constant 0 : i32
    %c0_i32_0 = arith.constant 0 : i32
    %c0_i32_1 = arith.constant 0 : i32
    return %c0_i32, %c0_i32_0 : i32, i32
  }
  func.func @transform_5(%arg0: i32) -> (i32, i32) {
    %c0_i32 = arith.constant 0 : i32
    %c0_i32_0 = arith.constant 0 : i32
    %c0_i32_1 = arith.constant 0 : i32
    return %c0_i32, %c0_i32_0 : i32, i32
  }
  func.func @transform_6(%arg0: i32) -> (i32, i32) {
    %c0_i32 = arith.constant 0 : i32
    %c0_i32_0 = arith.constant 0 : i32
    %c0_i32_1 = arith.constant 0 : i32
    return %c0_i32, %c0_i32_0 : i32, i32
  }
  func.func @transform_7(%arg0: i32) -> (i32, i32) {
    %c0_i32 = arith.constant 0 : i32
    %c0_i32_0 = arith.constant 0 : i32
    %c0_i32_1 = arith.constant 0 : i32
    return %c0_i32, %c0_i32_0 : i32, i32
  }
  func.func @transform_8(%arg0: i32) -> (i32, i32) {
    %c0_i32 = arith.constant 0 : i32
    %c0_i32_0 = arith.constant 0 : i32
    %c0_i32_1 = arith.constant 0 : i32
    return %c0_i32, %c0_i32_0 : i32, i32
  }
  func.func @transform_9(%arg0: i32) -> (i32, i32) {
    %c0_i32 = arith.constant 0 : i32
    %c0_i32_0 = arith.constant 0 : i32
    %c0_i32_1 = arith.constant 0 : i32
    return %c0_i32, %c0_i32_0 : i32, i32
  }
  func.func @transform_10(%arg0: i32) -> (i32, i32) {
    %c0_i32 = arith.constant 0 : i32
    %c0_i32_0 = arith.constant 0 : i32
    %c0_i32_1 = arith.constant 0 : i32
    return %c0_i32, %c0_i32_0 : i32, i32
  }
  func.func @transform_11(%arg0: i32) -> (i32, i32) {
    %c0_i32 = arith.constant 0 : i32
    %c0_i32_0 = arith.constant 0 : i32
    %c0_i32_1 = arith.constant 0 : i32
    return %c0_i32, %c0_i32_0 : i32, i32
  }
  func.func @transform_12(%arg0: i32) -> (i32, i32) {
    %c0_i32 = arith.constant 0 : i32
    %c0_i32_0 = arith.constant 0 : i32
    %c0_i32_1 = arith.constant 0 : i32
    return %c0_i32, %c0_i32_0 : i32, i32
  }
  func.func @transform_13(%arg0: i32) -> (i32, i32) {
    %c0_i32 = arith.constant 0 : i32
    %c0_i32_0 = arith.constant 0 : i32
    %c0_i32_1 = arith.constant 0 : i32
    return %c0_i32, %c0_i32_0 : i32, i32
  }
  func.func @transform_14(%arg0: i32) -> (i32, i32) {
    %c0_i32 = arith.constant 0 : i32
    %c0_i32_0 = arith.constant 0 : i32
    return %arg0, %c0_i32 : i32, i32
  }
}

</mosaic_0001>

<llo_original>
// kernel: bigru_forward.1
$region0: #{bigru_forward.1}
  #allocation0 [shape = 'u32[]', space=smem, size = 0x4, offset = 0x4, fixed_abs, tag = 'smem constant byte address 0x4 - core index']
  #allocation1 [shape = 'u32[72,128]{1,0:T(1,128)}', space=vmem, size = 0x9000, scoped, tag = 'internal scratch']
  #allocation2 [shape = 'f32[64,768]{1,0:T(8,128)}', space=vmem, size = 0x30000, scoped, tag = 'scratch operand']
  %s0 = inlined_call_operand.vmem [shape: f32[8,8,16], index: 0, kind: input, shape index: {}]
  %s1 = inlined_call_operand.hbm [shape: f32[16,768], index: 1, kind: input, shape index: {}]
  %s2 = inlined_call_operand.vmem [shape: f32[1,768], index: 2, kind: input, shape index: {}]
  %s3 = inlined_call_operand.vmem [shape: f32[128,384], index: 3, kind: input, shape index: {}]
  %s4 = inlined_call_operand.hbm [shape: f32[128,384], index: 4, kind: input, shape index: {}]
  %s5 = inlined_call_operand.vmem [shape: f32[1,384], index: 5, kind: input, shape index: {}]
  %s6 = inlined_call_operand.vmem [shape: f32[1,384], index: 6, kind: input, shape index: {}]
  %s7 = inlined_call_operand.vmem [shape: f32[128,192], index: 7, kind: input, shape index: {}]
  %s8 = inlined_call_operand.vmem [shape: f32[128,192], index: 8, kind: input, shape index: {}]
  %s9 = inlined_call_operand.vmem [shape: f32[1,192], index: 9, kind: input, shape index: {}]
  %s10 = inlined_call_operand.vmem [shape: f32[192,128], index: 10, kind: input, shape index: {}]
  %s11 = inlined_call_operand.vmem [shape: f32[1,128], index: 11, kind: input, shape index: {}]
  %s12 = inlined_call_operand.vmem [shape: f32[128,128], index: 12, kind: input, shape index: {}]
  %s13 = inlined_call_operand.vmem [shape: f32[1,128], index: 13, kind: input, shape index: {}]
  %s14 = inlined_call_operand.vmem [shape: f32[8,128], index: 14, kind: output, shape index: {}]
  %s15 = sld [smem:[#allocation0]]
  $region74: #{bigru_forward.1} parent=0
    _
  %s17 = ssub.s32 1, %s15
  %s18 = scalar_select 0, %s17, %s15
  $region1: #{bigru_forward.1} parent=0
    #allocation3 [shape = 'u8[49152]{0}', space=vmem, size = 0xc000, scoped, tag = 'input window, operand 1, single buffered']
    #allocation4 [shape = 's32[1]{0}', space=sflag, size = 0x4, scoped, tag = 'scoped memory for bigru_forward.1']
    #allocation5 [shape = 'u8[196608]{0}', space=vmem, size = 0x30000, scoped, tag = 'input window, operand 4, single buffered']
    #allocation6 [shape = 's32[1]{0}', space=sflag, size = 0x4, scoped, tag = 'scoped memory for bigru_forward.1']
    %19 = vsyncpa [#allocation4], 0
    %20 = vsyncpa [#allocation6], 0
    // Predicated region
    $region2: #{bigru_forward.1} parent=1 // pred_check
      _
    $region3: #{bigru_forward.1} parent=1 // pred_check_branch
      %22 = sbr.rel (0) target = $region5
    $region4: #{bigru_forward.1} parent=1 // pred_region
      _
    $region5: #{bigru_forward.1} parent=1 // pred_fallthru
      _
    // Predicated region
    $region6: #{bigru_forward.1} parent=1 // pred_check
      _
    $region7: #{bigru_forward.1} parent=1 // pred_check_branch
      %24 = sbr.rel (0) target = $region9
    $region8: #{bigru_forward.1} parent=1 // pred_region
      %26 = vsyncadd [#allocation4], 0
      %s27 = sshll.u32 %s1, 4
      %s28 = int_to_ptr.hbm [resolvable:$true] %s27
      %s29 = sshll.u32 [#allocation3], 4
      %s30 = int_to_ptr.vmem [resolvable:$true] %s29
      %35 = dma.hbm_to_vmem [thread:$0]  %s28, 1536, %s30, [#allocation4], 768, 768, 48
    $region9: #{bigru_forward.1} parent=1 // pred_fallthru
      _
    // Predicated region
    $region10: #{bigru_forward.1} parent=1 // pred_check
      _
    $region11: #{bigru_forward.1} parent=1 // pred_check_branch
      %37 = sbr.rel (0) target = $region13
    $region12: #{bigru_forward.1} parent=1 // pred_region
      _
    $region13: #{bigru_forward.1} parent=1 // pred_fallthru
      _
    // Predicated region
    $region14: #{bigru_forward.1} parent=1 // pred_check
      _
    $region15: #{bigru_forward.1} parent=1 // pred_check_branch
      %39 = sbr.rel (0) target = $region17
    $region16: #{bigru_forward.1} parent=1 // pred_region
      _
    $region17: #{bigru_forward.1} parent=1 // pred_fallthru
      _
    // Predicated region
    $region18: #{bigru_forward.1} parent=1 // pred_check
      _
    $region19: #{bigru_forward.1} parent=1 // pred_check_branch
      %41 = sbr.rel (0) target = $region21
    $region20: #{bigru_forward.1} parent=1 // pred_region
      %43 = vsyncadd [#allocation6], 0
      %s44 = sshll.u32 %s4, 4
      %s45 = int_to_ptr.hbm [resolvable:$true] %s44
      %s46 = sshll.u32 [#allocation5], 4
      %s47 = int_to_ptr.vmem [resolvable:$true] %s46
      %52 = dma.hbm_to_vmem [thread:$0]  %s45, 6144, %s47, [#allocation6], 384, 384, 24
    $region21: #{bigru_forward.1} parent=1 // pred_fallthru
      _
    // Predicated region
    $region22: #{bigru_forward.1} parent=1 // pred_check
      _
    $region23: #{bigru_forward.1} parent=1 // pred_check_branch
      %54 = sbr.rel (0) target = $region25
    $region24: #{bigru_forward.1} parent=1 // pred_region
      _
    $region25: #{bigru_forward.1} parent=1 // pred_fallthru
      _
    // Predicated region
    $region26: #{bigru_forward.1} parent=1 // pred_check
      _
    $region27: #{bigru_forward.1} parent=1 // pred_check_branch
      %56 = sbr.rel (0) target = $region29
    $region28: #{bigru_forward.1} parent=1 // pred_region
      _
    $region29: #{bigru_forward.1} parent=1 // pred_fallthru
      _
    // Predicated region
    $region30: #{bigru_forward.1} parent=1 // pred_check
      _
    $region31: #{bigru_forward.1} parent=1 // pred_check_branch
      %58 = sbr.rel (0) target = $region33
    $region32: #{bigru_forward.1} parent=1 // pred_region
      _
    $region33: #{bigru_forward.1} parent=1 // pred_fallthru
      _
    // Predicated region
    $region34: #{bigru_forward.1} parent=1 // pred_check
      _
    $region35: #{bigru_forward.1} parent=1 // pred_check_branch
      %60 = sbr.rel (0) target = $region37
    $region36: #{bigru_forward.1} parent=1 // pred_region
      _
    $region37: #{bigru_forward.1} parent=1 // pred_fallthru
      _
    // Predicated region
    $region38: #{bigru_forward.1} parent=1 // pred_check
      _
    $region39: #{bigru_forward.1} parent=1 // pred_check_branch
      %62 = sbr.rel (0) target = $region41
    $region40: #{bigru_forward.1} parent=1 // pred_region
      _
    $region41: #{bigru_forward.1} parent=1 // pred_fallthru
      _
    // Predicated region
    $region42: #{bigru_forward.1} parent=1 // pred_check
      _
    $region43: #{bigru_forward.1} parent=1 // pred_check_branch
      %64 = sbr.rel (0) target = $region45
    $region44: #{bigru_forward.1} parent=1 // pred_region
      _
    $region45: #{bigru_forward.1} parent=1 // pred_fallthru
      _
    // Predicated region
    $region46: #{bigru_forward.1} parent=1 // pred_check
      _
    $region47: #{bigru_forward.1} parent=1 // pred_check_branch
      %66 = sbr.rel (0) target = $region49
    $region48: #{bigru_forward.1} parent=1 // pred_region
      _
    $region49: #{bigru_forward.1} parent=1 // pred_fallthru
      _
    // Predicated region
    $region50: #{bigru_forward.1} parent=1 // pred_check
      _
    $region51: #{bigru_forward.1} parent=1 // pred_check_branch
      %68 = sbr.rel (0) target = $region53
    $region52: #{bigru_forward.1} parent=1 // pred_region
      _
    $region53: #{bigru_forward.1} parent=1 // pred_fallthru
      _
    // Predicated region
    $region54: #{bigru_forward.1} parent=1 // pred_check
      _
    $region55: #{bigru_forward.1} parent=1 // pred_check_branch
      %70 = sbr.rel (0) target = $region57
    $region56: #{bigru_forward.1} parent=1 // pred_region
      _
    $region57: #{bigru_forward.1} parent=1 // pred_fallthru
      _
    // Predicated region
    $region58: #{bigru_forward.1} parent=1 // pred_check
      _
    $region59: #{bigru_forward.1} parent=1 // pred_check_branch
      %72 = sbr.rel (0) target = $region61
    $region60: #{bigru_forward.1} parent=1 // pred_region
      %74 = dma.done [#allocation4], 1536
    $region61: #{bigru_forward.1} parent=1 // pred_fallthru
      _
    // Predicated region
    $region62: #{bigru_forward.1} parent=1 // pred_check
      _
    $region63: #{bigru_forward.1} parent=1 // pred_check_branch
      %76 = sbr.rel (0) target = $region65
    $region64: #{bigru_forward.1} parent=1 // pred_region
      %78 = dma.done [#allocation6], 6144
    $region65: #{bigru_forward.1} parent=1 // pred_fallthru
      _
    %v79 = vld [vmem:[%s0] sm:$0xff]
    %v80 = vld [vmem:[%s0 + $0x8] sm:$0xff]
    %v81 = vld [vmem:[%s0 + $0x10] sm:$0xff]
    %v82 = vld [vmem:[%s0 + $0x18] sm:$0xff]
    %v83 = vld [vmem:[%s0 + $0x20] sm:$0xff]
    %v84 = vld [vmem:[%s0 + $0x28] sm:$0xff]
    %v85 = vld [vmem:[%s0 + $0x30] sm:$0xff]
    %v86 = vld [vmem:[%s0 + $0x38] sm:$0xff]
    %v87 = vld [vmem:[#allocation3] sm:$0xff]
    %v88 = vld [vmem:[#allocation3 + $0x8] sm:$0xff]
    %v89 = vld [vmem:[#allocation3 + $0x10] sm:$0xff]
    %v90 = vld [vmem:[#allocation3 + $0x18] sm:$0xff]
    %v91 = vld [vmem:[#allocation3 + $0x20] sm:$0xff]
    %v92 = vld [vmem:[#allocation3 + $0x28] sm:$0xff]
    %v93 = vld [vmem:[#allocation3 + $0x30] sm:$0xff]
    %v94 = vld [vmem:[#allocation3 + $0x38] sm:$0xff]
    %v95 = vld [vmem:[#allocation3 + $0x40] sm:$0xff]
    %v96 = vld [vmem:[#allocation3 + $0x48] sm:$0xff]
    %v97 = vld [vmem:[#allocation3 + $0x50] sm:$0xff]
    %v98 = vld [vmem:[#allocation3 + $0x58] sm:$0xff]
    %v99 = vld [vmem:[%s2] sm:$0x3f]
    %v101 = vperm.slane %v99, 0
    %v102 = vperm.slane %v99, 1
    %v103 = vperm.slane %v99, 2
    %v104 = vperm.slane %v99, 3
    %v105 = vperm.slane %v99, 4
    %v106 = vperm.slane %v99, 5
    %vm113 = vcmask 130048
    %v115 = vsel %vm113, %v79, 0
    %v118 = vsel %vm113, %v80, 0
    %v121 = vsel %vm113, %v81, 0
    %v124 = vsel %vm113, %v82, 0
    %v127 = vsel %vm113, %v83, 0
    %v130 = vsel %vm113, %v84, 0
    %v133 = vsel %vm113, %v85, 0
    %v136 = vsel %vm113, %v86, 0
    %138 = vmatpush.msra.mxu0 0.0
    %139 = vmatpush.msra.mxu0 0.0
    %140 = vmatpush.msra.mxu0 0.0
    %141 = vmatpush.msra.mxu0 0.0
    %142 = vmatpush.msra.mxu0 0.0
    %143 = vmatpush.msra.mxu0 0.0
    %144 = vmatpush.msra.mxu0 0.0
    %145 = vmatpush.msra.mxu0 0.0
    %146 = vmatpush.msra.mxu0 0.0
    %147 = vmatpush.msra.mxu0 0.0
    %148 = vmatpush.msra.mxu0 0.0
    %149 = vmatpush.msra.mxu0 0.0
    %150 = vmatpush.msra.mxu0 0.0
    %151 = vmatpush.msra.mxu0 0.0
    %152 = vmatpush.msra.mxu0 %v93
    %153 = vmatpush.msra.mxu0 %v87
    %154 = vmatmul.f32.gmra.mxu0 %v115
    %v155 = vpop.f32.mrf.mxu0
    %v156 = vadd.f32 %v101, %v155
    %157 = vmatmul.f32.gmra.mxu0 %v118
    %v158 = vpop.f32.mrf.mxu0
    %v159 = vadd.f32 %v101, %v158
    %160 = vmatmul.f32.gmra.mxu0 %v121
    %v161 = vpop.f32.mrf.mxu0
    %v162 = vadd.f32 %v101, %v161
    %163 = vmatmul.f32.gmra.mxu0 %v124
    %v164 = vpop.f32.mrf.mxu0
    %v165 = vadd.f32 %v101, %v164
    %166 = vmatmul.f32.gmra.mxu0 %v127
    %v167 = vpop.f32.mrf.mxu0
    %v168 = vadd.f32 %v101, %v167
    %169 = vmatmul.f32.gmra.mxu0 %v130
    %v170 = vpop.f32.mrf.mxu0
    %v171 = vadd.f32 %v101, %v170
    %172 = vmatmul.f32.gmra.mxu0 %v133
    %v173 = vpop.f32.mrf.mxu0
    %v174 = vadd.f32 %v101, %v173
    %175 = vmatmul.f32.gmra.mxu0 %v136
    %v176 = vpop.f32.mrf.mxu0
    %v177 = vadd.f32 %v101, %v176
    %178 = vdwg.mxu0
    %179 = vmatpush.msra.mxu0 0.0
    %180 = vmatpush.msra.mxu0 0.0
    %181 = vmatpush.msra.mxu0 0.0
    %182 = vmatpush.msra.mxu0 0.0
    %183 = vmatpush.msra.mxu0 0.0
    %184 = vmatpush.msra.mxu0 0.0
    %185 = vmatpush.msra.mxu0 0.0
    %186 = vmatpush.msra.mxu0 0.0
    %187 = vmatpush.msra.mxu0 0.0
    %188 = vmatpush.msra.mxu0 0.0
    %189 = vmatpush.msra.mxu0 0.0
    %190 = vmatpush.msra.mxu0 0.0
    %191 = vmatpush.msra.mxu0 0.0
    %192 = vmatpush.msra.mxu0 0.0
    %193 = vmatpush.msra.mxu0 %v94
    %194 = vmatpush.msra.mxu0 %v88
    %195 = vmatmul.f32.gmra.mxu0 %v115
    %v196 = vpop.f32.mrf.mxu0
    %v197 = vadd.f32 %v102, %v196
    %198 = vmatmul.f32.gmra.mxu0 %v118
    %v199 = vpop.f32.mrf.mxu0
    %v200 = vadd.f32 %v102, %v199
    %201 = vmatmul.f32.gmra.mxu0 %v121
    %v202 = vpop.f32.mrf.mxu0
    %v203 = vadd.f32 %v102, %v202
    %204 = vmatmul.f32.gmra.mxu0 %v124
    %v205 = vpop.f32.mrf.mxu0
    %v206 = vadd.f32 %v102, %v205
    %207 = vmatmul.f32.gmra.mxu0 %v127
    %v208 = vpop.f32.mrf.mxu0
    %v209 = vadd.f32 %v102, %v208
    %210 = vmatmul.f32.gmra.mxu0 %v130
    %v211 = vpop.f32.mrf.mxu0
    %v212 = vadd.f32 %v102, %v211
    %213 = vmatmul.f32.gmra.mxu0 %v133
    %v214 = vpop.f32.mrf.mxu0
    %v215 = vadd.f32 %v102, %v214
    %216 = vmatmul.f32.gmra.mxu0 %v136
    %v217 = vpop.f32.mrf.mxu0
    %v218 = vadd.f32 %v102, %v217
    %219 = vdwg.mxu0
    %220 = vmatpush.msra.mxu0 0.0
    %221 = vmatpush.msra.mxu0 0.0
    %222 = vmatpush.msra.mxu0 0.0
    %223 = vmatpush.msra.mxu0 0.0
    %224 = vmatpush.msra.mxu0 0.0
    %225 = vmatpush.msra.mxu0 0.0
    %226 = vmatpush.msra.mxu0 0.0
    %227 = vmatpush.msra.mxu0 0.0
    %228 = vmatpush.msra.mxu0 0.0
    %229 = vmatpush.msra.mxu0 0.0
    %230 = vmatpush.msra.mxu0 0.0
    %231 = vmatpush.msra.mxu0 0.0
    %232 = vmatpush.msra.mxu0 0.0
    %233 = vmatpush.msra.mxu0 0.0
    %234 = vmatpush.msra.mxu0 %v95
    %235 = vmatpush.msra.mxu0 %v89
    %236 = vmatmul.f32.gmra.mxu0 %v115
    %v237 = vpop.f32.mrf.mxu0
    %v238 = vadd.f32 %v103, %v237
    %239 = vmatmul.f32.gmra.mxu0 %v118
    %v240 = vpop.f32.mrf.mxu0
    %v241 = vadd.f32 %v103, %v240
    %242 = vmatmul.f32.gmra.mxu0 %v121
    %v243 = vpop.f32.mrf.mxu0
    %v244 = vadd.f32 %v103, %v243
    %245 = vmatmul.f32.gmra.mxu0 %v124
    %v246 = vpop.f32.mrf.mxu0
    %v247 = vadd.f32 %v103, %v246
    %248 = vmatmul.f32.gmra.mxu0 %v127
    %v249 = vpop.f32.mrf.mxu0
    %v250 = vadd.f32 %v103, %v249
    %251 = vmatmul.f32.gmra.mxu0 %v130
    %v252 = vpop.f32.mrf.mxu0
    %v253 = vadd.f32 %v103, %v252
    %254 = vmatmul.f32.gmra.mxu0 %v133
    %v255 = vpop.f32.mrf.mxu0
    %v256 = vadd.f32 %v103, %v255
    %257 = vmatmul.f32.gmra.mxu0 %v136
    %v258 = vpop.f32.mrf.mxu0
    %v259 = vadd.f32 %v103, %v258
    %260 = vdwg.mxu0
    %261 = vmatpush.msra.mxu0 0.0
    %262 = vmatpush.msra.mxu0 0.0
    %263 = vmatpush.msra.mxu0 0.0
    %264 = vmatpush.msra.mxu0 0.0
    %265 = vmatpush.msra.mxu0 0.0
    %266 = vmatpush.msra.mxu0 0.0
    %267 = vmatpush.msra.mxu0 0.0
    %268 = vmatpush.msra.mxu0 0.0
    %269 = vmatpush.msra.mxu0 0.0
    %270 = vmatpush.msra.mxu0 0.0
    %271 = vmatpush.msra.mxu0 0.0
    %272 = vmatpush.msra.mxu0 0.0
    %273 = vmatpush.msra.mxu0 0.0
    %274 = vmatpush.msra.mxu0 0.0
    %275 = vmatpush.msra.mxu0 %v96
    %276 = vmatpush.msra.mxu0 %v90
    %277 = vmatmul.f32.gmra.mxu0 %v115
    %v278 = vpop.f32.mrf.mxu0
    %v279 = vadd.f32 %v104, %v278
    %280 = vmatmul.f32.gmra.mxu0 %v118
    %v281 = vpop.f32.mrf.mxu0
    %v282 = vadd.f32 %v104, %v281
    %283 = vmatmul.f32.gmra.mxu0 %v121
    %v284 = vpop.f32.mrf.mxu0
    %v285 = vadd.f32 %v104, %v284
    %286 = vmatmul.f32.gmra.mxu0 %v124
    %v287 = vpop.f32.mrf.mxu0
    %v288 = vadd.f32 %v104, %v287
    %289 = vmatmul.f32.gmra.mxu0 %v127
    %v290 = vpop.f32.mrf.mxu0
    %v291 = vadd.f32 %v104, %v290
    %292 = vmatmul.f32.gmra.mxu0 %v130
    %v293 = vpop.f32.mrf.mxu0
    %v294 = vadd.f32 %v104, %v293
    %295 = vmatmul.f32.gmra.mxu0 %v133
    %v296 = vpop.f32.mrf.mxu0
    %v297 = vadd.f32 %v104, %v296
    %298 = vmatmul.f32.gmra.mxu0 %v136
    %v299 = vpop.f32.mrf.mxu0
    %v300 = vadd.f32 %v104, %v299
    %301 = vdwg.mxu0
    %302 = vmatpush.msra.mxu0 0.0
    %303 = vmatpush.msra.mxu0 0.0
    %304 = vmatpush.msra.mxu0 0.0
    %305 = vmatpush.msra.mxu0 0.0
    %306 = vmatpush.msra.mxu0 0.0
    %307 = vmatpush.msra.mxu0 0.0
    %308 = vmatpush.msra.mxu0 0.0
    %309 = vmatpush.msra.mxu0 0.0
    %310 = vmatpush.msra.mxu0 0.0
    %311 = vmatpush.msra.mxu0 0.0
    %312 = vmatpush.msra.mxu0 0.0
    %313 = vmatpush.msra.mxu0 0.0
    %314 = vmatpush.msra.mxu0 0.0
    %315 = vmatpush.msra.mxu0 0.0
    %316 = vmatpush.msra.mxu0 %v97
    %317 = vmatpush.msra.mxu0 %v91
    %318 = vmatmul.f32.gmra.mxu0 %v115
    %v319 = vpop.f32.mrf.mxu0
    %v320 = vadd.f32 %v105, %v319
    %321 = vmatmul.f32.gmra.mxu0 %v118
    %v322 = vpop.f32.mrf.mxu0
    %v323 = vadd.f32 %v105, %v322
    %324 = vmatmul.f32.gmra.mxu0 %v121
    %v325 = vpop.f32.mrf.mxu0
    %v326 = vadd.f32 %v105, %v325
    %327 = vmatmul.f32.gmra.mxu0 %v124
    %v328 = vpop.f32.mrf.mxu0
    %v329 = vadd.f32 %v105, %v328
    %330 = vmatmul.f32.gmra.mxu0 %v127
    %v331 = vpop.f32.mrf.mxu0
    %v332 = vadd.f32 %v105, %v331
    %333 = vmatmul.f32.gmra.mxu0 %v130
    %v334 = vpop.f32.mrf.mxu0
    %v335 = vadd.f32 %v105, %v334
    %336 = vmatmul.f32.gmra.mxu0 %v133
    %v337 = vpop.f32.mrf.mxu0
    %v338 = vadd.f32 %v105, %v337
    %339 = vmatmul.f32.gmra.mxu0 %v136
    %v340 = vpop.f32.mrf.mxu0
    %v341 = vadd.f32 %v105, %v340
    %342 = vdwg.mxu0
    %343 = vmatpush.msra.mxu0 0.0
    %344 = vmatpush.msra.mxu0 0.0
    %345 = vmatpush.msra.mxu0 0.0
    %346 = vmatpush.msra.mxu0 0.0
    %347 = vmatpush.msra.mxu0 0.0
    %348 = vmatpush.msra.mxu0 0.0
    %349 = vmatpush.msra.mxu0 0.0
    %350 = vmatpush.msra.mxu0 0.0
    %351 = vmatpush.msra.mxu0 0.0
    %352 = vmatpush.msra.mxu0 0.0
    %353 = vmatpush.msra.mxu0 0.0
    %354 = vmatpush.msra.mxu0 0.0
    %355 = vmatpush.msra.mxu0 0.0
    %356 = vmatpush.msra.mxu0 0.0
    %357 = vmatpush.msra.mxu0 %v98
    %358 = vmatpush.msra.mxu0 %v92
    %359 = vmatmul.f32.gmra.mxu0 %v115
    %v360 = vpop.f32.mrf.mxu0
    %v361 = vadd.f32 %v106, %v360
    %362 = vmatmul.f32.gmra.mxu0 %v118
    %v363 = vpop.f32.mrf.mxu0
    %v364 = vadd.f32 %v106, %v363
    %365 = vmatmul.f32.gmra.mxu0 %v121
    %v366 = vpop.f32.mrf.mxu0
    %v367 = vadd.f32 %v106, %v366
    %368 = vmatmul.f32.gmra.mxu0 %v124
    %v369 = vpop.f32.mrf.mxu0
    %v370 = vadd.f32 %v106, %v369
    %371 = vmatmul.f32.gmra.mxu0 %v127
    %v372 = vpop.f32.mrf.mxu0
    %v373 = vadd.f32 %v106, %v372
    %374 = vmatmul.f32.gmra.mxu0 %v130
    %v375 = vpop.f32.mrf.mxu0
    %v376 = vadd.f32 %v106, %v375
    %377 = vmatmul.f32.gmra.mxu0 %v133
    %v378 = vpop.f32.mrf.mxu0
    %v379 = vadd.f32 %v106, %v378
    %380 = vmatmul.f32.gmra.mxu0 %v136
    %v381 = vpop.f32.mrf.mxu0
    %v382 = vadd.f32 %v106, %v381
    %383 = vdwg.mxu0
    %384 = vst [vmem:[#allocation2] sm:$0xff] %v156
    %385 = vst [vmem:[#allocation2 + $0x8] sm:$0xff] %v197
    %386 = vst [vmem:[#allocation2 + $0x10] sm:$0xff] %v238
    %387 = vst [vmem:[#allocation2 + $0x18] sm:$0xff] %v279
    %388 = vst [vmem:[#allocation2 + $0x20] sm:$0xff] %v320
    %389 = vst [vmem:[#allocation2 + $0x28] sm:$0xff] %v361
    %390 = vst [vmem:[#allocation2 + $0x30] sm:$0xff] %v159
    %391 = vst [vmem:[#allocation2 + $0x38] sm:$0xff] %v200
    %392 = vst [vmem:[#allocation2 + $0x40] sm:$0xff] %v241
    %393 = vst [vmem:[#allocation2 + $0x48] sm:$0xff] %v282
    %394 = vst [vmem:[#allocation2 + $0x50] sm:$0xff] %v323
    %395 = vst [vmem:[#allocation2 + $0x58] sm:$0xff] %v364
    %396 = vst [vmem:[#allocation2 + $0x60] sm:$0xff] %v162
    %397 = vst [vmem:[#allocation2 + $0x68] sm:$0xff] %v203
    %398 = vst [vmem:[#allocation2 + $0x70] sm:$0xff] %v244
    %399 = vst [vmem:[#allocation2 + $0x78] sm:$0xff] %v285
    %400 = vst [vmem:[#allocation2 + $0x80] sm:$0xff] %v326
    %401 = vst [vmem:[#allocation2 + $0x88] sm:$0xff] %v367
    %402 = vst [vmem:[#allocation2 + $0x90] sm:$0xff] %v165
    %403 = vst [vmem:[#allocation2 + $0x98] sm:$0xff] %v206
    %404 = vst [vmem:[#allocation2 + $0xa0] sm:$0xff] %v247
    %405 = vst [vmem:[#allocation2 + $0xa8] sm:$0xff] %v288
    %406 = vst [vmem:[#allocation2 + $0xb0] sm:$0xff] %v329
    %407 = vst [vmem:[#allocation2 + $0xb8] sm:$0xff] %v370
    %408 = vst [vmem:[#allocation2 + $0xc0] sm:$0xff] %v168
    %409 = vst [vmem:[#allocation2 + $0xc8] sm:$0xff] %v209
    %410 = vst [vmem:[#allocation2 + $0xd0] sm:$0xff] %v250
    %411 = vst [vmem:[#allocation2 + $0xd8] sm:$0xff] %v291
    %412 = vst [vmem:[#allocation2 + $0xe0] sm:$0xff] %v332
    %413 = vst [vmem:[#allocation2 + $0xe8] sm:$0xff] %v373
    %414 = vst [vmem:[#allocation2 + $0xf0] sm:$0xff] %v171
    %415 = vst [vmem:[#allocation2 + $0xf8] sm:$0xff] %v212
    %416 = vst [vmem:[#allocation2 + $0x100] sm:$0xff] %v253
    %417 = vst [vmem:[#allocation2 + $0x108] sm:$0xff] %v294
    %418 = vst [vmem:[#allocation2 + $0x110] sm:$0xff] %v335
    %419 = vst [vmem:[#allocation2 + $0x118] sm:$0xff] %v376
    %420 = vst [vmem:[#allocation2 + $0x120] sm:$0xff] %v174
    %421 = vst [vmem:[#allocation2 + $0x128] sm:$0xff] %v215
    %422 = vst [vmem:[#allocation2 + $0x130] sm:$0xff] %v256
    %423 = vst [vmem:[#allocation2 + $0x138] sm:$0xff] %v297
    %424 = vst [vmem:[#allocation2 + $0x140] sm:$0xff] %v338
    %425 = vst [vmem:[#allocation2 + $0x148] sm:$0xff] %v379
    %426 = vst [vmem:[#allocation2 + $0x150] sm:$0xff] %v177
    %427 = vst [vmem:[#allocation2 + $0x158] sm:$0xff] %v218
    %428 = vst [vmem:[#allocation2 + $0x160] sm:$0xff] %v259
    %429 = vst [vmem:[#allocation2 + $0x168] sm:$0xff] %v300
    %430 = vst [vmem:[#allocation2 + $0x170] sm:$0xff] %v341
    %431 = vst [vmem:[#allocation2 + $0x178] sm:$0xff] %v382
    %v432 = vld [vmem:[%s3] sm:$0xff]
    %v433 = vld [vmem:[%s3 + $0x8] sm:$0xff]
    %v434 = vld [vmem:[%s3 + $0x10] sm:$0xff]
    %v435 = vld [vmem:[%s3 + $0x18] sm:$0xff]
    %v436 = vld [vmem:[%s3 + $0x20] sm:$0xff]
    %v437 = vld [vmem:[%s3 + $0x28] sm:$0xff]
    %v438 = vld [vmem:[%s3 + $0x30] sm:$0xff]
    %v439 = vld [vmem:[%s3 + $0x38] sm:$0xff]
    %v440 = vld [vmem:[%s3 + $0x40] sm:$0xff]
    %v441 = vld [vmem:[%s3 + $0x48] sm:$0xff]
    %v442 = vld [vmem:[%s3 + $0x50] sm:$0xff]
    %v443 = vld [vmem:[%s3 + $0x58] sm:$0xff]
    %v444 = vld [vmem:[%s3 + $0x60] sm:$0xff]
    %v445 = vld [vmem:[%s3 + $0x68] sm:$0xff]
    %v446 = vld [vmem:[%s3 + $0x70] sm:$0xff]
    %v447 = vld [vmem:[%s3 + $0x78] sm:$0xff]
    %v448 = vld [vmem:[%s3 + $0x80] sm:$0xff]
    %v449 = vld [vmem:[%s3 + $0x88] sm:$0xff]
    %v450 = vld [vmem:[%s3 + $0x90] sm:$0xff]
    %v451 = vld [vmem:[%s3 + $0x98] sm:$0xff]
    %v452 = vld [vmem:[%s3 + $0xa0] sm:$0xff]
    %v453 = vld [vmem:[%s3 + $0xa8] sm:$0xff]
    %v454 = vld [vmem:[%s3 + $0xb0] sm:$0xff]
    %v455 = vld [vmem:[%s3 + $0xb8] sm:$0xff]
    %v456 = vld [vmem:[%s3 + $0xc0] sm:$0xff]
    %v457 = vld [vmem:[%s3 + $0xc8] sm:$0xff]
    %v458 = vld [vmem:[%s3 + $0xd0] sm:$0xff]
    %v459 = vld [vmem:[%s3 + $0xd8] sm:$0xff]
    %v460 = vld [vmem:[%s3 + $0xe0] sm:$0xff]
    %v461 = vld [vmem:[%s3 + $0xe8] sm:$0xff]
    %v462 = vld [vmem:[%s3 + $0xf0] sm:$0xff]
    %v463 = vld [vmem:[%s3 + $0xf8] sm:$0xff]
    %v464 = vld [vmem:[%s3 + $0x100] sm:$0xff]
    %v465 = vld [vmem:[%s3 + $0x108] sm:$0xff]
    %v466 = vld [vmem:[%s3 + $0x110] sm:$0xff]
    %v467 = vld [vmem:[%s3 + $0x118] sm:$0xff]
    %v468 = vld [vmem:[%s3 + $0x120] sm:$0xff]
    %v469 = vld [vmem:[%s3 + $0x128] sm:$0xff]
    %v470 = vld [vmem:[%s3 + $0x130] sm:$0xff]
    %v471 = vld [vmem:[%s3 + $0x138] sm:$0xff]
    %v472 = vld [vmem:[%s3 + $0x140] sm:$0xff]
    %v473 = vld [vmem:[%s3 + $0x148] sm:$0xff]
    %v474 = vld [vmem:[%s3 + $0x150] sm:$0xff]
    %v475 = vld [vmem:[%s3 + $0x158] sm:$0xff]
    %v476 = vld [vmem:[%s3 + $0x160] sm:$0xff]
    %v477 = vld [vmem:[%s3 + $0x168] sm:$0xff]
    %v478 = vld [vmem:[%s3 + $0x170] sm:$0xff]
    %v479 = vld [vmem:[%s3 + $0x178] sm:$0xff]
    %v480 = vld [vmem:[#allocation5] sm:$0xff]
    %v481 = vld [vmem:[#allocation5 + $0x8] sm:$0xff]
    %v482 = vld [vmem:[#allocation5 + $0x10] sm:$0xff]
    %v483 = vld [vmem:[#allocation5 + $0x18] sm:$0xff]
    %v484 = vld [vmem:[#allocation5 + $0x20] sm:$0xff]
    %v485 = vld [vmem:[#allocation5 + $0x28] sm:$0xff]
    %v486 = vld [vmem:[#allocation5 + $0x30] sm:$0xff]
    %v487 = vld [vmem:[#allocation5 + $0x38] sm:$0xff]
    %v488 = vld [vmem:[#allocation5 + $0x40] sm:$0xff]
    %v489 = vld [vmem:[#allocation5 + $0x48] sm:$0xff]
    %v490 = vld [vmem:[#allocation5 + $0x50] sm:$0xff]
    %v491 = vld [vmem:[#allocation5 + $0x58] sm:$0xff]
    %v492 = vld [vmem:[#allocation5 + $0x60] sm:$0xff]
    %v493 = vld [vmem:[#allocation5 + $0x68] sm:$0xff]
    %v494 = vld [vmem:[#allocation5 + $0x70] sm:$0xff]
    %v495 = vld [vmem:[#allocation5 + $0x78] sm:$0xff]
    %v496 = vld [vmem:[#allocation5 + $0x80] sm:$0xff]
    %v497 = vld [vmem:[#allocation5 + $0x88] sm:$0xff]
    %v498 = vld [vmem:[#allocation5 + $0x90] sm:$0xff]
    %v499 = vld [vmem:[#allocation5 + $0x98] sm:$0xff]
    %v500 = vld [vmem:[#allocation5 + $0xa0] sm:$0xff]
    %v501 = vld [vmem:[#allocation5 + $0xa8] sm:$0xff]
    %v502 = vld [vmem:[#allocation5 + $0xb0] sm:$0xff]
    %v503 = vld [vmem:[#allocation5 + $0xb8] sm:$0xff]
    %v504 = vld [vmem:[#allocation5 + $0xc0] sm:$0xff]
    %v505 = vld [vmem:[#allocation5 + $0xc8] sm:$0xff]
    %v506 = vld [vmem:[#allocation5 + $0xd0] sm:$0xff]
    %v507 = vld [vmem:[#allocation5 + $0xd8] sm:$0xff]
    %v508 = vld [vmem:[#allocation5 + $0xe0] sm:$0xff]
    %v509 = vld [vmem:[#allocation5 + $0xe8] sm:$0xff]
    %v510 = vld [vmem:[#allocation5 + $0xf0] sm:$0xff]
    %v511 = vld [vmem:[#allocation5 + $0xf8] sm:$0xff]
    %v512 = vld [vmem:[#allocation5 + $0x100] sm:$0xff]
    %v513 = vld [vmem:[#allocation5 + $0x108] sm:$0xff]
    %v514 = vld [vmem:[#allocation5 + $0x110] sm:$0xff]
    %v515 = vld [vmem:[#allocation5 + $0x118] sm:$0xff]
    %v516 = vld [vmem:[#allocation5 + $0x120] sm:$0xff]
    %v517 = vld [vmem:[#allocation5 + $0x128] sm:$0xff]
    %v518 = vld [vmem:[#allocation5 + $0x130] sm:$0xff]
    %v519 = vld [vmem:[#allocation5 + $0x138] sm:$0xff]
    %v520 = vld [vmem:[#allocation5 + $0x140] sm:$0xff]
    %v521 = vld [vmem:[#allocation5 + $0x148] sm:$0xff]
    %v522 = vld [vmem:[#allocation5 + $0x150] sm:$0xff]
    %v523 = vld [vmem:[#allocation5 + $0x158] sm:$0xff]
    %v524 = vld [vmem:[#allocation5 + $0x160] sm:$0xff]
    %v525 = vld [vmem:[#allocation5 + $0x168] sm:$0xff]
    %v526 = vld [vmem:[#allocation5 + $0x170] sm:$0xff]
    %v527 = vld [vmem:[#allocation5 + $0x178] sm:$0xff]
    %v528 = vld [vmem:[%s5] sm:$0x7]
    %v529 = vld [vmem:[%s6] sm:$0x7]
    %v530 = vld [vmem:[#allocation2] sm:$0xff]
    %v531 = vld [vmem:[#allocation2 + $0x8] sm:$0xff]
    %v532 = vld [vmem:[#allocation2 + $0x10] sm:$0xff]
    %v533 = vld [vmem:[#allocation2 + $0x168] sm:$0xff]
    %v534 = vld [vmem:[#allocation2 + $0x170] sm:$0xff]
    %v535 = vld [vmem:[#allocation2 + $0x178] sm:$0xff]
    %v537 = vperm.slane %v528, 0
    %v538 = vperm.slane %v528, 1
    %v539 = vperm.slane %v528, 2
    %543 = vmatpush.msra.mxu0 %v477
    %544 = vmatpush.msra.mxu0 %v474
    %545 = vmatpush.msra.mxu0 %v471
    %546 = vmatpush.msra.mxu0 %v468
    %547 = vmatpush.msra.mxu0 %v465
    %548 = vmatpush.msra.mxu0 %v462
    %549 = vmatpush.msra.mxu0 %v459
    %550 = vmatpush.msra.mxu0 %v456
    %551 = vmatpush.msra.mxu0 %v453
    %552 = vmatpush.msra.mxu0 %v450
    %553 = vmatpush.msra.mxu0 %v447
    %554 = vmatpush.msra.mxu0 %v444
    %555 = vmatpush.msra.mxu0 %v441
    %556 = vmatpush.msra.mxu0 %v438
    %557 = vmatpush.msra.mxu0 %v435
    %558 = vmatpush.msra.mxu0 %v432
    %559 = vmatmul.f32.gmra.mxu0 0.0
    %v560 = vpop.f32.mrf.mxu0
    %v561 = vadd.f32 %v537, %v560
    %562 = vdwg.mxu0
    %563 = vmatpush.msra.mxu0 %v478
    %564 = vmatpush.msra.mxu0 %v475
    %565 = vmatpush.msra.mxu0 %v472
    %566 = vmatpush.msra.mxu0 %v469
    %567 = vmatpush.msra.mxu0 %v466
    %568 = vmatpush.msra.mxu0 %v463
    %569 = vmatpush.msra.mxu0 %v460
    %570 = vmatpush.msra.mxu0 %v457
    %571 = vmatpush.msra.mxu0 %v454
    %572 = vmatpush.msra.mxu0 %v451
    %573 = vmatpush.msra.mxu0 %v448
    %574 = vmatpush.msra.mxu0 %v445
    %575 = vmatpush.msra.mxu0 %v442
    %576 = vmatpush.msra.mxu0 %v439
    %577 = vmatpush.msra.mxu0 %v436
    %578 = vmatpush.msra.mxu0 %v433
    %579 = vmatmul.f32.gmra.mxu0 0.0
    %v580 = vpop.f32.mrf.mxu0
    %v581 = vadd.f32 %v538, %v580
    %582 = vdwg.mxu0
    %583 = vmatpush.msra.mxu0 %v479
    %584 = vmatpush.msra.mxu0 %v476
    %585 = vmatpush.msra.mxu0 %v473
    %586 = vmatpush.msra.mxu0 %v470
    %587 = vmatpush.msra.mxu0 %v467
    %588 = vmatpush.msra.mxu0 %v464
    %589 = vmatpush.msra.mxu0 %v461
    %590 = vmatpush.msra.mxu0 %v458
    %591 = vmatpush.msra.mxu0 %v455
    %592 = vmatpush.msra.mxu0 %v452
    %593 = vmatpush.msra.mxu0 %v449
    %594 = vmatpush.msra.mxu0 %v446
    %595 = vmatpush.msra.mxu0 %v443
    %596 = vmatpush.msra.mxu0 %v440
    %597 = vmatpush.msra.mxu0 %v437
    %598 = vmatpush.msra.mxu0 %v434
    %599 = vmatmul.f32.gmra.mxu0 0.0
    %v600 = vpop.f32.mrf.mxu0
    %v601 = vadd.f32 %v539, %v600
    %602 = vdwg.mxu0
    %v604 = vperm.slane %v529, 0
    %v605 = vperm.slane %v529, 1
    %v606 = vperm.slane %v529, 2
    %610 = vmatpush.msra.mxu0 %v525
    %611 = vmatpush.msra.mxu0 %v522
    %612 = vmatpush.msra.mxu0 %v519
    %613 = vmatpush.msra.mxu0 %v516
    %614 = vmatpush.msra.mxu0 %v513
    %615 = vmatpush.msra.mxu0 %v510
    %616 = vmatpush.msra.mxu0 %v507
    %617 = vmatpush.msra.mxu0 %v504
    %618 = vmatpush.msra.mxu0 %v501
    %619 = vmatpush.msra.mxu0 %v498
    %620 = vmatpush.msra.mxu0 %v495
    %621 = vmatpush.msra.mxu0 %v492
    %622 = vmatpush.msra.mxu0 %v489
    %623 = vmatpush.msra.mxu0 %v486
    %624 = vmatpush.msra.mxu0 %v483
    %625 = vmatpush.msra.mxu0 %v480
    %626 = vmatmul.f32.gmra.mxu0 0.0
    %v627 = vpop.f32.mrf.mxu0
    %v628 = vadd.f32 %v604, %v627
    %629 = vdwg.mxu0
    %630 = vmatpush.msra.mxu0 %v526
    %631 = vmatpush.msra.mxu0 %v523
    %632 = vmatpush.msra.mxu0 %v520
    %633 = vmatpush.msra.mxu0 %v517
    %634 = vmatpush.msra.mxu0 %v514
    %635 = vmatpush.msra.mxu0 %v511
    %636 = vmatpush.msra.mxu0 %v508
    %637 = vmatpush.msra.mxu0 %v505
    %638 = vmatpush.msra.mxu0 %v502
    %639 = vmatpush.msra.mxu0 %v499
    %640 = vmatpush.msra.mxu0 %v496
    %641 = vmatpush.msra.mxu0 %v493
    %642 = vmatpush.msra.mxu0 %v490
    %643 = vmatpush.msra.mxu0 %v487
    %644 = vmatpush.msra.mxu0 %v484
    %645 = vmatpush.msra.mxu0 %v481
    %646 = vmatmul.f32.gmra.mxu0 0.0
    %v647 = vpop.f32.mrf.mxu0
    %v648 = vadd.f32 %v605, %v647
    %649 = vdwg.mxu0
    %650 = vmatpush.msra.mxu0 %v527
    %651 = vmatpush.msra.mxu0 %v524
    %652 = vmatpush.msra.mxu0 %v521
    %653 = vmatpush.msra.mxu0 %v518
    %654 = vmatpush.msra.mxu0 %v515
    %655 = vmatpush.msra.mxu0 %v512
    %656 = vmatpush.msra.mxu0 %v509
    %657 = vmatpush.msra.mxu0 %v506
    %658 = vmatpush.msra.mxu0 %v503
    %659 = vmatpush.msra.mxu0 %v500
    %660 = vmatpush.msra.mxu0 %v497
    %661 = vmatpush.msra.mxu0 %v494
    %662 = vmatpush.msra.mxu0 %v491
    %663 = vmatpush.msra.mxu0 %v488
    %664 = vmatpush.msra.mxu0 %v485
    %665 = vmatpush.msra.mxu0 %v482
    %666 = vmatmul.f32.gmra.mxu0 0.0
    %v667 = vpop.f32.mrf.mxu0
    %v668 = vadd.f32 %v606, %v667
    %669 = vdwg.mxu0
    %v670 = vadd.f32 %v530, %v561
    %v671 = vxor.u32 %v670, 2147483648
    %v672 = vmul.f32 %v671, 1.442695
    %v673 = vpow.pop %v672
    %v674 = vadd.f32 %v673, 1.0
    %v675 = vrcp.pop %v674
    %v676 = vmul.f32 %v674, %v675
    %v677 = vsub.f32 1.0, %v676
    %v678 = vmul.f32 %v675, %v677
    %v679 = vadd.f32 %v675, %v678
    %vm680 = vweird.f32 %v674
    %vm681 = vweird.f32 %v675
    %vm682 = vmor %vm680, %vm681
    %v683 = vsel %vm682, %v675, %v679
    %v684 = vand.u32 2147483647, %v674
    %vm685 = vcmp.eq.f32.partialorder %v684, 8.507059e+37
    %v686 = vand.u32 %v674, 2147483648
    %v687 = vor.u32 1.1754944e-38, %v686
    %v688 = vsel %vm685, %v687, %v683
    %v689 = vmul.f32 1.0, %v688
    %v690 = vadd.f32 %v533, %v628
    %v691 = vxor.u32 %v690, 2147483648
    %v692 = vmul.f32 %v691, 1.442695
    %v693 = vpow.pop %v692
    %v694 = vadd.f32 %v693, 1.0
    %v695 = vrcp.pop %v694
    %v696 = vmul.f32 %v694, %v695
    %v697 = vsub.f32 1.0, %v696
    %v698 = vmul.f32 %v695, %v697
    %v699 = vadd.f32 %v695, %v698
    %vm700 = vweird.f32 %v694
    %vm701 = vweird.f32 %v695
    %vm702 = vmor %vm700, %vm701
    %v703 = vsel %vm702, %v695, %v699
    %v704 = vand.u32 2147483647, %v694
    %vm705 = vcmp.eq.f32.partialorder %v704, 8.507059e+37
    %v706 = vand.u32 %v694, 2147483648
    %v707 = vor.u32 1.1754944e-38, %v706
    %v708 = vsel %vm705, %v707, %v703
    %v709 = vmul.f32 1.0, %v708
    %v710 = vadd.f32 %v531, %v581
    %v711 = vxor.u32 %v710, 2147483648
    %v712 = vmul.f32 %v711, 1.442695
    %v713 = vpow.pop %v712
    %v714 = vadd.f32 %v713, 1.0
    %v715 = vrcp.pop %v714
    %v716 = vmul.f32 %v714, %v715
    %v717 = vsub.f32 1.0, %v716
    %v718 = vmul.f32 %v715, %v717
    %v719 = vadd.f32 %v715, %v718
    %vm720 = vweird.f32 %v714
    %vm721 = vweird.f32 %v715
    %vm722 = vmor %vm720, %vm721
    %v723 = vsel %vm722, %v715, %v719
    %v724 = vand.u32 2147483647, %v714
    %vm725 = vcmp.eq.f32.partialorder %v724, 8.507059e+37
    %v726 = vand.u32 %v714, 2147483648
    %v727 = vor.u32 1.1754944e-38, %v726
    %v728 = vsel %vm725, %v727, %v723
    %v729 = vmul.f32 1.0, %v728
    %v730 = vadd.f32 %v534, %v648
    %v731 = vxor.u32 %v730, 2147483648
    %v732 = vmul.f32 %v731, 1.442695
    %v733 = vpow.pop %v732
    %v734 = vadd.f32 %v733, 1.0
    %v735 = vrcp.pop %v734
    %v736 = vmul.f32 %v734, %v735
    %v737 = vsub.f32 1.0, %v736
    %v738 = vmul.f32 %v735, %v737
    %v739 = vadd.f32 %v735, %v738
    %vm740 = vweird.f32 %v734
    %vm741 = vweird.f32 %v735
    %vm742 = vmor %vm740, %vm741
    %v743 = vsel %vm742, %v735, %v739
    %v744 = vand.u32 2147483647, %v734
    %vm745 = vcmp.eq.f32.partialorder %v744, 8.507059e+37
    %v746 = vand.u32 %v734, 2147483648
    %v747 = vor.u32 1.1754944e-38, %v746
    %v748 = vsel %vm745, %v747, %v743
    %v749 = vmul.f32 1.0, %v748
    %v750 = vmul.f32 %v689, %v601
    %v751 = vadd.f32 %v532, %v750
    %v752 = vtanh.pop %v751
    %v753 = vmul.f32 %v709, %v668
    %v754 = vadd.f32 %v535, %v753
    %v755 = vtanh.pop %v754
    %v756 = vsub.f32 0.0, %v752
    %v757 = vmul.f32 %v729, %v756
    %v758 = vadd.f32 %v752, %v757
    %v759 = vsub.f32 0.0, %v755
    %v760 = vmul.f32 %v749, %v759
    %v761 = vadd.f32 %v755, %v760
    %v762 = vadd.f32 %v758, 0.0
    %v763 = vadd.f32 %v761, 0.0
    %v764 = vld [vmem:[#allocation2 + $0x30] sm:$0xff]
    %v765 = vld [vmem:[#allocation2 + $0x38] sm:$0xff]
    %v766 = vld [vmem:[#allocation2 + $0x40] sm:$0xff]
    %v767 = vld [vmem:[#allocation2 + $0x138] sm:$0xff]
    %v768 = vld [vmem:[#allocation2 + $0x140] sm:$0xff]
    %v769 = vld [vmem:[#allocation2 + $0x148] sm:$0xff]
    %770 = vmatpush.msra.mxu0 %v477
    %771 = vmatpush.msra.mxu0 %v474
    %772 = vmatpush.msra.mxu0 %v471
    %773 = vmatpush.msra.mxu0 %v468
    %774 = vmatpush.msra.mxu0 %v465
    %775 = vmatpush.msra.mxu0 %v462
    %776 = vmatpush.msra.mxu0 %v459
    %777 = vmatpush.msra.mxu0 %v456
    %778 = vmatpush.msra.mxu0 %v453
    %779 = vmatpush.msra.mxu0 %v450
    %780 = vmatpush.msra.mxu0 %v447
    %781 = vmatpush.msra.mxu0 %v444
    %782 = vmatpush.msra.mxu0 %v441
    %783 = vmatpush.msra.mxu0 %v438
    %784 = vmatpush.msra.mxu0 %v435
    %785 = vmatpush.msra.mxu0 %v432
    %786 = vmatmul.f32.gmra.mxu0 %v758
    %v787 = vpop.f32.mrf.mxu0
    %v788 = vadd.f32 %v537, %v787
    %789 = vdwg.mxu0
    %790 = vmatpush.msra.mxu0 %v478
    %791 = vmatpush.msra.mxu0 %v475
    %792 = vmatpush.msra.mxu0 %v472
    %793 = vmatpush.msra.mxu0 %v469
    %794 = vmatpush.msra.mxu0 %v466
    %795 = vmatpush.msra.mxu0 %v463
    %796 = vmatpush.msra.mxu0 %v460
    %797 = vmatpush.msra.mxu0 %v457
    %798 = vmatpush.msra.mxu0 %v454
    %799 = vmatpush.msra.mxu0 %v451
    %800 = vmatpush.msra.mxu0 %v448
    %801 = vmatpush.msra.mxu0 %v445
    %802 = vmatpush.msra.mxu0 %v442
    %803 = vmatpush.msra.mxu0 %v439
    %804 = vmatpush.msra.mxu0 %v436
    %805 = vmatpush.msra.mxu0 %v433
    %806 = vmatmul.f32.gmra.mxu0 %v758
    %v807 = vpop.f32.mrf.mxu0
    %v808 = vadd.f32 %v538, %v807
    %809 = vdwg.mxu0
    %810 = vmatpush.msra.mxu0 %v479
    %811 = vmatpush.msra.mxu0 %v476
    %812 = vmatpush.msra.mxu0 %v473
    %813 = vmatpush.msra.mxu0 %v470
    %814 = vmatpush.msra.mxu0 %v467
    %815 = vmatpush.msra.mxu0 %v464
    %816 = vmatpush.msra.mxu0 %v461
    %817 = vmatpush.msra.mxu0 %v458
    %818 = vmatpush.msra.mxu0 %v455
    %819 = vmatpush.msra.mxu0 %v452
    %820 = vmatpush.msra.mxu0 %v449
    %821 = vmatpush.msra.mxu0 %v446
    %822 = vmatpush.msra.mxu0 %v443
    %823 = vmatpush.msra.mxu0 %v440
    %824 = vmatpush.msra.mxu0 %v437
    %825 = vmatpush.msra.mxu0 %v434
    %826 = vmatmul.f32.gmra.mxu0 %v758
    %v827 = vpop.f32.mrf.mxu0
    %v828 = vadd.f32 %v539, %v827
    %829 = vdwg.mxu0
    %830 = vmatpush.msra.mxu0 %v525
    %831 = vmatpush.msra.mxu0 %v522
    %832 = vmatpush.msra.mxu0 %v519
    %833 = vmatpush.msra.mxu0 %v516
    %834 = vmatpush.msra.mxu0 %v513
    %835 = vmatpush.msra.mxu0 %v510
    %836 = vmatpush.msra.mxu0 %v507
    %837 = vmatpush.msra.mxu0 %v504
    %838 = vmatpush.msra.mxu0 %v501
    %839 = vmatpush.msra.mxu0 %v498
    %840 = vmatpush.msra.mxu0 %v495
    %841 = vmatpush.msra.mxu0 %v492
    %842 = vmatpush.msra.mxu0 %v489
    %843 = vmatpush.msra.mxu0 %v486
    %844 = vmatpush.msra.mxu0 %v483
    %845 = vmatpush.msra.mxu0 %v480
    %846 = vmatmul.f32.gmra.mxu0 %v761
    %v847 = vpop.f32.mrf.mxu0
    %v848 = vadd.f32 %v604, %v847
    %849 = vdwg.mxu0
    %850 = vmatpush.msra.mxu0 %v526
    %851 = vmatpush.msra.mxu0 %v523
    %852 = vmatpush.msra.mxu0 %v520
    %853 = vmatpush.msra.mxu0 %v517
    %854 = vmatpush.msra.mxu0 %v514
    %855 = vmatpush.msra.mxu0 %v511
    %856 = vmatpush.msra.mxu0 %v508
    %857 = vmatpush.msra.mxu0 %v505
    %858 = vmatpush.msra.mxu0 %v502
    %859 = vmatpush.msra.mxu0 %v499
    %860 = vmatpush.msra.mxu0 %v496
    %861 = vmatpush.msra.mxu0 %v493
    %862 = vmatpush.msra.mxu0 %v490
    %863 = vmatpush.msra.mxu0 %v487
    %864 = vmatpush.msra.mxu0 %v484
    %865 = vmatpush.msra.mxu0 %v481
    %866 = vmatmul.f32.gmra.mxu0 %v761
    %v867 = vpop.f32.mrf.mxu0
    %v868 = vadd.f32 %v605, %v867
    %869 = vdwg.mxu0
    %870 = vmatpush.msra.mxu0 %v527
    %871 = vmatpush.msra.mxu0 %v524
    %872 = vmatpush.msra.mxu0 %v521
    %873 = vmatpush.msra.mxu0 %v518
    %874 = vmatpush.msra.mxu0 %v515
    %875 = vmatpush.msra.mxu0 %v512
    %876 = vmatpush.msra.mxu0 %v509
    %877 = vmatpush.msra.mxu0 %v506
    %878 = vmatpush.msra.mxu0 %v503
    %879 = vmatpush.msra.mxu0 %v500
    %880 = vmatpush.msra.mxu0 %v497
    %881 = vmatpush.msra.mxu0 %v494
    %882 = vmatpush.msra.mxu0 %v491
    %883 = vmatpush.msra.mxu0 %v488
    %884 = vmatpush.msra.mxu0 %v485
    %885 = vmatpush.msra.mxu0 %v482
    %886 = vmatmul.f32.gmra.mxu0 %v761
    %v887 = vpop.f32.mrf.mxu0
    %v888 = vadd.f32 %v606, %v887
    %889 = vdwg.mxu0
    %v890 = vadd.f32 %v764, %v788
    %v891 = vxor.u32 %v890, 2147483648
    %v892 = vmul.f32 %v891, 1.442695
    %v893 = vpow.pop %v892
    %v894 = vadd.f32 %v893, 1.0
    %v895 = vrcp.pop %v894
    %v896 = vmul.f32 %v894, %v895
    %v897 = vsub.f32 1.0, %v896
    %v898 = vmul.f32 %v895, %v897
    %v899 = vadd.f32 %v895, %v898
    %vm900 = vweird.f32 %v894
    %vm901 = vweird.f32 %v895
    %vm902 = vmor %vm900, %vm901
    %v903 = vsel %vm902, %v895, %v899
    %v904 = vand.u32 2147483647, %v894
    %vm905 = vcmp.eq.f32.partialorder %v904, 8.507059e+37
    %v906 = vand.u32 %v894, 2147483648
    %v907 = vor.u32 1.1754944e-38, %v906
    %v908 = vsel %vm905, %v907, %v903
    %v909 = vmul.f32 1.0, %v908
    %v910 = vadd.f32 %v767, %v848
    %v911 = vxor.u32 %v910, 2147483648
    %v912 = vmul.f32 %v911, 1.442695
    %v913 = vpow.pop %v912
    %v914 = vadd.f32 %v913, 1.0
    %v915 = vrcp.pop %v914
    %v916 = vmul.f32 %v914, %v915
    %v917 = vsub.f32 1.0, %v916
    %v918 = vmul.f32 %v915, %v917
    %v919 = vadd.f32 %v915, %v918
    %vm920 = vweird.f32 %v914
    %vm921 = vweird.f32 %v915
    %vm922 = vmor %vm920, %vm921
    %v923 = vsel %vm922, %v915, %v919
    %v924 = vand.u32 2147483647, %v914
    %vm925 = vcmp.eq.f32.partialorder %v924, 8.507059e+37
    %v926 = vand.u32 %v914, 2147483648
    %v927 = vor.u32 1.1754944e-38, %v926
    %v928 = vsel %vm925, %v927, %v923
    %v929 = vmul.f32 1.0, %v928
    %v930 = vadd.f32 %v765, %v808
    %v931 = vxor.u32 %v930, 2147483648
    %v932 = vmul.f32 %v931, 1.442695
    %v933 = vpow.pop %v932
    %v934 = vadd.f32 %v933, 1.0
    %v935 = vrcp.pop %v934
    %v936 = vmul.f32 %v934, %v935
    %v937 = vsub.f32 1.0, %v936
    %v938 = vmul.f32 %v935, %v937
    %v939 = vadd.f32 %v935, %v938
    %vm940 = vweird.f32 %v934
    %vm941 = vweird.f32 %v935
    %vm942 = vmor %vm940, %vm941
    %v943 = vsel %vm942, %v935, %v939
    %v944 = vand.u32 2147483647, %v934
    %vm945 = vcmp.eq.f32.partialorder %v944, 8.507059e+37
    %v946 = vand.u32 %v934, 2147483648
    %v947 = vor.u32 1.1754944e-38, %v946
    %v948 = vsel %vm945, %v947, %v943
    %v949 = vmul.f32 1.0, %v948
    %v950 = vadd.f32 %v768, %v868
    %v951 = vxor.u32 %v950, 2147483648
    %v952 = vmul.f32 %v951, 1.442695
    %v953 = vpow.pop %v952
    %v954 = vadd.f32 %v953, 1.0
    %v955 = vrcp.pop %v954
    %v956 = vmul.f32 %v954, %v955
    %v957 = vsub.f32 1.0, %v956
    %v958 = vmul.f32 %v955, %v957
    %v959 = vadd.f32 %v955, %v958
    %vm960 = vweird.f32 %v954
    %vm961 = vweird.f32 %v955
    %vm962 = vmor %vm960, %vm961
    %v963 = vsel %vm962, %v955, %v959
    %v964 = vand.u32 2147483647, %v954
    %vm965 = vcmp.eq.f32.partialorder %v964, 8.507059e+37
    %v966 = vand.u32 %v954, 2147483648
    %v967 = vor.u32 1.1754944e-38, %v966
    %v968 = vsel %vm965, %v967, %v963
    %v969 = vmul.f32 1.0, %v968
    %v970 = vmul.f32 %v909, %v828
    %v971 = vadd.f32 %v766, %v970
    %v972 = vtanh.pop %v971
    %v973 = vmul.f32 %v929, %v888
    %v974 = vadd.f32 %v769, %v973
    %v975 = vtanh.pop %v974
    %v976 = vsub.f32 %v758, %v972
    %v977 = vmul.f32 %v949, %v976
    %v978 = vadd.f32 %v972, %v977
    %v979 = vsub.f32 %v761, %v975
    %v980 = vmul.f32 %v969, %v979
    %v981 = vadd.f32 %v975, %v980
    %v982 = vadd.f32 %v762, %v978
    %v983 = vadd.f32 %v763, %v981
    %v984 = vld [vmem:[#allocation2 + $0x60] sm:$0xff]
    %v985 = vld [vmem:[#allocation2 + $0x68] sm:$0xff]
    %v986 = vld [vmem:[#allocation2 + $0x70] sm:$0xff]
    %v987 = vld [vmem:[#allocation2 + $0x108] sm:$0xff]
    %v988 = vld [vmem:[#allocation2 + $0x110] sm:$0xff]
    %v989 = vld [vmem:[#allocation2 + $0x118] sm:$0xff]
    %990 = vmatpush.msra.mxu0 %v477
    %991 = vmatpush.msra.mxu0 %v474
    %992 = vmatpush.msra.mxu0 %v471
    %993 = vmatpush.msra.mxu0 %v468
    %994 = vmatpush.msra.mxu0 %v465
    %995 = vmatpush.msra.mxu0 %v462
    %996 = vmatpush.msra.mxu0 %v459
    %997 = vmatpush.msra.mxu0 %v456
    %998 = vmatpush.msra.mxu0 %v453
    %999 = vmatpush.msra.mxu0 %v450
    %1000 = vmatpush.msra.mxu0 %v447
    %1001 = vmatpush.msra.mxu0 %v444
    %1002 = vmatpush.msra.mxu0 %v441
    %1003 = vmatpush.msra.mxu0 %v438
    %1004 = vmatpush.msra.mxu0 %v435
    %1005 = vmatpush.msra.mxu0 %v432
    %1006 = vmatmul.f32.gmra.mxu0 %v978
    %v1007 = vpop.f32.mrf.mxu0
    %v1008 = vadd.f32 %v537, %v1007
    %1009 = vdwg.mxu0
    %1010 = vmatpush.msra.mxu0 %v478
    %1011 = vmatpush.msra.mxu0 %v475
    %1012 = vmatpush.msra.mxu0 %v472
    %1013 = vmatpush.msra.mxu0 %v469
    %1014 = vmatpush.msra.mxu0 %v466
    %1015 = vmatpush.msra.mxu0 %v463
    %1016 = vmatpush.msra.mxu0 %v460
    %1017 = vmatpush.msra.mxu0 %v457
    %1018 = vmatpush.msra.mxu0 %v454
    %1019 = vmatpush.msra.mxu0 %v451
    %1020 = vmatpush.msra.mxu0 %v448
    %1021 = vmatpush.msra.mxu0 %v445
    %1022 = vmatpush.msra.mxu0 %v442
    %1023 = vmatpush.msra.mxu0 %v439
    %1024 = vmatpush.msra.mxu0 %v436
    %1025 = vmatpush.msra.mxu0 %v433
    %1026 = vmatmul.f32.gmra.mxu0 %v978
    %v1027 = vpop.f32.mrf.mxu0
    %v1028 = vadd.f32 %v538, %v1027
    %1029 = vdwg.mxu0
    %1030 = vmatpush.msra.mxu0 %v479
    %1031 = vmatpush.msra.mxu0 %v476
    %1032 = vmatpush.msra.mxu0 %v473
    %1033 = vmatpush.msra.mxu0 %v470
    %1034 = vmatpush.msra.mxu0 %v467
    %1035 = vmatpush.msra.mxu0 %v464
    %1036 = vmatpush.msra.mxu0 %v461
    %1037 = vmatpush.msra.mxu0 %v458
    %1038 = vmatpush.msra.mxu0 %v455
    %1039 = vmatpush.msra.mxu0 %v452
    %1040 = vmatpush.msra.mxu0 %v449
    %1041 = vmatpush.msra.mxu0 %v446
    %1042 = vmatpush.msra.mxu0 %v443
    %1043 = vmatpush.msra.mxu0 %v440
    %1044 = vmatpush.msra.mxu0 %v437
    %1045 = vmatpush.msra.mxu0 %v434
    %1046 = vmatmul.f32.gmra.mxu0 %v978
    %v1047 = vpop.f32.mrf.mxu0
    %v1048 = vadd.f32 %v539, %v1047
    %1049 = vdwg.mxu0
    %1050 = vmatpush.msra.mxu0 %v525
    %1051 = vmatpush.msra.mxu0 %v522
    %1052 = vmatpush.msra.mxu0 %v519
    %1053 = vmatpush.msra.mxu0 %v516
    %1054 = vmatpush.msra.mxu0 %v513
    %1055 = vmatpush.msra.mxu0 %v510
    %1056 = vmatpush.msra.mxu0 %v507
    %1057 = vmatpush.msra.mxu0 %v504
    %1058 = vmatpush.msra.mxu0 %v501
    %1059 = vmatpush.msra.mxu0 %v498
    %1060 = vmatpush.msra.mxu0 %v495
    %1061 = vmatpush.msra.mxu0 %v492
    %1062 = vmatpush.msra.mxu0 %v489
    %1063 = vmatpush.msra.mxu0 %v486
    %1064 = vmatpush.msra.mxu0 %v483
    %1065 = vmatpush.msra.mxu0 %v480
    %1066 = vmatmul.f32.gmra.mxu0 %v981
    %v1067 = vpop.f32.mrf.mxu0
    %v1068 = vadd.f32 %v604, %v1067
    %1069 = vdwg.mxu0
    %1070 = vmatpush.msra.mxu0 %v526
    %1071 = vmatpush.msra.mxu0 %v523
    %1072 = vmatpush.msra.mxu0 %v520
    %1073 = vmatpush.msra.mxu0 %v517
    %1074 = vmatpush.msra.mxu0 %v514
    %1075 = vmatpush.msra.mxu0 %v511
    %1076 = vmatpush.msra.mxu0 %v508
    %1077 = vmatpush.msra.mxu0 %v505
    %1078 = vmatpush.msra.mxu0 %v502
    %1079 = vmatpush.msra.mxu0 %v499
    %1080 = vmatpush.msra.mxu0 %v496
    %1081 = vmatpush.msra.mxu0 %v493
    %1082 = vmatpush.msra.mxu0 %v490
    %1083 = vmatpush.msra.mxu0 %v487
    %1084 = vmatpush.msra.mxu0 %v484
    %1085 = vmatpush.msra.mxu0 %v481
    %1086 = vmatmul.f32.gmra.mxu0 %v981
    %v1087 = vpop.f32.mrf.mxu0
    %v1088 = vadd.f32 %v605, %v1087
    %1089 = vdwg.mxu0
    %1090 = vmatpush.msra.mxu0 %v527
    %1091 = vmatpush.msra.mxu0 %v524
    %1092 = vmatpush.msra.mxu0 %v521
    %1093 = vmatpush.msra.mxu0 %v518
    %1094 = vmatpush.msra.mxu0 %v515
    %1095 = vmatpush.msra.mxu0 %v512
    %1096 = vmatpush.msra.mxu0 %v509
    %1097 = vmatpush.msra.mxu0 %v506
    %1098 = vmatpush.msra.mxu0 %v503
    %1099 = vmatpush.msra.mxu0 %v500
    %1100 = vmatpush.msra.mxu0 %v497
    %1101 = vmatpush.msra.mxu0 %v494
    %1102 = vmatpush.msra.mxu0 %v491
    %1103 = vmatpush.msra.mxu0 %v488
    %1104 = vmatpush.msra.mxu0 %v485
    %1105 = vmatpush.msra.mxu0 %v482
    %1106 = vmatmul.f32.gmra.mxu0 %v981
    %v1107 = vpop.f32.mrf.mxu0
    %v1108 = vadd.f32 %v606, %v1107
    %1109 = vdwg.mxu0
    %v1110 = vadd.f32 %v984, %v1008
    %v1111 = vxor.u32 %v1110, 2147483648
    %v1112 = vmul.f32 %v1111, 1.442695
    %v1113 = vpow.pop %v1112
    %v1114 = vadd.f32 %v1113, 1.0
    %v1115 = vrcp.pop %v1114
    %v1116 = vmul.f32 %v1114, %v1115
    %v1117 = vsub.f32 1.0, %v1116
    %v1118 = vmul.f32 %v1115, %v1117
    %v1119 = vadd.f32 %v1115, %v1118
    %vm1120 = vweird.f32 %v1114
    %vm1121 = vweird.f32 %v1115
    %vm1122 = vmor %vm1120, %vm1121
    %v1123 = vsel %vm1122, %v1115, %v1119
    %v1124 = vand.u32 2147483647, %v1114
    %vm1125 = vcmp.eq.f32.partialorder %v1124, 8.507059e+37
    %v1126 = vand.u32 %v1114, 2147483648
    %v1127 = vor.u32 1.1754944e-38, %v1126
    %v1128 = vsel %vm1125, %v1127, %v1123
    %v1129 = vmul.f32 1.0, %v1128
    %v1130 = vadd.f32 %v987, %v1068
    %v1131 = vxor.u32 %v1130, 2147483648
    %v1132 = vmul.f32 %v1131, 1.442695
    %v1133 = vpow.pop %v1132
    %v1134 = vadd.f32 %v1133, 1.0
    %v1135 = vrcp.pop %v1134
    %v1136 = vmul.f32 %v1134, %v1135
    %v1137 = vsub.f32 1.0, %v1136
    %v1138 = vmul.f32 %v1135, %v1137
    %v1139 = vadd.f32 %v1135, %v1138
    %vm1140 = vweird.f32 %v1134
    %vm1141 = vweird.f32 %v1135
    %vm1142 = vmor %vm1140, %vm1141
    %v1143 = vsel %vm1142, %v1135, %v1139
    %v1144 = vand.u32 2147483647, %v1134
    %vm1145 = vcmp.eq.f32.partialorder %v1144, 8.507059e+37
    %v1146 = vand.u32 %v1134, 2147483648
    %v1147 = vor.u32 1.1754944e-38, %v1146
    %v1148 = vsel %vm1145, %v1147, %v1143
    %v1149 = vmul.f32 1.0, %v1148
    %v1150 = vadd.f32 %v985, %v1028
    %v1151 = vxor.u32 %v1150, 2147483648
    %v1152 = vmul.f32 %v1151, 1.442695
    %v1153 = vpow.pop %v1152
    %v1154 = vadd.f32 %v1153, 1.0
    %v1155 = vrcp.pop %v1154
    %v1156 = vmul.f32 %v1154, %v1155
    %v1157 = vsub.f32 1.0, %v1156
    %v1158 = vmul.f32 %v1155, %v1157
    %v1159 = vadd.f32 %v1155, %v1158
    %vm1160 = vweird.f32 %v1154
    %vm1161 = vweird.f32 %v1155
    %vm1162 = vmor %vm1160, %vm1161
    %v1163 = vsel %vm1162, %v1155, %v1159
    %v1164 = vand.u32 2147483647, %v1154
    %vm1165 = vcmp.eq.f32.partialorder %v1164, 8.507059e+37
    %v1166 = vand.u32 %v1154, 2147483648
    %v1167 = vor.u32 1.1754944e-38, %v1166
    %v1168 = vsel %vm1165, %v1167, %v1163
    %v1169 = vmul.f32 1.0, %v1168
    %v1170 = vadd.f32 %v988, %v1088
    %v1171 = vxor.u32 %v1170, 2147483648
    %v1172 = vmul.f32 %v1171, 1.442695
    %v1173 = vpow.pop %v1172
    %v1174 = vadd.f32 %v1173, 1.0
    %v1175 = vrcp.pop %v1174
    %v1176 = vmul.f32 %v1174, %v1175
    %v1177 = vsub.f32 1.0, %v1176
    %v1178 = vmul.f32 %v1175, %v1177
    %v1179 = vadd.f32 %v1175, %v1178
    %vm1180 = vweird.f32 %v1174
    %vm1181 = vweird.f32 %v1175
    %vm1182 = vmor %vm1180, %vm1181
    %v1183 = vsel %vm1182, %v1175, %v1179
    %v1184 = vand.u32 2147483647, %v1174
    %vm1185 = vcmp.eq.f32.partialorder %v1184, 8.507059e+37
    %v1186 = vand.u32 %v1174, 2147483648
    %v1187 = vor.u32 1.1754944e-38, %v1186
    %v1188 = vsel %vm1185, %v1187, %v1183
    %v1189 = vmul.f32 1.0, %v1188
    %v1190 = vmul.f32 %v1129, %v1048
    %v1191 = vadd.f32 %v986, %v1190
    %v1192 = vtanh.pop %v1191
    %v1193 = vmul.f32 %v1149, %v1108
    %v1194 = vadd.f32 %v989, %v1193
    %v1195 = vtanh.pop %v1194
    %v1196 = vsub.f32 %v978, %v1192
    %v1197 = vmul.f32 %v1169, %v1196
    %v1198 = vadd.f32 %v1192, %v1197
    %v1199 = vsub.f32 %v981, %v1195
    %v1200 = vmul.f32 %v1189, %v1199
    %v1201 = vadd.f32 %v1195, %v1200
    %v1202 = vadd.f32 %v982, %v1198
    %v1203 = vadd.f32 %v983, %v1201
    %v1204 = vld [vmem:[#allocation2 + $0x90] sm:$0xff]
    %v1205 = vld [vmem:[#allocation2 + $0x98] sm:$0xff]
    %v1206 = vld [vmem:[#allocation2 + $0xa0] sm:$0xff]
    %v1207 = vld [vmem:[#allocation2 + $0xd8] sm:$0xff]
    %v1208 = vld [vmem:[#allocation2 + $0xe0] sm:$0xff]
    %v1209 = vld [vmem:[#allocation2 + $0xe8] sm:$0xff]
    %1210 = vmatpush.msra.mxu0 %v477
    %1211 = vmatpush.msra.mxu0 %v474
    %1212 = vmatpush.msra.mxu0 %v471
    %1213 = vmatpush.msra.mxu0 %v468
    %1214 = vmatpush.msra.mxu0 %v465
    %1215 = vmatpush.msra.mxu0 %v462
    %1216 = vmatpush.msra.mxu0 %v459
    %1217 = vmatpush.msra.mxu0 %v456
    %1218 = vmatpush.msra.mxu0 %v453
    %1219 = vmatpush.msra.mxu0 %v450
    %1220 = vmatpush.msra.mxu0 %v447
    %1221 = vmatpush.msra.mxu0 %v444
    %1222 = vmatpush.msra.mxu0 %v441
    %1223 = vmatpush.msra.mxu0 %v438
    %1224 = vmatpush.msra.mxu0 %v435
    %1225 = vmatpush.msra.mxu0 %v432
    %1226 = vmatmul.f32.gmra.mxu0 %v1198
    %v1227 = vpop.f32.mrf.mxu0
    %v1228 = vadd.f32 %v537, %v1227
    %1229 = vdwg.mxu0
    %1230 = vmatpush.msra.mxu0 %v478
    %1231 = vmatpush.msra.mxu0 %v475
    %1232 = vmatpush.msra.mxu0 %v472
    %1233 = vmatpush.msra.mxu0 %v469
    %1234 = vmatpush.msra.mxu0 %v466
    %1235 = vmatpush.msra.mxu0 %v463
    %1236 = vmatpush.msra.mxu0 %v460
    %1237 = vmatpush.msra.mxu0 %v457
    %1238 = vmatpush.msra.mxu0 %v454
    %1239 = vmatpush.msra.mxu0 %v451
    %1240 = vmatpush.msra.mxu0 %v448
    %1241 = vmatpush.msra.mxu0 %v445
    %1242 = vmatpush.msra.mxu0 %v442
    %1243 = vmatpush.msra.mxu0 %v439
    %1244 = vmatpush.msra.mxu0 %v436
    %1245 = vmatpush.msra.mxu0 %v433
    %1246 = vmatmul.f32.gmra.mxu0 %v1198
    %v1247 = vpop.f32.mrf.mxu0
    %v1248 = vadd.f32 %v538, %v1247
    %1249 = vdwg.mxu0
    %1250 = vmatpush.msra.mxu0 %v479
    %1251 = vmatpush.msra.mxu0 %v476
    %1252 = vmatpush.msra.mxu0 %v473
    %1253 = vmatpush.msra.mxu0 %v470
    %1254 = vmatpush.msra.mxu0 %v467
    %1255 = vmatpush.msra.mxu0 %v464
    %1256 = vmatpush.msra.mxu0 %v461
    %1257 = vmatpush.msra.mxu0 %v458
    %1258 = vmatpush.msra.mxu0 %v455
    %1259 = vmatpush.msra.mxu0 %v452
    %1260 = vmatpush.msra.mxu0 %v449
    %1261 = vmatpush.msra.mxu0 %v446
    %1262 = vmatpush.msra.mxu0 %v443
    %1263 = vmatpush.msra.mxu0 %v440
    %1264 = vmatpush.msra.mxu0 %v437
    %1265 = vmatpush.msra.mxu0 %v434
    %1266 = vmatmul.f32.gmra.mxu0 %v1198
    %v1267 = vpop.f32.mrf.mxu0
    %v1268 = vadd.f32 %v539, %v1267
    %1269 = vdwg.mxu0
    %1270 = vmatpush.msra.mxu0 %v525
    %1271 = vmatpush.msra.mxu0 %v522
    %1272 = vmatpush.msra.mxu0 %v519
    %1273 = vmatpush.msra.mxu0 %v516
    %1274 = vmatpush.msra.mxu0 %v513
    %1275 = vmatpush.msra.mxu0 %v510
    %1276 = vmatpush.msra.mxu0 %v507
    %1277 = vmatpush.msra.mxu0 %v504
    %1278 = vmatpush.msra.mxu0 %v501
    %1279 = vmatpush.msra.mxu0 %v498
    %1280 = vmatpush.msra.mxu0 %v495
    %1281 = vmatpush.msra.mxu0 %v492
    %1282 = vmatpush.msra.mxu0 %v489
    %1283 = vmatpush.msra.mxu0 %v486
    %1284 = vmatpush.msra.mxu0 %v483
    %1285 = vmatpush.msra.mxu0 %v480
    %1286 = vmatmul.f32.gmra.mxu0 %v1201
    %v1287 = vpop.f32.mrf.mxu0
    %v1288 = vadd.f32 %v604, %v1287
    %1289 = vdwg.mxu0
    %1290 = vmatpush.msra.mxu0 %v526
    %1291 = vmatpush.msra.mxu0 %v523
    %1292 = vmatpush.msra.mxu0 %v520
    %1293 = vmatpush.msra.mxu0 %v517
    %1294 = vmatpush.msra.mxu0 %v514
    %1295 = vmatpush.msra.mxu0 %v511
    %1296 = vmatpush.msra.mxu0 %v508
    %1297 = vmatpush.msra.mxu0 %v505
    %1298 = vmatpush.msra.mxu0 %v502
    %1299 = vmatpush.msra.mxu0 %v499
    %1300 = vmatpush.msra.mxu0 %v496
    %1301 = vmatpush.msra.mxu0 %v493
    %1302 = vmatpush.msra.mxu0 %v490
    %1303 = vmatpush.msra.mxu0 %v487
    %1304 = vmatpush.msra.mxu0 %v484
    %1305 = vmatpush.msra.mxu0 %v481
    %1306 = vmatmul.f32.gmra.mxu0 %v1201
    %v1307 = vpop.f32.mrf.mxu0
    %v1308 = vadd.f32 %v605, %v1307
    %1309 = vdwg.mxu0
    %1310 = vmatpush.msra.mxu0 %v527
    %1311 = vmatpush.msra.mxu0 %v524
    %1312 = vmatpush.msra.mxu0 %v521
    %1313 = vmatpush.msra.mxu0 %v518
    %1314 = vmatpush.msra.mxu0 %v515
    %1315 = vmatpush.msra.mxu0 %v512
    %1316 = vmatpush.msra.mxu0 %v509
    %1317 = vmatpush.msra.mxu0 %v506
    %1318 = vmatpush.msra.mxu0 %v503
    %1319 = vmatpush.msra.mxu0 %v500
    %1320 = vmatpush.msra.mxu0 %v497
    %1321 = vmatpush.msra.mxu0 %v494
    %1322 = vmatpush.msra.mxu0 %v491
    %1323 = vmatpush.msra.mxu0 %v488
    %1324 = vmatpush.msra.mxu0 %v485
    %1325 = vmatpush.msra.mxu0 %v482
    %1326 = vmatmul.f32.gmra.mxu0 %v1201
    %v1327 = vpop.f32.mrf.mxu0
    %v1328 = vadd.f32 %v606, %v1327
    %1329 = vdwg.mxu0
    %v1330 = vadd.f32 %v1204, %v1228
    %v1331 = vxor.u32 %v1330, 2147483648
    %v1332 = vmul.f32 %v1331, 1.442695
    %v1333 = vpow.pop %v1332
    %v1334 = vadd.f32 %v1333, 1.0
    %v1335 = vrcp.pop %v1334
    %v1336 = vmul.f32 %v1334, %v1335
    %v1337 = vsub.f32 1.0, %v1336
    %v1338 = vmul.f32 %v1335, %v1337
    %v1339 = vadd.f32 %v1335, %v1338
    %vm1340 = vweird.f32 %v1334
    %vm1341 = vweird.f32 %v1335
    %vm1342 = vmor %vm1340, %vm1341
    %v1343 = vsel %vm1342, %v1335, %v1339
    %v1344 = vand.u32 2147483647, %v1334
    %vm1345 = vcmp.eq.f32.partialorder %v1344, 8.507059e+37
    %v1346 = vand.u32 %v1334, 2147483648
    %v1347 = vor.u32 1.1754944e-38, %v1346
    %v1348 = vsel %vm1345, %v1347, %v1343
    %v1349 = vmul.f32 1.0, %v1348
    %v1350 = vadd.f32 %v1207, %v1288
    %v1351 = vxor.u32 %v1350, 2147483648
    %v1352 = vmul.f32 %v1351, 1.442695
    %v1353 = vpow.pop %v1352
    %v1354 = vadd.f32 %v1353, 1.0
    %v1355 = vrcp.pop %v1354
    %v1356 = vmul.f32 %v1354, %v1355
    %v1357 = vsub.f32 1.0, %v1356
    %v1358 = vmul.f32 %v1355, %v1357
    %v1359 = vadd.f32 %v1355, %v1358
    %vm1360 = vweird.f32 %v1354
    %vm1361 = vweird.f32 %v1355
    %vm1362 = vmor %vm1360, %vm1361
    %v1363 = vsel %vm1362, %v1355, %v1359
    %v1364 = vand.u32 2147483647, %v1354
    %vm1365 = vcmp.eq.f32.partialorder %v1364, 8.507059e+37
    %v1366 = vand.u32 %v1354, 2147483648
    %v1367 = vor.u32 1.1754944e-38, %v1366
    %v1368 = vsel %vm1365, %v1367, %v1363
    %v1369 = vmul.f32 1.0, %v1368
    %v1370 = vadd.f32 %v1205, %v1248
    %v1371 = vxor.u32 %v1370, 2147483648
    %v1372 = vmul.f32 %v1371, 1.442695
    %v1373 = vpow.pop %v1372
    %v1374 = vadd.f32 %v1373, 1.0
    %v1375 = vrcp.pop %v1374
    %v1376 = vmul.f32 %v1374, %v1375
    %v1377 = vsub.f32 1.0, %v1376
    %v1378 = vmul.f32 %v1375, %v1377
    %v1379 = vadd.f32 %v1375, %v1378
    %vm1380 = vweird.f32 %v1374
    %vm1381 = vweird.f32 %v1375
    %vm1382 = vmor %vm1380, %vm1381
    %v1383 = vsel %vm1382, %v1375, %v1379
    %v1384 = vand.u32 2147483647, %v1374
    %vm1385 = vcmp.eq.f32.partialorder %v1384, 8.507059e+37
    %v1386 = vand.u32 %v1374, 2147483648
    %v1387 = vor.u32 1.1754944e-38, %v1386
    %v1388 = vsel %vm1385, %v1387, %v1383
    %v1389 = vmul.f32 1.0, %v1388
    %v1390 = vadd.f32 %v1208, %v1308
    %v1391 = vxor.u32 %v1390, 2147483648
    %v1392 = vmul.f32 %v1391, 1.442695
    %v1393 = vpow.pop %v1392
    %v1394 = vadd.f32 %v1393, 1.0
    %v1395 = vrcp.pop %v1394
    %v1396 = vmul.f32 %v1394, %v1395
    %v1397 = vsub.f32 1.0, %v1396
    %v1398 = vmul.f32 %v1395, %v1397
    %v1399 = vadd.f32 %v1395, %v1398
    %vm1400 = vweird.f32 %v1394
    %vm1401 = vweird.f32 %v1395
    %vm1402 = vmor %vm1400, %vm1401
    %v1403 = vsel %vm1402, %v1395, %v1399
    %v1404 = vand.u32 2147483647, %v1394
    %vm1405 = vcmp.eq.f32.partialorder %v1404, 8.507059e+37
    %v1406 = vand.u32 %v1394, 2147483648
    %v1407 = vor.u32 1.1754944e-38, %v1406
    %v1408 = vsel %vm1405, %v1407, %v1403
    %v1409 = vmul.f32 1.0, %v1408
    %v1410 = vmul.f32 %v1349, %v1268
    %v1411 = vadd.f32 %v1206, %v1410
    %v1412 = vtanh.pop %v1411
    %v1413 = vmul.f32 %v1369, %v1328
    %v1414 = vadd.f32 %v1209, %v1413
    %v1415 = vtanh.pop %v1414
    %v1416 = vsub.f32 %v1198, %v1412
    %v1417 = vmul.f32 %v1389, %v1416
    %v1418 = vadd.f32 %v1412, %v1417
    %v1419 = vsub.f32 %v1201, %v1415
    %v1420 = vmul.f32 %v1409, %v1419
    %v1421 = vadd.f32 %v1415, %v1420
    %v1422 = vadd.f32 %v1202, %v1418
    %v1423 = vadd.f32 %v1203, %v1421
    %v1424 = vld [vmem:[#allocation2 + $0xc0] sm:$0xff]
    %v1425 = vld [vmem:[#allocation2 + $0xc8] sm:$0xff]
    %v1426 = vld [vmem:[#allocation2 + $0xd0] sm:$0xff]
    %v1427 = vld [vmem:[#allocation2 + $0xa8] sm:$0xff]
    %v1428 = vld [vmem:[#allocation2 + $0xb0] sm:$0xff]
    %v1429 = vld [vmem:[#allocation2 + $0xb8] sm:$0xff]
    %1430 = vmatpush.msra.mxu0 %v477
    %1431 = vmatpush.msra.mxu0 %v474
    %1432 = vmatpush.msra.mxu0 %v471
    %1433 = vmatpush.msra.mxu0 %v468
    %1434 = vmatpush.msra.mxu0 %v465
    %1435 = vmatpush.msra.mxu0 %v462
    %1436 = vmatpush.msra.mxu0 %v459
    %1437 = vmatpush.msra.mxu0 %v456
    %1438 = vmatpush.msra.mxu0 %v453
    %1439 = vmatpush.msra.mxu0 %v450
    %1440 = vmatpush.msra.mxu0 %v447
    %1441 = vmatpush.msra.mxu0 %v444
    %1442 = vmatpush.msra.mxu0 %v441
    %1443 = vmatpush.msra.mxu0 %v438
    %1444 = vmatpush.msra.mxu0 %v435
    %1445 = vmatpush.msra.mxu0 %v432
    %1446 = vmatmul.f32.gmra.mxu0 %v1418
    %v1447 = vpop.f32.mrf.mxu0
    %v1448 = vadd.f32 %v537, %v1447
    %1449 = vdwg.mxu0
    %1450 = vmatpush.msra.mxu0 %v478
    %1451 = vmatpush.msra.mxu0 %v475
    %1452 = vmatpush.msra.mxu0 %v472
    %1453 = vmatpush.msra.mxu0 %v469
    %1454 = vmatpush.msra.mxu0 %v466
    %1455 = vmatpush.msra.mxu0 %v463
    %1456 = vmatpush.msra.mxu0 %v460
    %1457 = vmatpush.msra.mxu0 %v457
    %1458 = vmatpush.msra.mxu0 %v454
    %1459 = vmatpush.msra.mxu0 %v451
    %1460 = vmatpush.msra.mxu0 %v448
    %1461 = vmatpush.msra.mxu0 %v445
    %1462 = vmatpush.msra.mxu0 %v442
    %1463 = vmatpush.msra.mxu0 %v439
    %1464 = vmatpush.msra.mxu0 %v436
    %1465 = vmatpush.msra.mxu0 %v433
    %1466 = vmatmul.f32.gmra.mxu0 %v1418
    %v1467 = vpop.f32.mrf.mxu0
    %v1468 = vadd.f32 %v538, %v1467
    %1469 = vdwg.mxu0
    %1470 = vmatpush.msra.mxu0 %v479
    %1471 = vmatpush.msra.mxu0 %v476
    %1472 = vmatpush.msra.mxu0 %v473
    %1473 = vmatpush.msra.mxu0 %v470
    %1474 = vmatpush.msra.mxu0 %v467
    %1475 = vmatpush.msra.mxu0 %v464
    %1476 = vmatpush.msra.mxu0 %v461
    %1477 = vmatpush.msra.mxu0 %v458
    %1478 = vmatpush.msra.mxu0 %v455
    %1479 = vmatpush.msra.mxu0 %v452
    %1480 = vmatpush.msra.mxu0 %v449
    %1481 = vmatpush.msra.mxu0 %v446
    %1482 = vmatpush.msra.mxu0 %v443
    %1483 = vmatpush.msra.mxu0 %v440
    %1484 = vmatpush.msra.mxu0 %v437
    %1485 = vmatpush.msra.mxu0 %v434
    %1486 = vmatmul.f32.gmra.mxu0 %v1418
    %v1487 = vpop.f32.mrf.mxu0
    %v1488 = vadd.f32 %v539, %v1487
    %1489 = vdwg.mxu0
    %1490 = vmatpush.msra.mxu0 %v525
    %1491 = vmatpush.msra.mxu0 %v522
    %1492 = vmatpush.msra.mxu0 %v519
    %1493 = vmatpush.msra.mxu0 %v516
    %1494 = vmatpush.msra.mxu0 %v513
    %1495 = vmatpush.msra.mxu0 %v510
    %1496 = vmatpush.msra.mxu0 %v507
    %1497 = vmatpush.msra.mxu0 %v504
    %1498 = vmatpush.msra.mxu0 %v501
    %1499 = vmatpush.msra.mxu0 %v498
    %1500 = vmatpush.msra.mxu0 %v495
    %1501 = vmatpush.msra.mxu0 %v492
    %1502 = vmatpush.msra.mxu0 %v489
    %1503 = vmatpush.msra.mxu0 %v486
    %1504 = vmatpush.msra.mxu0 %v483
    %1505 = vmatpush.msra.mxu0 %v480
    %1506 = vmatmul.f32.gmra.mxu0 %v1421
    %v1507 = vpop.f32.mrf.mxu0
    %v1508 = vadd.f32 %v604, %v1507
    %1509 = vdwg.mxu0
    %1510 = vmatpush.msra.mxu0 %v526
    %1511 = vmatpush.msra.mxu0 %v523
    %1512 = vmatpush.msra.mxu0 %v520
    %1513 = vmatpush.msra.mxu0 %v517
    %1514 = vmatpush.msra.mxu0 %v514
    %1515 = vmatpush.msra.mxu0 %v511
    %1516 = vmatpush.msra.mxu0 %v508
    %1517 = vmatpush.msra.mxu0 %v505
    %1518 = vmatpush.msra.mxu0 %v502
    %1519 = vmatpush.msra.mxu0 %v499
    %1520 = vmatpush.msra.mxu0 %v496
    %1521 = vmatpush.msra.mxu0 %v493
    %1522 = vmatpush.msra.mxu0 %v490
    %1523 = vmatpush.msra.mxu0 %v487
    %1524 = vmatpush.msra.mxu0 %v484
    %1525 = vmatpush.msra.mxu0 %v481
    %1526 = vmatmul.f32.gmra.mxu0 %v1421
    %v1527 = vpop.f32.mrf.mxu0
    %v1528 = vadd.f32 %v605, %v1527
    %1529 = vdwg.mxu0
    %1530 = vmatpush.msra.mxu0 %v527
    %1531 = vmatpush.msra.mxu0 %v524
    %1532 = vmatpush.msra.mxu0 %v521
    %1533 = vmatpush.msra.mxu0 %v518
    %1534 = vmatpush.msra.mxu0 %v515
    %1535 = vmatpush.msra.mxu0 %v512
    %1536 = vmatpush.msra.mxu0 %v509
    %1537 = vmatpush.msra.mxu0 %v506
    %1538 = vmatpush.msra.mxu0 %v503
    %1539 = vmatpush.msra.mxu0 %v500
    %1540 = vmatpush.msra.mxu0 %v497
    %1541 = vmatpush.msra.mxu0 %v494
    %1542 = vmatpush.msra.mxu0 %v491
    %1543 = vmatpush.msra.mxu0 %v488
    %1544 = vmatpush.msra.mxu0 %v485
    %1545 = vmatpush.msra.mxu0 %v482
    %1546 = vmatmul.f32.gmra.mxu0 %v1421
    %v1547 = vpop.f32.mrf.mxu0
    %v1548 = vadd.f32 %v606, %v1547
    %1549 = vdwg.mxu0
    %v1550 = vadd.f32 %v1424, %v1448
    %v1551 = vxor.u32 %v1550, 2147483648
    %v1552 = vmul.f32 %v1551, 1.442695
    %v1553 = vpow.pop %v1552
    %v1554 = vadd.f32 %v1553, 1.0
    %v1555 = vrcp.pop %v1554
    %v1556 = vmul.f32 %v1554, %v1555
    %v1557 = vsub.f32 1.0, %v1556
    %v1558 = vmul.f32 %v1555, %v1557
    %v1559 = vadd.f32 %v1555, %v1558
    %vm1560 = vweird.f32 %v1554
    %vm1561 = vweird.f32 %v1555
    %vm1562 = vmor %vm1560, %vm1561
    %v1563 = vsel %vm1562, %v1555, %v1559
    %v1564 = vand.u32 2147483647, %v1554
    %vm1565 = vcmp.eq.f32.partialorder %v1564, 8.507059e+37
    %v1566 = vand.u32 %v1554, 2147483648
    %v1567 = vor.u32 1.1754944e-38, %v1566
    %v1568 = vsel %vm1565, %v1567, %v1563
    %v1569 = vmul.f32 1.0, %v1568
    %v1570 = vadd.f32 %v1427, %v1508
    %v1571 = vxor.u32 %v1570, 2147483648
    %v1572 = vmul.f32 %v1571, 1.442695
    %v1573 = vpow.pop %v1572
    %v1574 = vadd.f32 %v1573, 1.0
    %v1575 = vrcp.pop %v1574
    %v1576 = vmul.f32 %v1574, %v1575
    %v1577 = vsub.f32 1.0, %v1576
    %v1578 = vmul.f32 %v1575, %v1577
    %v1579 = vadd.f32 %v1575, %v1578
    %vm1580 = vweird.f32 %v1574
    %vm1581 = vweird.f32 %v1575
    %vm1582 = vmor %vm1580, %vm1581
    %v1583 = vsel %vm1582, %v1575, %v1579
    %v1584 = vand.u32 2147483647, %v1574
    %vm1585 = vcmp.eq.f32.partialorder %v1584, 8.507059e+37
    %v1586 = vand.u32 %v1574, 2147483648
    %v1587 = vor.u32 1.1754944e-38, %v1586
    %v1588 = vsel %vm1585, %v1587, %v1583
    %v1589 = vmul.f32 1.0, %v1588
    %v1590 = vadd.f32 %v1425, %v1468
    %v1591 = vxor.u32 %v1590, 2147483648
    %v1592 = vmul.f32 %v1591, 1.442695
    %v1593 = vpow.pop %v1592
    %v1594 = vadd.f32 %v1593, 1.0
    %v1595 = vrcp.pop %v1594
    %v1596 = vmul.f32 %v1594, %v1595
    %v1597 = vsub.f32 1.0, %v1596
    %v1598 = vmul.f32 %v1595, %v1597
    %v1599 = vadd.f32 %v1595, %v1598
    %vm1600 = vweird.f32 %v1594
    %vm1601 = vweird.f32 %v1595
    %vm1602 = vmor %vm1600, %vm1601
    %v1603 = vsel %vm1602, %v1595, %v1599
    %v1604 = vand.u32 2147483647, %v1594
    %vm1605 = vcmp.eq.f32.partialorder %v1604, 8.507059e+37
    %v1606 = vand.u32 %v1594, 2147483648
    %v1607 = vor.u32 1.1754944e-38, %v1606
    %v1608 = vsel %vm1605, %v1607, %v1603
    %v1609 = vmul.f32 1.0, %v1608
    %v1610 = vadd.f32 %v1428, %v1528
    %v1611 = vxor.u32 %v1610, 2147483648
    %v1612 = vmul.f32 %v1611, 1.442695
    %v1613 = vpow.pop %v1612
    %v1614 = vadd.f32 %v1613, 1.0
    %v1615 = vrcp.pop %v1614
    %v1616 = vmul.f32 %v1614, %v1615
    %v1617 = vsub.f32 1.0, %v1616
    %v1618 = vmul.f32 %v1615, %v1617
    %v1619 = vadd.f32 %v1615, %v1618
    %vm1620 = vweird.f32 %v1614
    %vm1621 = vweird.f32 %v1615
    %vm1622 = vmor %vm1620, %vm1621
    %v1623 = vsel %vm1622, %v1615, %v1619
    %v1624 = vand.u32 2147483647, %v1614
    %vm1625 = vcmp.eq.f32.partialorder %v1624, 8.507059e+37
    %v1626 = vand.u32 %v1614, 2147483648
    %v1627 = vor.u32 1.1754944e-38, %v1626
    %v1628 = vsel %vm1625, %v1627, %v1623
    %v1629 = vmul.f32 1.0, %v1628
    %v1630 = vmul.f32 %v1569, %v1488
    %v1631 = vadd.f32 %v1426, %v1630
    %v1632 = vtanh.pop %v1631
    %v1633 = vmul.f32 %v1589, %v1548
    %v1634 = vadd.f32 %v1429, %v1633
    %v1635 = vtanh.pop %v1634
    %v1636 = vsub.f32 %v1418, %v1632
    %v1637 = vmul.f32 %v1609, %v1636
    %v1638 = vadd.f32 %v1632, %v1637
    %v1639 = vsub.f32 %v1421, %v1635
    %v1640 = vmul.f32 %v1629, %v1639
    %v1641 = vadd.f32 %v1635, %v1640
    %v1642 = vadd.f32 %v1422, %v1638
    %v1643 = vadd.f32 %v1423, %v1641
    %v1644 = vld [vmem:[#allocation2 + $0xf0] sm:$0xff]
    %v1645 = vld [vmem:[#allocation2 + $0xf8] sm:$0xff]
    %v1646 = vld [vmem:[#allocation2 + $0x100] sm:$0xff]
    %v1647 = vld [vmem:[#allocation2 + $0x78] sm:$0xff]
    %v1648 = vld [vmem:[#allocation2 + $0x80] sm:$0xff]
    %v1649 = vld [vmem:[#allocation2 + $0x88] sm:$0xff]
    %1650 = vmatpush.msra.mxu0 %v477
    %1651 = vmatpush.msra.mxu0 %v474
    %1652 = vmatpush.msra.mxu0 %v471
    %1653 = vmatpush.msra.mxu0 %v468
    %1654 = vmatpush.msra.mxu0 %v465
    %1655 = vmatpush.msra.mxu0 %v462
    %1656 = vmatpush.msra.mxu0 %v459
    %1657 = vmatpush.msra.mxu0 %v456
    %1658 = vmatpush.msra.mxu0 %v453
    %1659 = vmatpush.msra.mxu0 %v450
    %1660 = vmatpush.msra.mxu0 %v447
    %1661 = vmatpush.msra.mxu0 %v444
    %1662 = vmatpush.msra.mxu0 %v441
    %1663 = vmatpush.msra.mxu0 %v438
    %1664 = vmatpush.msra.mxu0 %v435
    %1665 = vmatpush.msra.mxu0 %v432
    %1666 = vmatmul.f32.gmra.mxu0 %v1638
    %v1667 = vpop.f32.mrf.mxu0
    %v1668 = vadd.f32 %v537, %v1667
    %1669 = vdwg.mxu0
    %1670 = vmatpush.msra.mxu0 %v478
    %1671 = vmatpush.msra.mxu0 %v475
    %1672 = vmatpush.msra.mxu0 %v472
    %1673 = vmatpush.msra.mxu0 %v469
    %1674 = vmatpush.msra.mxu0 %v466
    %1675 = vmatpush.msra.mxu0 %v463
    %1676 = vmatpush.msra.mxu0 %v460
    %1677 = vmatpush.msra.mxu0 %v457
    %1678 = vmatpush.msra.mxu0 %v454
    %1679 = vmatpush.msra.mxu0 %v451
    %1680 = vmatpush.msra.mxu0 %v448
    %1681 = vmatpush.msra.mxu0 %v445
    %1682 = vmatpush.msra.mxu0 %v442
    %1683 = vmatpush.msra.mxu0 %v439
    %1684 = vmatpush.msra.mxu0 %v436
    %1685 = vmatpush.msra.mxu0 %v433
    %1686 = vmatmul.f32.gmra.mxu0 %v1638
    %v1687 = vpop.f32.mrf.mxu0
    %v1688 = vadd.f32 %v538, %v1687
    %1689 = vdwg.mxu0
    %1690 = vmatpush.msra.mxu0 %v479
    %1691 = vmatpush.msra.mxu0 %v476
    %1692 = vmatpush.msra.mxu0 %v473
    %1693 = vmatpush.msra.mxu0 %v470
    %1694 = vmatpush.msra.mxu0 %v467
    %1695 = vmatpush.msra.mxu0 %v464
    %1696 = vmatpush.msra.mxu0 %v461
    %1697 = vmatpush.msra.mxu0 %v458
    %1698 = vmatpush.msra.mxu0 %v455
    %1699 = vmatpush.msra.mxu0 %v452
    %1700 = vmatpush.msra.mxu0 %v449
    %1701 = vmatpush.msra.mxu0 %v446
    %1702 = vmatpush.msra.mxu0 %v443
    %1703 = vmatpush.msra.mxu0 %v440
    %1704 = vmatpush.msra.mxu0 %v437
    %1705 = vmatpush.msra.mxu0 %v434
    %1706 = vmatmul.f32.gmra.mxu0 %v1638
    %v1707 = vpop.f32.mrf.mxu0
    %v1708 = vadd.f32 %v539, %v1707
    %1709 = vdwg.mxu0
    %1710 = vmatpush.msra.mxu0 %v525
    %1711 = vmatpush.msra.mxu0 %v522
    %1712 = vmatpush.msra.mxu0 %v519
    %1713 = vmatpush.msra.mxu0 %v516
    %1714 = vmatpush.msra.mxu0 %v513
    %1715 = vmatpush.msra.mxu0 %v510
    %1716 = vmatpush.msra.mxu0 %v507
    %1717 = vmatpush.msra.mxu0 %v504
    %1718 = vmatpush.msra.mxu0 %v501
    %1719 = vmatpush.msra.mxu0 %v498
    %1720 = vmatpush.msra.mxu0 %v495
    %1721 = vmatpush.msra.mxu0 %v492
    %1722 = vmatpush.msra.mxu0 %v489
    %1723 = vmatpush.msra.mxu0 %v486
    %1724 = vmatpush.msra.mxu0 %v483
    %1725 = vmatpush.msra.mxu0 %v480
    %1726 = vmatmul.f32.gmra.mxu0 %v1641
    %v1727 = vpop.f32.mrf.mxu0
    %v1728 = vadd.f32 %v604, %v1727
    %1729 = vdwg.mxu0
    %1730 = vmatpush.msra.mxu0 %v526
    %1731 = vmatpush.msra.mxu0 %v523
    %1732 = vmatpush.msra.mxu0 %v520
    %1733 = vmatpush.msra.mxu0 %v517
    %1734 = vmatpush.msra.mxu0 %v514
    %1735 = vmatpush.msra.mxu0 %v511
    %1736 = vmatpush.msra.mxu0 %v508
    %1737 = vmatpush.msra.mxu0 %v505
    %1738 = vmatpush.msra.mxu0 %v502
    %1739 = vmatpush.msra.mxu0 %v499
    %1740 = vmatpush.msra.mxu0 %v496
    %1741 = vmatpush.msra.mxu0 %v493
    %1742 = vmatpush.msra.mxu0 %v490
    %1743 = vmatpush.msra.mxu0 %v487
    %1744 = vmatpush.msra.mxu0 %v484
    %1745 = vmatpush.msra.mxu0 %v481
    %1746 = vmatmul.f32.gmra.mxu0 %v1641
    %v1747 = vpop.f32.mrf.mxu0
    %v1748 = vadd.f32 %v605, %v1747
    %1749 = vdwg.mxu0
    %1750 = vmatpush.msra.mxu0 %v527
    %1751 = vmatpush.msra.mxu0 %v524
    %1752 = vmatpush.msra.mxu0 %v521
    %1753 = vmatpush.msra.mxu0 %v518
    %1754 = vmatpush.msra.mxu0 %v515
    %1755 = vmatpush.msra.mxu0 %v512
    %1756 = vmatpush.msra.mxu0 %v509
    %1757 = vmatpush.msra.mxu0 %v506
    %1758 = vmatpush.msra.mxu0 %v503
    %1759 = vmatpush.msra.mxu0 %v500
    %1760 = vmatpush.msra.mxu0 %v497
    %1761 = vmatpush.msra.mxu0 %v494
    %1762 = vmatpush.msra.mxu0 %v491
    %1763 = vmatpush.msra.mxu0 %v488
    %1764 = vmatpush.msra.mxu0 %v485
    %1765 = vmatpush.msra.mxu0 %v482
    %1766 = vmatmul.f32.gmra.mxu0 %v1641
    %v1767 = vpop.f32.mrf.mxu0
    %v1768 = vadd.f32 %v606, %v1767
    %1769 = vdwg.mxu0
    %v1770 = vadd.f32 %v1644, %v1668
    %v1771 = vxor.u32 %v1770, 2147483648
    %v1772 = vmul.f32 %v1771, 1.442695
    %v1773 = vpow.pop %v1772
    %v1774 = vadd.f32 %v1773, 1.0
    %v1775 = vrcp.pop %v1774
    %v1776 = vmul.f32 %v1774, %v1775
    %v1777 = vsub.f32 1.0, %v1776
    %v1778 = vmul.f32 %v1775, %v1777
    %v1779 = vadd.f32 %v1775, %v1778
    %vm1780 = vweird.f32 %v1774
    %vm1781 = vweird.f32 %v1775
    %vm1782 = vmor %vm1780, %vm1781
    %v1783 = vsel %vm1782, %v1775, %v1779
    %v1784 = vand.u32 2147483647, %v1774
    %vm1785 = vcmp.eq.f32.partialorder %v1784, 8.507059e+37
    %v1786 = vand.u32 %v1774, 2147483648
    %v1787 = vor.u32 1.1754944e-38, %v1786
    %v1788 = vsel %vm1785, %v1787, %v1783
    %v1789 = vmul.f32 1.0, %v1788
    %v1790 = vadd.f32 %v1647, %v1728
    %v1791 = vxor.u32 %v1790, 2147483648
    %v1792 = vmul.f32 %v1791, 1.442695
    %v1793 = vpow.pop %v1792
    %v1794 = vadd.f32 %v1793, 1.0
    %v1795 = vrcp.pop %v1794
    %v1796 = vmul.f32 %v1794, %v1795
    %v1797 = vsub.f32 1.0, %v1796
    %v1798 = vmul.f32 %v1795, %v1797
    %v1799 = vadd.f32 %v1795, %v1798
    %vm1800 = vweird.f32 %v1794
    %vm1801 = vweird.f32 %v1795
    %vm1802 = vmor %vm1800, %vm1801
    %v1803 = vsel %vm1802, %v1795, %v1799
    %v1804 = vand.u32 2147483647, %v1794
    %vm1805 = vcmp.eq.f32.partialorder %v1804, 8.507059e+37
    %v1806 = vand.u32 %v1794, 2147483648
    %v1807 = vor.u32 1.1754944e-38, %v1806
    %v1808 = vsel %vm1805, %v1807, %v1803
    %v1809 = vmul.f32 1.0, %v1808
    %v1810 = vadd.f32 %v1645, %v1688
    %v1811 = vxor.u32 %v1810, 2147483648
    %v1812 = vmul.f32 %v1811, 1.442695
    %v1813 = vpow.pop %v1812
    %v1814 = vadd.f32 %v1813, 1.0
    %v1815 = vrcp.pop %v1814
    %v1816 = vmul.f32 %v1814, %v1815
    %v1817 = vsub.f32 1.0, %v1816
    %v1818 = vmul.f32 %v1815, %v1817
    %v1819 = vadd.f32 %v1815, %v1818
    %vm1820 = vweird.f32 %v1814
    %vm1821 = vweird.f32 %v1815
    %vm1822 = vmor %vm1820, %vm1821
    %v1823 = vsel %vm1822, %v1815, %v1819
    %v1824 = vand.u32 2147483647, %v1814
    %vm1825 = vcmp.eq.f32.partialorder %v1824, 8.507059e+37
    %v1826 = vand.u32 %v1814, 2147483648
    %v1827 = vor.u32 1.1754944e-38, %v1826
    %v1828 = vsel %vm1825, %v1827, %v1823
    %v1829 = vmul.f32 1.0, %v1828
    %v1830 = vadd.f32 %v1648, %v1748
    %v1831 = vxor.u32 %v1830, 2147483648
    %v1832 = vmul.f32 %v1831, 1.442695
    %v1833 = vpow.pop %v1832
    %v1834 = vadd.f32 %v1833, 1.0
    %v1835 = vrcp.pop %v1834
    %v1836 = vmul.f32 %v1834, %v1835
    %v1837 = vsub.f32 1.0, %v1836
    %v1838 = vmul.f32 %v1835, %v1837
    %v1839 = vadd.f32 %v1835, %v1838
    %vm1840 = vweird.f32 %v1834
    %vm1841 = vweird.f32 %v1835
    %vm1842 = vmor %vm1840, %vm1841
    %v1843 = vsel %vm1842, %v1835, %v1839
    %v1844 = vand.u32 2147483647, %v1834
    %vm1845 = vcmp.eq.f32.partialorder %v1844, 8.507059e+37
    %v1846 = vand.u32 %v1834, 2147483648
    %v1847 = vor.u32 1.1754944e-38, %v1846
    %v1848 = vsel %vm1845, %v1847, %v1843
    %v1849 = vmul.f32 1.0, %v1848
    %v1850 = vmul.f32 %v1789, %v1708
    %v1851 = vadd.f32 %v1646, %v1850
    %v1852 = vtanh.pop %v1851
    %v1853 = vmul.f32 %v1809, %v1768
    %v1854 = vadd.f32 %v1649, %v1853
    %v1855 = vtanh.pop %v1854
    %v1856 = vsub.f32 %v1638, %v1852
    %v1857 = vmul.f32 %v1829, %v1856
    %v1858 = vadd.f32 %v1852, %v1857
    %v1859 = vsub.f32 %v1641, %v1855
    %v1860 = vmul.f32 %v1849, %v1859
    %v1861 = vadd.f32 %v1855, %v1860
    %v1862 = vadd.f32 %v1642, %v1858
    %v1863 = vadd.f32 %v1643, %v1861
    %v1864 = vld [vmem:[#allocation2 + $0x120] sm:$0xff]
    %v1865 = vld [vmem:[#allocation2 + $0x128] sm:$0xff]
    %v1866 = vld [vmem:[#allocation2 + $0x130] sm:$0xff]
    %v1867 = vld [vmem:[#allocation2 + $0x48] sm:$0xff]
    %v1868 = vld [vmem:[#allocation2 + $0x50] sm:$0xff]
    %v1869 = vld [vmem:[#allocation2 + $0x58] sm:$0xff]
    %1870 = vmatpush.msra.mxu0 %v477
    %1871 = vmatpush.msra.mxu0 %v474
    %1872 = vmatpush.msra.mxu0 %v471
    %1873 = vmatpush.msra.mxu0 %v468
    %1874 = vmatpush.msra.mxu0 %v465
    %1875 = vmatpush.msra.mxu0 %v462
    %1876 = vmatpush.msra.mxu0 %v459
    %1877 = vmatpush.msra.mxu0 %v456
    %1878 = vmatpush.msra.mxu0 %v453
    %1879 = vmatpush.msra.mxu0 %v450
    %1880 = vmatpush.msra.mxu0 %v447
    %1881 = vmatpush.msra.mxu0 %v444
    %1882 = vmatpush.msra.mxu0 %v441
    %1883 = vmatpush.msra.mxu0 %v438
    %1884 = vmatpush.msra.mxu0 %v435
    %1885 = vmatpush.msra.mxu0 %v432
    %1886 = vmatmul.f32.gmra.mxu0 %v1858
    %v1887 = vpop.f32.mrf.mxu0
    %v1888 = vadd.f32 %v537, %v1887
    %1889 = vdwg.mxu0
    %1890 = vmatpush.msra.mxu0 %v478
    %1891 = vmatpush.msra.mxu0 %v475
    %1892 = vmatpush.msra.mxu0 %v472
    %1893 = vmatpush.msra.mxu0 %v469
    %1894 = vmatpush.msra.mxu0 %v466
    %1895 = vmatpush.msra.mxu0 %v463
    %1896 = vmatpush.msra.mxu0 %v460
    %1897 = vmatpush.msra.mxu0 %v457
    %1898 = vmatpush.msra.mxu0 %v454
    %1899 = vmatpush.msra.mxu0 %v451
    %1900 = vmatpush.msra.mxu0 %v448
    %1901 = vmatpush.msra.mxu0 %v445
    %1902 = vmatpush.msra.mxu0 %v442
    %1903 = vmatpush.msra.mxu0 %v439
    %1904 = vmatpush.msra.mxu0 %v436
    %1905 = vmatpush.msra.mxu0 %v433
    %1906 = vmatmul.f32.gmra.mxu0 %v1858
    %v1907 = vpop.f32.mrf.mxu0
    %v1908 = vadd.f32 %v538, %v1907
    %1909 = vdwg.mxu0
    %1910 = vmatpush.msra.mxu0 %v479
    %1911 = vmatpush.msra.mxu0 %v476
    %1912 = vmatpush.msra.mxu0 %v473
    %1913 = vmatpush.msra.mxu0 %v470
    %1914 = vmatpush.msra.mxu0 %v467
    %1915 = vmatpush.msra.mxu0 %v464
    %1916 = vmatpush.msra.mxu0 %v461
    %1917 = vmatpush.msra.mxu0 %v458
    %1918 = vmatpush.msra.mxu0 %v455
    %1919 = vmatpush.msra.mxu0 %v452
    %1920 = vmatpush.msra.mxu0 %v449
    %1921 = vmatpush.msra.mxu0 %v446
    %1922 = vmatpush.msra.mxu0 %v443
    %1923 = vmatpush.msra.mxu0 %v440
    %1924 = vmatpush.msra.mxu0 %v437
    %1925 = vmatpush.msra.mxu0 %v434
    %1926 = vmatmul.f32.gmra.mxu0 %v1858
    %v1927 = vpop.f32.mrf.mxu0
    %v1928 = vadd.f32 %v539, %v1927
    %1929 = vdwg.mxu0
    %1930 = vmatpush.msra.mxu0 %v525
    %1931 = vmatpush.msra.mxu0 %v522
    %1932 = vmatpush.msra.mxu0 %v519
    %1933 = vmatpush.msra.mxu0 %v516
    %1934 = vmatpush.msra.mxu0 %v513
    %1935 = vmatpush.msra.mxu0 %v510
    %1936 = vmatpush.msra.mxu0 %v507
    %1937 = vmatpush.msra.mxu0 %v504
    %1938 = vmatpush.msra.mxu0 %v501
    %1939 = vmatpush.msra.mxu0 %v498
    %1940 = vmatpush.msra.mxu0 %v495
    %1941 = vmatpush.msra.mxu0 %v492
    %1942 = vmatpush.msra.mxu0 %v489
    %1943 = vmatpush.msra.mxu0 %v486
    %1944 = vmatpush.msra.mxu0 %v483
    %1945 = vmatpush.msra.mxu0 %v480
    %1946 = vmatmul.f32.gmra.mxu0 %v1861
    %v1947 = vpop.f32.mrf.mxu0
    %v1948 = vadd.f32 %v604, %v1947
    %1949 = vdwg.mxu0
    %1950 = vmatpush.msra.mxu0 %v526
    %1951 = vmatpush.msra.mxu0 %v523
    %1952 = vmatpush.msra.mxu0 %v520
    %1953 = vmatpush.msra.mxu0 %v517
    %1954 = vmatpush.msra.mxu0 %v514
    %1955 = vmatpush.msra.mxu0 %v511
    %1956 = vmatpush.msra.mxu0 %v508
    %1957 = vmatpush.msra.mxu0 %v505
    %1958 = vmatpush.msra.mxu0 %v502
    %1959 = vmatpush.msra.mxu0 %v499
    %1960 = vmatpush.msra.mxu0 %v496
    %1961 = vmatpush.msra.mxu0 %v493
    %1962 = vmatpush.msra.mxu0 %v490
    %1963 = vmatpush.msra.mxu0 %v487
    %1964 = vmatpush.msra.mxu0 %v484
    %1965 = vmatpush.msra.mxu0 %v481
    %1966 = vmatmul.f32.gmra.mxu0 %v1861
    %v1967 = vpop.f32.mrf.mxu0
    %v1968 = vadd.f32 %v605, %v1967
    %1969 = vdwg.mxu0
    %1970 = vmatpush.msra.mxu0 %v527
    %1971 = vmatpush.msra.mxu0 %v524
    %1972 = vmatpush.msra.mxu0 %v521
    %1973 = vmatpush.msra.mxu0 %v518
    %1974 = vmatpush.msra.mxu0 %v515
    %1975 = vmatpush.msra.mxu0 %v512
    %1976 = vmatpush.msra.mxu0 %v509
    %1977 = vmatpush.msra.mxu0 %v506
    %1978 = vmatpush.msra.mxu0 %v503
    %1979 = vmatpush.msra.mxu0 %v500
    %1980 = vmatpush.msra.mxu0 %v497
    %1981 = vmatpush.msra.mxu0 %v494
    %1982 = vmatpush.msra.mxu0 %v491
    %1983 = vmatpush.msra.mxu0 %v488
    %1984 = vmatpush.msra.mxu0 %v485
    %1985 = vmatpush.msra.mxu0 %v482
    %1986 = vmatmul.f32.gmra.mxu0 %v1861
    %v1987 = vpop.f32.mrf.mxu0
    %v1988 = vadd.f32 %v606, %v1987
    %1989 = vdwg.mxu0
    %v1990 = vadd.f32 %v1864, %v1888
    %v1991 = vxor.u32 %v1990, 2147483648
    %v1992 = vmul.f32 %v1991, 1.442695
    %v1993 = vpow.pop %v1992
    %v1994 = vadd.f32 %v1993, 1.0
    %v1995 = vrcp.pop %v1994
    %v1996 = vmul.f32 %v1994, %v1995
    %v1997 = vsub.f32 1.0, %v1996
    %v1998 = vmul.f32 %v1995, %v1997
    %v1999 = vadd.f32 %v1995, %v1998
    %vm2000 = vweird.f32 %v1994
    %vm2001 = vweird.f32 %v1995
    %vm2002 = vmor %vm2000, %vm2001
    %v2003 = vsel %vm2002, %v1995, %v1999
    %v2004 = vand.u32 2147483647, %v1994
    %vm2005 = vcmp.eq.f32.partialorder %v2004, 8.507059e+37
    %v2006 = vand.u32 %v1994, 2147483648
    %v2007 = vor.u32 1.1754944e-38, %v2006
    %v2008 = vsel %vm2005, %v2007, %v2003
    %v2009 = vmul.f32 1.0, %v2008
    %v2010 = vadd.f32 %v1867, %v1948
    %v2011 = vxor.u32 %v2010, 2147483648
    %v2012 = vmul.f32 %v2011, 1.442695
    %v2013 = vpow.pop %v2012
    %v2014 = vadd.f32 %v2013, 1.0
    %v2015 = vrcp.pop %v2014
    %v2016 = vmul.f32 %v2014, %v2015
    %v2017 = vsub.f32 1.0, %v2016
    %v2018 = vmul.f32 %v2015, %v2017
    %v2019 = vadd.f32 %v2015, %v2018
    %vm2020 = vweird.f32 %v2014
    %vm2021 = vweird.f32 %v2015
    %vm2022 = vmor %vm2020, %vm2021
    %v2023 = vsel %vm2022, %v2015, %v2019
    %v2024 = vand.u32 2147483647, %v2014
    %vm2025 = vcmp.eq.f32.partialorder %v2024, 8.507059e+37
    %v2026 = vand.u32 %v2014, 2147483648
    %v2027 = vor.u32 1.1754944e-38, %v2026
    %v2028 = vsel %vm2025, %v2027, %v2023
    %v2029 = vmul.f32 1.0, %v2028
    %v2030 = vadd.f32 %v1865, %v1908
    %v2031 = vxor.u32 %v2030, 2147483648
    %v2032 = vmul.f32 %v2031, 1.442695
    %v2033 = vpow.pop %v2032
    %v2034 = vadd.f32 %v2033, 1.0
    %v2035 = vrcp.pop %v2034
    %v2036 = vmul.f32 %v2034, %v2035
    %v2037 = vsub.f32 1.0, %v2036
    %v2038 = vmul.f32 %v2035, %v2037
    %v2039 = vadd.f32 %v2035, %v2038
    %vm2040 = vweird.f32 %v2034
    %vm2041 = vweird.f32 %v2035
    %vm2042 = vmor %vm2040, %vm2041
    %v2043 = vsel %vm2042, %v2035, %v2039
    %v2044 = vand.u32 2147483647, %v2034
    %vm2045 = vcmp.eq.f32.partialorder %v2044, 8.507059e+37
    %v2046 = vand.u32 %v2034, 2147483648
    %v2047 = vor.u32 1.1754944e-38, %v2046
    %v2048 = vsel %vm2045, %v2047, %v2043
    %v2049 = vmul.f32 1.0, %v2048
    %v2050 = vadd.f32 %v1868, %v1968
    %v2051 = vxor.u32 %v2050, 2147483648
    %v2052 = vmul.f32 %v2051, 1.442695
    %v2053 = vpow.pop %v2052
    %v2054 = vadd.f32 %v2053, 1.0
    %v2055 = vrcp.pop %v2054
    %v2056 = vmul.f32 %v2054, %v2055
    %v2057 = vsub.f32 1.0, %v2056
    %v2058 = vmul.f32 %v2055, %v2057
    %v2059 = vadd.f32 %v2055, %v2058
    %vm2060 = vweird.f32 %v2054
    %vm2061 = vweird.f32 %v2055
    %vm2062 = vmor %vm2060, %vm2061
    %v2063 = vsel %vm2062, %v2055, %v2059
    %v2064 = vand.u32 2147483647, %v2054
    %vm2065 = vcmp.eq.f32.partialorder %v2064, 8.507059e+37
    %v2066 = vand.u32 %v2054, 2147483648
    %v2067 = vor.u32 1.1754944e-38, %v2066
    %v2068 = vsel %vm2065, %v2067, %v2063
    %v2069 = vmul.f32 1.0, %v2068
    %v2070 = vmul.f32 %v2009, %v1928
    %v2071 = vadd.f32 %v1866, %v2070
    %v2072 = vtanh.pop %v2071
    %v2073 = vmul.f32 %v2029, %v1988
    %v2074 = vadd.f32 %v1869, %v2073
    %v2075 = vtanh.pop %v2074
    %v2076 = vsub.f32 %v1858, %v2072
    %v2077 = vmul.f32 %v2049, %v2076
    %v2078 = vadd.f32 %v2072, %v2077
    %v2079 = vsub.f32 %v1861, %v2075
    %v2080 = vmul.f32 %v2069, %v2079
    %v2081 = vadd.f32 %v2075, %v2080
    %v2082 = vadd.f32 %v1862, %v2078
    %v2083 = vadd.f32 %v1863, %v2081
    %v2084 = vld [vmem:[#allocation2 + $0x150] sm:$0xff]
    %v2085 = vld [vmem:[#allocation2 + $0x158] sm:$0xff]
    %v2086 = vld [vmem:[#allocation2 + $0x160] sm:$0xff]
    %v2087 = vld [vmem:[#allocation2 + $0x18] sm:$0xff]
    %v2088 = vld [vmem:[#allocation2 + $0x20] sm:$0xff]
    %v2089 = vld [vmem:[#allocation2 + $0x28] sm:$0xff]
    %2090 = vmatpush.msra.mxu0 %v477
    %2091 = vmatpush.msra.mxu0 %v474
    %2092 = vmatpush.msra.mxu0 %v471
    %2093 = vmatpush.msra.mxu0 %v468
    %2094 = vmatpush.msra.mxu0 %v465
    %2095 = vmatpush.msra.mxu0 %v462
    %2096 = vmatpush.msra.mxu0 %v459
    %2097 = vmatpush.msra.mxu0 %v456
    %2098 = vmatpush.msra.mxu0 %v453
    %2099 = vmatpush.msra.mxu0 %v450
    %2100 = vmatpush.msra.mxu0 %v447
    %2101 = vmatpush.msra.mxu0 %v444
    %2102 = vmatpush.msra.mxu0 %v441
    %2103 = vmatpush.msra.mxu0 %v438
    %2104 = vmatpush.msra.mxu0 %v435
    %2105 = vmatpush.msra.mxu0 %v432
    %2106 = vmatmul.f32.gmra.mxu0 %v2078
    %v2107 = vpop.f32.mrf.mxu0
    %v2108 = vadd.f32 %v537, %v2107
    %2109 = vdwg.mxu0
    %2110 = vmatpush.msra.mxu0 %v478
    %2111 = vmatpush.msra.mxu0 %v475
    %2112 = vmatpush.msra.mxu0 %v472
    %2113 = vmatpush.msra.mxu0 %v469
    %2114 = vmatpush.msra.mxu0 %v466
    %2115 = vmatpush.msra.mxu0 %v463
    %2116 = vmatpush.msra.mxu0 %v460
    %2117 = vmatpush.msra.mxu0 %v457
    %2118 = vmatpush.msra.mxu0 %v454
    %2119 = vmatpush.msra.mxu0 %v451
    %2120 = vmatpush.msra.mxu0 %v448
    %2121 = vmatpush.msra.mxu0 %v445
    %2122 = vmatpush.msra.mxu0 %v442
    %2123 = vmatpush.msra.mxu0 %v439
    %2124 = vmatpush.msra.mxu0 %v436
    %2125 = vmatpush.msra.mxu0 %v433
    %2126 = vmatmul.f32.gmra.mxu0 %v2078
    %v2127 = vpop.f32.mrf.mxu0
    %v2128 = vadd.f32 %v538, %v2127
    %2129 = vdwg.mxu0
    %2130 = vmatpush.msra.mxu0 %v479
    %2131 = vmatpush.msra.mxu0 %v476
    %2132 = vmatpush.msra.mxu0 %v473
    %2133 = vmatpush.msra.mxu0 %v470
    %2134 = vmatpush.msra.mxu0 %v467
    %2135 = vmatpush.msra.mxu0 %v464
    %2136 = vmatpush.msra.mxu0 %v461
    %2137 = vmatpush.msra.mxu0 %v458
    %2138 = vmatpush.msra.mxu0 %v455
    %2139 = vmatpush.msra.mxu0 %v452
    %2140 = vmatpush.msra.mxu0 %v449
    %2141 = vmatpush.msra.mxu0 %v446
    %2142 = vmatpush.msra.mxu0 %v443
    %2143 = vmatpush.msra.mxu0 %v440
    %2144 = vmatpush.msra.mxu0 %v437
    %2145 = vmatpush.msra.mxu0 %v434
    %2146 = vmatmul.f32.gmra.mxu0 %v2078
    %v2147 = vpop.f32.mrf.mxu0
    %v2148 = vadd.f32 %v539, %v2147
    %2149 = vdwg.mxu0
    %2150 = vmatpush.msra.mxu0 %v525
    %2151 = vmatpush.msra.mxu0 %v522
    %2152 = vmatpush.msra.mxu0 %v519
    %2153 = vmatpush.msra.mxu0 %v516
    %2154 = vmatpush.msra.mxu0 %v513
    %2155 = vmatpush.msra.mxu0 %v510
    %2156 = vmatpush.msra.mxu0 %v507
    %2157 = vmatpush.msra.mxu0 %v504
    %2158 = vmatpush.msra.mxu0 %v501
    %2159 = vmatpush.msra.mxu0 %v498
    %2160 = vmatpush.msra.mxu0 %v495
    %2161 = vmatpush.msra.mxu0 %v492
    %2162 = vmatpush.msra.mxu0 %v489
    %2163 = vmatpush.msra.mxu0 %v486
    %2164 = vmatpush.msra.mxu0 %v483
    %2165 = vmatpush.msra.mxu0 %v480
    %2166 = vmatmul.f32.gmra.mxu0 %v2081
    %v2167 = vpop.f32.mrf.mxu0
    %v2168 = vadd.f32 %v604, %v2167
    %2169 = vdwg.mxu0
    %2170 = vmatpush.msra.mxu0 %v526
    %2171 = vmatpush.msra.mxu0 %v523
    %2172 = vmatpush.msra.mxu0 %v520
    %2173 = vmatpush.msra.mxu0 %v517
    %2174 = vmatpush.msra.mxu0 %v514
    %2175 = vmatpush.msra.mxu0 %v511
    %2176 = vmatpush.msra.mxu0 %v508
    %2177 = vmatpush.msra.mxu0 %v505
    %2178 = vmatpush.msra.mxu0 %v502
    %2179 = vmatpush.msra.mxu0 %v499
    %2180 = vmatpush.msra.mxu0 %v496
    %2181 = vmatpush.msra.mxu0 %v493
    %2182 = vmatpush.msra.mxu0 %v490
    %2183 = vmatpush.msra.mxu0 %v487
    %2184 = vmatpush.msra.mxu0 %v484
    %2185 = vmatpush.msra.mxu0 %v481
    %2186 = vmatmul.f32.gmra.mxu0 %v2081
    %v2187 = vpop.f32.mrf.mxu0
    %v2188 = vadd.f32 %v605, %v2187
    %2189 = vdwg.mxu0
    %2190 = vmatpush.msra.mxu0 %v527
    %2191 = vmatpush.msra.mxu0 %v524
    %2192 = vmatpush.msra.mxu0 %v521
    %2193 = vmatpush.msra.mxu0 %v518
    %2194 = vmatpush.msra.mxu0 %v515
    %2195 = vmatpush.msra.mxu0 %v512
    %2196 = vmatpush.msra.mxu0 %v509
    %2197 = vmatpush.msra.mxu0 %v506
    %2198 = vmatpush.msra.mxu0 %v503
    %2199 = vmatpush.msra.mxu0 %v500
    %2200 = vmatpush.msra.mxu0 %v497
    %2201 = vmatpush.msra.mxu0 %v494
    %2202 = vmatpush.msra.mxu0 %v491
    %2203 = vmatpush.msra.mxu0 %v488
    %2204 = vmatpush.msra.mxu0 %v485
    %2205 = vmatpush.msra.mxu0 %v482
    %2206 = vmatmul.f32.gmra.mxu0 %v2081
    %v2207 = vpop.f32.mrf.mxu0
    %v2208 = vadd.f32 %v606, %v2207
    %2209 = vdwg.mxu0
    %v2210 = vadd.f32 %v2084, %v2108
    %v2211 = vxor.u32 %v2210, 2147483648
    %v2212 = vmul.f32 %v2211, 1.442695
    %v2213 = vpow.pop %v2212
    %v2214 = vadd.f32 %v2213, 1.0
    %v2215 = vrcp.pop %v2214
    %v2216 = vmul.f32 %v2214, %v2215
    %v2217 = vsub.f32 1.0, %v2216
    %v2218 = vmul.f32 %v2215, %v2217
    %v2219 = vadd.f32 %v2215, %v2218
    %vm2220 = vweird.f32 %v2214
    %vm2221 = vweird.f32 %v2215
    %vm2222 = vmor %vm2220, %vm2221
    %v2223 = vsel %vm2222, %v2215, %v2219
    %v2224 = vand.u32 2147483647, %v2214
    %vm2225 = vcmp.eq.f32.partialorder %v2224, 8.507059e+37
    %v2226 = vand.u32 %v2214, 2147483648
    %v2227 = vor.u32 1.1754944e-38, %v2226
    %v2228 = vsel %vm2225, %v2227, %v2223
    %v2229 = vmul.f32 1.0, %v2228
    %v2230 = vadd.f32 %v2087, %v2168
    %v2231 = vxor.u32 %v2230, 2147483648
    %v2232 = vmul.f32 %v2231, 1.442695
    %v2233 = vpow.pop %v2232
    %v2234 = vadd.f32 %v2233, 1.0
    %v2235 = vrcp.pop %v2234
    %v2236 = vmul.f32 %v2234, %v2235
    %v2237 = vsub.f32 1.0, %v2236
    %v2238 = vmul.f32 %v2235, %v2237
    %v2239 = vadd.f32 %v2235, %v2238
    %vm2240 = vweird.f32 %v2234
    %vm2241 = vweird.f32 %v2235
    %vm2242 = vmor %vm2240, %vm2241
    %v2243 = vsel %vm2242, %v2235, %v2239
    %v2244 = vand.u32 2147483647, %v2234
    %vm2245 = vcmp.eq.f32.partialorder %v2244, 8.507059e+37
    %v2246 = vand.u32 %v2234, 2147483648
    %v2247 = vor.u32 1.1754944e-38, %v2246
    %v2248 = vsel %vm2245, %v2247, %v2243
    %v2249 = vmul.f32 1.0, %v2248
    %v2250 = vadd.f32 %v2085, %v2128
    %v2251 = vxor.u32 %v2250, 2147483648
    %v2252 = vmul.f32 %v2251, 1.442695
    %v2253 = vpow.pop %v2252
    %v2254 = vadd.f32 %v2253, 1.0
    %v2255 = vrcp.pop %v2254
    %v2256 = vmul.f32 %v2254, %v2255
    %v2257 = vsub.f32 1.0, %v2256
    %v2258 = vmul.f32 %v2255, %v2257
    %v2259 = vadd.f32 %v2255, %v2258
    %vm2260 = vweird.f32 %v2254
    %vm2261 = vweird.f32 %v2255
    %vm2262 = vmor %vm2260, %vm2261
    %v2263 = vsel %vm2262, %v2255, %v2259
    %v2264 = vand.u32 2147483647, %v2254
    %vm2265 = vcmp.eq.f32.partialorder %v2264, 8.507059e+37
    %v2266 = vand.u32 %v2254, 2147483648
    %v2267 = vor.u32 1.1754944e-38, %v2266
    %v2268 = vsel %vm2265, %v2267, %v2263
    %v2269 = vmul.f32 1.0, %v2268
    %v2270 = vadd.f32 %v2088, %v2188
    %v2271 = vxor.u32 %v2270, 2147483648
    %v2272 = vmul.f32 %v2271, 1.442695
    %v2273 = vpow.pop %v2272
    %v2274 = vadd.f32 %v2273, 1.0
    %v2275 = vrcp.pop %v2274
    %v2276 = vmul.f32 %v2274, %v2275
    %v2277 = vsub.f32 1.0, %v2276
    %v2278 = vmul.f32 %v2275, %v2277
    %v2279 = vadd.f32 %v2275, %v2278
    %vm2280 = vweird.f32 %v2274
    %vm2281 = vweird.f32 %v2275
    %vm2282 = vmor %vm2280, %vm2281
    %v2283 = vsel %vm2282, %v2275, %v2279
    %v2284 = vand.u32 2147483647, %v2274
    %vm2285 = vcmp.eq.f32.partialorder %v2284, 8.507059e+37
    %v2286 = vand.u32 %v2274, 2147483648
    %v2287 = vor.u32 1.1754944e-38, %v2286
    %v2288 = vsel %vm2285, %v2287, %v2283
    %v2289 = vmul.f32 1.0, %v2288
    %v2290 = vmul.f32 %v2229, %v2148
    %v2291 = vadd.f32 %v2086, %v2290
    %v2292 = vtanh.pop %v2291
    %v2293 = vmul.f32 %v2249, %v2208
    %v2294 = vadd.f32 %v2089, %v2293
    %v2295 = vtanh.pop %v2294
    %v2296 = vsub.f32 %v2078, %v2292
    %v2297 = vmul.f32 %v2269, %v2296
    %v2298 = vadd.f32 %v2292, %v2297
    %v2299 = vsub.f32 %v2081, %v2295
    %v2300 = vmul.f32 %v2289, %v2299
    %v2301 = vadd.f32 %v2295, %v2300
    %v2302 = vadd.f32 %v2082, %v2298
    %v2303 = vadd.f32 %v2083, %v2301
    %v2304 = vld [vmem:[%s7] sm:$0xff]
    %v2305 = vld [vmem:[%s7 + $0x8] sm:$0xff]
    %v2306 = vld [vmem:[%s7 + $0x10] sm:$0xff]
    %v2307 = vld [vmem:[%s7 + $0x18] sm:$0xff]
    %v2308 = vld [vmem:[%s7 + $0x20] sm:$0xff]
    %v2309 = vld [vmem:[%s7 + $0x28] sm:$0xff]
    %v2310 = vld [vmem:[%s7 + $0x30] sm:$0xff]
    %v2311 = vld [vmem:[%s7 + $0x38] sm:$0xff]
    %v2312 = vld [vmem:[%s7 + $0x40] sm:$0xff]
    %v2313 = vld [vmem:[%s7 + $0x48] sm:$0xff]
    %v2314 = vld [vmem:[%s7 + $0x50] sm:$0xff]
    %v2315 = vld [vmem:[%s7 + $0x58] sm:$0xff]
    %v2316 = vld [vmem:[%s7 + $0x60] sm:$0xff]
    %v2317 = vld [vmem:[%s7 + $0x68] sm:$0xff]
    %v2318 = vld [vmem:[%s7 + $0x70] sm:$0xff]
    %v2319 = vld [vmem:[%s7 + $0x78] sm:$0xff]
    %v2320 = vld [vmem:[%s7 + $0x80] sm:$0xff]
    %v2321 = vld [vmem:[%s7 + $0x88] sm:$0xff]
    %v2322 = vld [vmem:[%s7 + $0x90] sm:$0xff]
    %v2323 = vld [vmem:[%s7 + $0x98] sm:$0xff]
    %v2324 = vld [vmem:[%s7 + $0xa0] sm:$0xff]
    %v2325 = vld [vmem:[%s7 + $0xa8] sm:$0xff]
    %v2326 = vld [vmem:[%s7 + $0xb0] sm:$0xff]
    %v2327 = vld [vmem:[%s7 + $0xb8] sm:$0xff]
    %v2328 = vld [vmem:[%s7 + $0xc0] sm:$0xff]
    %v2329 = vld [vmem:[%s7 + $0xc8] sm:$0xff]
    %v2330 = vld [vmem:[%s7 + $0xd0] sm:$0xff]
    %v2331 = vld [vmem:[%s7 + $0xd8] sm:$0xff]
    %v2332 = vld [vmem:[%s7 + $0xe0] sm:$0xff]
    %v2333 = vld [vmem:[%s7 + $0xe8] sm:$0xff]
    %v2334 = vld [vmem:[%s7 + $0xf0] sm:$0xff]
    %v2335 = vld [vmem:[%s7 + $0xf8] sm:$0xff]
    %v2336 = vld [vmem:[%s8] sm:$0xff]
    %v2337 = vld [vmem:[%s8 + $0x8] sm:$0xff]
    %v2338 = vld [vmem:[%s8 + $0x10] sm:$0xff]
    %v2339 = vld [vmem:[%s8 + $0x18] sm:$0xff]
    %v2340 = vld [vmem:[%s8 + $0x20] sm:$0xff]
    %v2341 = vld [vmem:[%s8 + $0x28] sm:$0xff]
    %v2342 = vld [vmem:[%s8 + $0x30] sm:$0xff]
    %v2343 = vld [vmem:[%s8 + $0x38] sm:$0xff]
    %v2344 = vld [vmem:[%s8 + $0x40] sm:$0xff]
    %v2345 = vld [vmem:[%s8 + $0x48] sm:$0xff]
    %v2346 = vld [vmem:[%s8 + $0x50] sm:$0xff]
    %v2347 = vld [vmem:[%s8 + $0x58] sm:$0xff]
    %v2348 = vld [vmem:[%s8 + $0x60] sm:$0xff]
    %v2349 = vld [vmem:[%s8 + $0x68] sm:$0xff]
    %v2350 = vld [vmem:[%s8 + $0x70] sm:$0xff]
    %v2351 = vld [vmem:[%s8 + $0x78] sm:$0xff]
    %v2352 = vld [vmem:[%s8 + $0x80] sm:$0xff]
    %v2353 = vld [vmem:[%s8 + $0x88] sm:$0xff]
    %v2354 = vld [vmem:[%s8 + $0x90] sm:$0xff]
    %v2355 = vld [vmem:[%s8 + $0x98] sm:$0xff]
    %v2356 = vld [vmem:[%s8 + $0xa0] sm:$0xff]
    %v2357 = vld [vmem:[%s8 + $0xa8] sm:$0xff]
    %v2358 = vld [vmem:[%s8 + $0xb0] sm:$0xff]
    %v2359 = vld [vmem:[%s8 + $0xb8] sm:$0xff]
    %v2360 = vld [vmem:[%s8 + $0xc0] sm:$0xff]
    %v2361 = vld [vmem:[%s8 + $0xc8] sm:$0xff]
    %v2362 = vld [vmem:[%s8 + $0xd0] sm:$0xff]
    %v2363 = vld [vmem:[%s8 + $0xd8] sm:$0xff]
    %v2364 = vld [vmem:[%s8 + $0xe0] sm:$0xff]
    %v2365 = vld [vmem:[%s8 + $0xe8] sm:$0xff]
    %v2366 = vld [vmem:[%s8 + $0xf0] sm:$0xff]
    %v2367 = vld [vmem:[%s8 + $0xf8] sm:$0xff]
    %2368 = vmatpush.msra.mxu0 %v2366
    %2369 = vmatpush.msra.mxu0 %v2364
    %2370 = vmatpush.msra.mxu0 %v2362
    %2371 = vmatpush.msra.mxu0 %v2360
    %2372 = vmatpush.msra.mxu0 %v2358
    %2373 = vmatpush.msra.mxu0 %v2356
    %2374 = vmatpush.msra.mxu0 %v2354
    %2375 = vmatpush.msra.mxu0 %v2352
    %2376 = vmatpush.msra.mxu0 %v2350
    %2377 = vmatpush.msra.mxu0 %v2348
    %2378 = vmatpush.msra.mxu0 %v2346
    %2379 = vmatpush.msra.mxu0 %v2344
    %2380 = vmatpush.msra.mxu0 %v2342
    %2381 = vmatpush.msra.mxu0 %v2340
    %2382 = vmatpush.msra.mxu0 %v2338
    %2383 = vmatpush.msra.mxu0 %v2336
    %2384 = vmatmul.f32.gmra.mxu0 %v2303
    %v2385 = vpop.f32.mrf.mxu0
    %v2386 = vadd.f32 0.0, %v2385
    %2387 = vdwg.mxu0
    %2388 = vmatpush.msra.mxu0 %v2367
    %2389 = vmatpush.msra.mxu0 %v2365
    %2390 = vmatpush.msra.mxu0 %v2363
    %2391 = vmatpush.msra.mxu0 %v2361
    %2392 = vmatpush.msra.mxu0 %v2359
    %2393 = vmatpush.msra.mxu0 %v2357
    %2394 = vmatpush.msra.mxu0 %v2355
    %2395 = vmatpush.msra.mxu0 %v2353
    %2396 = vmatpush.msra.mxu0 %v2351
    %2397 = vmatpush.msra.mxu0 %v2349
    %2398 = vmatpush.msra.mxu0 %v2347
    %2399 = vmatpush.msra.mxu0 %v2345
    %2400 = vmatpush.msra.mxu0 %v2343
    %2401 = vmatpush.msra.mxu0 %v2341
    %2402 = vmatpush.msra.mxu0 %v2339
    %2403 = vmatpush.msra.mxu0 %v2337
    %2404 = vmatmul.f32.gmra.mxu0 %v2303
    %v2405 = vpop.f32.mrf.mxu0
    %v2406 = vadd.f32 0.0, %v2405
    %2407 = vdwg.mxu0
    %2408 = vmatpush.msra.mxu0 %v2334
    %2409 = vmatpush.msra.mxu0 %v2332
    %2410 = vmatpush.msra.mxu0 %v2330
    %2411 = vmatpush.msra.mxu0 %v2328
    %2412 = vmatpush.msra.mxu0 %v2326
    %2413 = vmatpush.msra.mxu0 %v2324
    %2414 = vmatpush.msra.mxu0 %v2322
    %2415 = vmatpush.msra.mxu0 %v2320
    %2416 = vmatpush.msra.mxu0 %v2318
    %2417 = vmatpush.msra.mxu0 %v2316
    %2418 = vmatpush.msra.mxu0 %v2314
    %2419 = vmatpush.msra.mxu0 %v2312
    %2420 = vmatpush.msra.mxu0 %v2310
    %2421 = vmatpush.msra.mxu0 %v2308
    %2422 = vmatpush.msra.mxu0 %v2306
    %2423 = vmatpush.msra.mxu0 %v2304
    %2424 = vmatmul.f32.gmra.mxu0 %v2302
    %v2425 = vpop.f32.mrf.mxu0
    %v2426 = vadd.f32 %v2386, %v2425
    %2427 = vdwg.mxu0
    %2428 = vmatpush.msra.mxu0 %v2335
    %2429 = vmatpush.msra.mxu0 %v2333
    %2430 = vmatpush.msra.mxu0 %v2331
    %2431 = vmatpush.msra.mxu0 %v2329
    %2432 = vmatpush.msra.mxu0 %v2327
    %2433 = vmatpush.msra.mxu0 %v2325
    %2434 = vmatpush.msra.mxu0 %v2323
    %2435 = vmatpush.msra.mxu0 %v2321
    %2436 = vmatpush.msra.mxu0 %v2319
    %2437 = vmatpush.msra.mxu0 %v2317
    %2438 = vmatpush.msra.mxu0 %v2315
    %2439 = vmatpush.msra.mxu0 %v2313
    %2440 = vmatpush.msra.mxu0 %v2311
    %2441 = vmatpush.msra.mxu0 %v2309
    %2442 = vmatpush.msra.mxu0 %v2307
    %2443 = vmatpush.msra.mxu0 %v2305
    %2444 = vmatmul.f32.gmra.mxu0 %v2302
    %v2445 = vpop.f32.mrf.mxu0
    %v2446 = vadd.f32 %v2406, %v2445
    %2447 = vdwg.mxu0
    %v2448 = vld [vmem:[%s9] sm:$0x3]
    %v2450 = vperm.slane %v2448, 0
    %v2451 = vperm.slane %v2448, 1
    %v2454 = vadd.f32 %v2426, %v2450
    %v2455 = vadd.f32 %v2446, %v2451
    %v2456 = vmax.f32 %v2454, 0.0
    %v2457 = vmax.f32 %v2455, 0.0
    %v2458 = vld [vmem:[%s10] sm:$0xff]
    %v2459 = vld [vmem:[%s10 + $0x8] sm:$0xff]
    %v2460 = vld [vmem:[%s10 + $0x10] sm:$0xff]
    %v2461 = vld [vmem:[%s10 + $0x18] sm:$0xff]
    %v2462 = vld [vmem:[%s10 + $0x20] sm:$0xff]
    %v2463 = vld [vmem:[%s10 + $0x28] sm:$0xff]
    %v2464 = vld [vmem:[%s10 + $0x30] sm:$0xff]
    %v2465 = vld [vmem:[%s10 + $0x38] sm:$0xff]
    %v2466 = vld [vmem:[%s10 + $0x40] sm:$0xff]
    %v2467 = vld [vmem:[%s10 + $0x48] sm:$0xff]
    %v2468 = vld [vmem:[%s10 + $0x50] sm:$0xff]
    %v2469 = vld [vmem:[%s10 + $0x58] sm:$0xff]
    %v2470 = vld [vmem:[%s10 + $0x60] sm:$0xff]
    %v2471 = vld [vmem:[%s10 + $0x68] sm:$0xff]
    %v2472 = vld [vmem:[%s10 + $0x70] sm:$0xff]
    %v2473 = vld [vmem:[%s10 + $0x78] sm:$0xff]
    %v2474 = vld [vmem:[%s10 + $0x80] sm:$0xff]
    %v2475 = vld [vmem:[%s10 + $0x88] sm:$0xff]
    %v2476 = vld [vmem:[%s10 + $0x90] sm:$0xff]
    %v2477 = vld [vmem:[%s10 + $0x98] sm:$0xff]
    %v2478 = vld [vmem:[%s10 + $0xa0] sm:$0xff]
    %v2479 = vld [vmem:[%s10 + $0xa8] sm:$0xff]
    %v2480 = vld [vmem:[%s10 + $0xb0] sm:$0xff]
    %v2481 = vld [vmem:[%s10 + $0xb8] sm:$0xff]
    %v2482 = vld [vmem:[%s11] sm:$0x1]
    %v2484 = vperm.slane %v2482, 0
    %vm2486 = vcmask 523264
    %v2488 = vsel %vm2486, %v2457, 0
    %2490 = vmatpush.msra.mxu0 %v2473
    %2491 = vmatpush.msra.mxu0 %v2472
    %2492 = vmatpush.msra.mxu0 %v2471
    %2493 = vmatpush.msra.mxu0 %v2470
    %2494 = vmatpush.msra.mxu0 %v2469
    %2495 = vmatpush.msra.mxu0 %v2468
    %2496 = vmatpush.msra.mxu0 %v2467
    %2497 = vmatpush.msra.mxu0 %v2466
    %2498 = vmatpush.msra.mxu0 %v2465
    %2499 = vmatpush.msra.mxu0 %v2464
    %2500 = vmatpush.msra.mxu0 %v2463
    %2501 = vmatpush.msra.mxu0 %v2462
    %2502 = vmatpush.msra.mxu0 %v2461
    %2503 = vmatpush.msra.mxu0 %v2460
    %2504 = vmatpush.msra.mxu0 %v2459
    %2505 = vmatpush.msra.mxu0 %v2458
    %2506 = vmatmul.f32.gmra.mxu0 %v2456
    %v2507 = vpop.f32.mrf.mxu0
    %v2508 = vadd.f32 %v2484, %v2507
    %2509 = vdwg.mxu0
    %2510 = vmatpush.msra.mxu0 0.0
    %2511 = vmatpush.msra.mxu0 0.0
    %2512 = vmatpush.msra.mxu0 0.0
    %2513 = vmatpush.msra.mxu0 0.0
    %2514 = vmatpush.msra.mxu0 0.0
    %2515 = vmatpush.msra.mxu0 0.0
    %2516 = vmatpush.msra.mxu0 0.0
    %2517 = vmatpush.msra.mxu0 0.0
    %2518 = vmatpush.msra.mxu0 %v2481
    %2519 = vmatpush.msra.mxu0 %v2480
    %2520 = vmatpush.msra.mxu0 %v2479
    %2521 = vmatpush.msra.mxu0 %v2478
    %2522 = vmatpush.msra.mxu0 %v2477
    %2523 = vmatpush.msra.mxu0 %v2476
    %2524 = vmatpush.msra.mxu0 %v2475
    %2525 = vmatpush.msra.mxu0 %v2474
    %2526 = vmatmul.f32.gmra.mxu0 %v2488
    %v2527 = vpop.f32.mrf.mxu0
    %v2528 = vadd.f32 %v2508, %v2527
    %2529 = vdwg.mxu0
    %v2530 = vmax.f32 %v2528, 0.0
    %v2531 = vld [vmem:[%s12] sm:$0xff]
    %v2532 = vld [vmem:[%s12 + $0x8] sm:$0xff]
    %v2533 = vld [vmem:[%s12 + $0x10] sm:$0xff]
    %v2534 = vld [vmem:[%s12 + $0x18] sm:$0xff]
    %v2535 = vld [vmem:[%s12 + $0x20] sm:$0xff]
    %v2536 = vld [vmem:[%s12 + $0x28] sm:$0xff]
    %v2537 = vld [vmem:[%s12 + $0x30] sm:$0xff]
    %v2538 = vld [vmem:[%s12 + $0x38] sm:$0xff]
    %v2539 = vld [vmem:[%s12 + $0x40] sm:$0xff]
    %v2540 = vld [vmem:[%s12 + $0x48] sm:$0xff]
    %v2541 = vld [vmem:[%s12 + $0x50] sm:$0xff]
    %v2542 = vld [vmem:[%s12 + $0x58] sm:$0xff]
    %v2543 = vld [vmem:[%s12 + $0x60] sm:$0xff]
    %v2544 = vld [vmem:[%s12 + $0x68] sm:$0xff]
    %v2545 = vld [vmem:[%s12 + $0x70] sm:$0xff]
    %v2546 = vld [vmem:[%s12 + $0x78] sm:$0xff]
    %v2547 = vld [vmem:[%s13] sm:$0x1]
    %v2549 = vperm.slane %v2547, 0
    %2551 = vmatpush.msra.mxu0 %v2546
    %2552 = vmatpush.msra.mxu0 %v2545
    %2553 = vmatpush.msra.mxu0 %v2544
    %2554 = vmatpush.msra.mxu0 %v2543
    %2555 = vmatpush.msra.mxu0 %v2542
    %2556 = vmatpush.msra.mxu0 %v2541
    %2557 = vmatpush.msra.mxu0 %v2540
    %2558 = vmatpush.msra.mxu0 %v2539
    %2559 = vmatpush.msra.mxu0 %v2538
    %2560 = vmatpush.msra.mxu0 %v2537
    %2561 = vmatpush.msra.mxu0 %v2536
    %2562 = vmatpush.msra.mxu0 %v2535
    %2563 = vmatpush.msra.mxu0 %v2534
    %2564 = vmatpush.msra.mxu0 %v2533
    %2565 = vmatpush.msra.mxu0 %v2532
    %2566 = vmatpush.msra.mxu0 %v2531
    %2567 = vmatmul.f32.gmra.mxu0 %v2530
    %v2568 = vpop.f32.mrf.mxu0
    %v2569 = vadd.f32 %v2549, %v2568
    %2570 = vdwg.mxu0
    %2571 = vst [vmem:[%s14] sm:$0xff] %v2569
    // Predicated region
    $region66: #{bigru_forward.1} parent=1 // pred_check
      _
    $region67: #{bigru_forward.1} parent=1 // pred_check_branch
      %2573 = sbr.rel (0) target = $region69
    $region68: #{bigru_forward.1} parent=1 // pred_region
      _
    $region69: #{bigru_forward.1} parent=1 // pred_fallthru
      _
    // Predicated region
    $region70: #{bigru_forward.1} parent=1 // pred_check
      _
    $region71: #{bigru_forward.1} parent=1 // pred_check_branch
      %2575 = sbr.rel (0) target = $region73
    $region72: #{bigru_forward.1} parent=1 // pred_region
      _
    $region73: #{bigru_forward.1} parent=1 // pred_fallthru
      _
    %2576 = vsyncpa [#allocation4], 1
    %2577 = vsyncpa [#allocation6], 1

</llo_original>
